<compile_context>
chip_gen: v6e
topology: v6e:2x2x1
jax: 0.10.0
libtpu: 0.0.40
codegen_flags: <defaults>
</compile_context>

<pallas_src>
import math
from functools import partial

import numpy as np
import jax
import jax.numpy as jnp
from jax import lax
from jax.experimental import pallas as pl
from jax.experimental.pallas import tpu as pltpu


# ---------- Kernel 1: fused (both-direction) bidirectional GRU encoder -------

def _bigru_fused_kernel(x_ref, wih_t_ref, whh_f_t_ref, whh_b_t_ref,
                        bih_ref, bhh_f_ref, bhh_b_ref,
                        out_ref, xg_ref):
    """Both GRU directions in one program.

    x_ref:       [L, H]
    wih_t_ref:   [H, 6*Hh]   columns = [fwd (r,z,n) | bwd (r,z,n)] input gates
    whh_f_t_ref: [Hh, 3*Hh]  whh_b_t_ref: [Hh, 3*Hh]
    bih_ref:     [1, 6*Hh]   bhh_f_ref/bhh_b_ref: [1, 3*Hh]
    out_ref:     [L, 2*Hh]   row t = [h_fwd(t) | h_bwd(t)]  (torch bidir layout)
    xg_ref:      VMEM scratch [L, 6*Hh]
    PyTorch gate order (r, z, n).
    """
    L, H = x_ref.shape
    Hh = whh_f_t_ref.shape[0]
    G = 3 * Hh

    # Input-to-hidden gates for every timestep and BOTH directions in one
    # lane-dense MXU matmul (loop-invariant; hoisted off the recurrence).
    # TODO(synk): at document-scale L, chunk this precompute (and the xg
    # scratch) over time blocks to stay inside v7x's 64 MiB VMEM.
    xg_ref[...] = (jnp.dot(x_ref[...], wih_t_ref[...],
                           preferred_element_type=jnp.float32) + bih_ref[...])

    def cell(gi, gh, h):
        r = jax.nn.sigmoid(gi[:, 0:Hh] + gh[:, 0:Hh])
        z = jax.nn.sigmoid(gi[:, Hh:2 * Hh] + gh[:, Hh:2 * Hh])
        n = jnp.tanh(gi[:, 2 * Hh:3 * Hh] + r * gh[:, 2 * Hh:3 * Hh])
        return (1.0 - z) * n + z * h

    def step(t, carry):
        h_f, h_b = carry
        tb = L - 1 - t                          # backward direction walks in reverse
        gi_f = xg_ref[pl.ds(t, 1), 0:G]
        gi_b = xg_ref[pl.ds(tb, 1), G:2 * G]
        # Two independent [1,Hh] chains — the scheduler interleaves them.
        gh_f = (jnp.dot(h_f, whh_f_t_ref[...],
                        preferred_element_type=jnp.float32) + bhh_f_ref[...])
        gh_b = (jnp.dot(h_b, whh_b_t_ref[...],
                        preferred_element_type=jnp.float32) + bhh_b_ref[...])
        h_f = cell(gi_f, gh_f, h_f)
        h_b = cell(gi_b, gh_b, h_b)
        out_ref[pl.ds(t, 1), 0:Hh] = h_f
        out_ref[pl.ds(tb, 1), Hh:2 * Hh] = h_b
        return (h_f, h_b)

    h0 = jnp.zeros((1, Hh), jnp.float32)
    # Latency-bound recurrence: partial unroll for LLO visibility without
    # exploding vreg live ranges at real L.
    lax.fori_loop(0, L, step, (h0, h0), unroll=min(8, L))


def encode(dp, x):
    """Bidirectional GRU encoder. x: [L, H] -> outputs [L, H] ([fwd|bwd] rows)."""
    L, H = x.shape
    Hh = dp["enc_whh_f_t"].shape[0]
    G6 = 6 * Hh
    full = lambda i: (0, 0)
    return pl.pallas_call(
        _bigru_fused_kernel,
        out_shape=jax.ShapeDtypeStruct((L, 2 * Hh), jnp.float32),
        grid=(1,),
        in_specs=[pl.BlockSpec((L, H), full),
                  pl.BlockSpec((H, G6), full),
                  pl.BlockSpec((Hh, 3 * Hh), full),
                  pl.BlockSpec((Hh, 3 * Hh), full),
                  pl.BlockSpec((1, G6), full),
                  pl.BlockSpec((1, 3 * Hh), full),
                  pl.BlockSpec((1, 3 * Hh), full)],
        out_specs=pl.BlockSpec((L, 2 * Hh), full),
        scratch_shapes=[pltpu.VMEM((L, G6), jnp.float32)],
        compiler_params=pltpu.CompilerParams(
            dimension_semantics=("arbitrary",)),
    )(x, dp["enc_wih_t"], dp["enc_whh_f_t"], dp["enc_whh_b_t"],
      dp["enc_bih"], dp["enc_bhh_f"], dp["enc_bhh_b"])


# ------- Kernel 2: fused decoder loop + pointer attention + NLL loss ---------

def _segment_loss_kernel(starts_ref, targets_ref,          # SMEM (scalar prefetch)
                         enc_ref,
                         wih_t_ref, whh_t_ref, bih_ref, bhh_ref,
                         w1_ref, w2_ref,
                         loss_ref,
                         xs_scr, gi_scr,
                         *, atten_model, num_steps):
    """enc_ref: [L, H]   wih_t/whh_t: [H, 3H]   b*: [1, 3H]
       w1_ref: [H, H]    w2_ref: [1, H]         loss_ref: [1, 1]
       xs_scr: [num_steps, H]  gi_scr: [num_steps, 3H]"""
    L, H = enc_ref.shape
    col = lax.broadcasted_iota(jnp.int32, (1, L), 1)
    enc = enc_ref[...]                                     # loop-invariant [L, H]
    dn_t = (((1,), (1,)), ((), ()))                        # contract last dims (b^T)

    # --- Hoist everything that does not depend on the recurrent hidden state ---
    # 1) Gather EDU-start rows, then compute ALL decoder input gates with one
    #    [num_steps, H] x [H, 3H] matmul (gi is independent of h).
    def gather(s, carry):
        xs_scr[pl.ds(s, 1), :] = enc_ref[pl.ds(starts_ref[s], 1), :]
        return carry
    lax.fori_loop(0, num_steps, gather, 0, unroll=min(8, num_steps))
    gi_scr[...] = (jnp.dot(xs_scr[...], wih_t_ref[...],
                           preferred_element_type=jnp.float32) + bih_ref[...])

    if atten_model == "Biaffine":
        # W1 @ enc^T and w2 @ enc^T are loop-invariant; transposed contraction
        # means no (H, L) copy of enc is ever materialized on the host.
        w1e = lax.dot_general(w1_ref[...], enc, dn_t,
                              preferred_element_type=jnp.float32)   # [H, L]
        ew2 = lax.dot_general(w2_ref[...], enc, dn_t,
                              preferred_element_type=jnp.float32)   # [1, L]

    h0 = enc_ref[pl.ds(L - 1, 1), :]                       # decoder init hidden [1,H]

    def step(s, carry):
        h, loss = carry
        start = starts_ref[s]                              # EDU start index
        target = targets_ref[s]                            # absolute break index

        # --- decoder GRU, single timestep (gi pre-computed, only gh on chain) ---
        gi = gi_scr[pl.ds(s, 1), :]                                      # [1, 3H]
        gh = (jnp.dot(h, whh_t_ref[...],
                      preferred_element_type=jnp.float32) + bhh_ref[...])
        r = jax.nn.sigmoid(gi[:, 0:H] + gh[:, 0:H])
        z = jax.nn.sigmoid(gi[:, H:2 * H] + gh[:, H:2 * H])
        n = jnp.tanh(gi[:, 2 * H:3 * H] + r * gh[:, 2 * H:3 * H])
        h_new = (1.0 - z) * n + z * h                      # [1,H] == decoder output

        # --- pointer attention, lane-dense [1, L] scores ---
        if atten_model == "Biaffine":
            scores = (jnp.dot(h_new, w1e,
                              preferred_element_type=jnp.float32) + ew2)  # [1, L]
            # torch permutes to [1, len] and log_softmaxes over dim 0 (size 1),
            # so log_atten_weights == 0 everywhere — faithful reproduction of
            # the reference quirk.  (The torch `+1e-6` is shift-invariant; the
            # missing `>= start` mask is irrelevant because law is identically 0.)
            m = jnp.max(scores, axis=0, keepdims=True)
            law = (scores - m) - jnp.log(jnp.sum(jnp.exp(scores - m),
                                                 axis=0, keepdims=True))
        else:  # 'Dotproduct'
            scores = lax.dot_general(h_new, enc, dn_t,
                                     preferred_element_type=jnp.float32)  # [1, L]
            # log_softmax restricted to positions >= start (== outputs[start:]).
            valid = col >= start
            s_m = jnp.where(valid, scores, jnp.float32(-1e30))
            m = jnp.max(s_m, axis=1, keepdims=True)
            law = (s_m - m) - jnp.log(jnp.sum(jnp.exp(s_m - m),
                                              axis=1, keepdims=True))

        # NLLLoss (batch of 1): gather -law at the absolute target column.
        contrib = -jnp.sum(jnp.where(col == target, law, 0.0), keepdims=True)  # [1,1]
        return h_new, loss + contrib

    _, loss = lax.fori_loop(0, num_steps, step,
                            (h0, jnp.zeros((1, 1), jnp.float32)),
                            unroll=min(8, num_steps))
    loss_ref[...] = loss


@partial(jax.jit, static_argnames=("edu_breaks", "atten_model"))
def train_segment_loss(dp, word_embeddings, edu_breaks, atten_model):
    outputs = encode(dp, word_embeddings)                  # [L, H], [fwd|bwd] rows
    L, H = outputs.shape
    breaks = (0,) + tuple(edu_breaks)
    starts = jnp.asarray(breaks[:-1], jnp.int32)
    targets = jnp.asarray(breaks[1:], jnp.int32)
    num_steps = len(breaks) - 1
    full2d = lambda i, *_: (0, 0)                          # prefetch refs -> *_

    # Advisory scheduler hint: long-running kernel with a [1,1] output.
    flops = (2 * num_steps * H * 3 * H                     # hoisted gi matmul
             + 2 * H * H * L + 2 * H * L                   # Biaffine hoists (upper bound)
             + num_steps * (2 * H * 3 * H + 2 * H * L))    # per-step gh + scores
    transcendentals = num_steps * (3 * H + L)
    bytes_accessed = 4 * (L * H + 2 * H * 3 * H + 2 * 3 * H + H * H + H + 1)

    # TODO(synk): at real sizes set vmem_limit_bytes and single-buffer the
    # loop-invariant inputs (grid=(1,) gains nothing from double-buffering).
    loss = pl.pallas_call(
        partial(_segment_loss_kernel, atten_model=atten_model,
                num_steps=num_steps),
        out_shape=jax.ShapeDtypeStruct((1, 1), jnp.float32),
        grid_spec=pltpu.PrefetchScalarGridSpec(
            num_scalar_prefetch=2,
            grid=(1,),
            in_specs=[pl.BlockSpec((L, H), full2d),        # encoder outputs
                      pl.BlockSpec((H, 3 * H), full2d),    # dec W_ih^T
                      pl.BlockSpec((H, 3 * H), full2d),    # dec W_hh^T
                      pl.BlockSpec((1, 3 * H), full2d),    # dec b_ih
                      pl.BlockSpec((1, 3 * H), full2d),    # dec b_hh
                      pl.BlockSpec((H, H), full2d),        # pointer W1
                      pl.BlockSpec((1, H), full2d)],       # pointer W2
            out_specs=pl.BlockSpec((1, 1), full2d),
            scratch_shapes=[pltpu.VMEM((num_steps, H), jnp.float32),
                            pltpu.VMEM((num_steps, 3 * H), jnp.float32)]),
        compiler_params=pltpu.CompilerParams(
            dimension_semantics=("arbitrary",)),
        cost_estimate=pl.CostEstimate(flops=flops,
                                      transcendentals=transcendentals,
                                      bytes_accessed=bytes_accessed),
    )(starts, targets, outputs,
      dp["dec_wih_t"], dp["dec_whh_t"], dp["dec_bih"], dp["dec_bhh"],
      dp["w1"], dp["w2"])
    return loss.reshape(1)

# TODO(synk): test_segment_loss()'s data-dependent while-loop greedy decode
# stays host-side Python (the same fused step kernel would be reused per step).


# ----------------------------- Pure-JAX reference ----------------------------

def _gru_seq_ref(x, wih, whh, bih, bhh, h0):
    Hh = h0.shape[0]
    h = h0
    outs = []
    for t in range(x.shape[0]):
        gi = wih @ x[t] + bih
        gh = whh @ h + bhh
        r = jax.nn.sigmoid(gi[0:Hh] + gh[0:Hh])
        z = jax.nn.sigmoid(gi[Hh:2 * Hh] + gh[Hh:2 * Hh])
        n = jnp.tanh(gi[2 * Hh:] + r * gh[2 * Hh:])
        h = (1.0 - z) * n + z * h
        outs.append(h)
    return jnp.stack(outs), h


def _pointer_ref(enc, w1, w2, dec, atten_model):
    if atten_model == "Biaffine":
        ew1 = (enc @ w1.T) @ dec
        ew2 = enc @ w2.T
        scores = (ew1[:, None] + ew2).T                # [1, len]
        law = jax.nn.log_softmax(scores + 1e-6, axis=0)
    else:
        scores = (enc @ dec)[None, :]                  # [1, len]
        law = jax.nn.log_softmax(scores + 1e-6, axis=1)
    return law


def train_segment_loss_ref(params, word_embeddings, edu_breaks, atten_model):
    L, H = word_embeddings.shape
    Hh = H // 2
    h0 = jnp.zeros((Hh,), jnp.float32)
    out_f, _ = _gru_seq_ref(word_embeddings, params["enc_f_wih"],
                            params["enc_f_whh"], params["enc_f_bih"],
                            params["enc_f_bhh"], h0)
    out_b, _ = _gru_seq_ref(word_embeddings[::-1], params["enc_b_wih"],
                            params["enc_b_whh"], params["enc_b_bih"],
                            params["enc_b_bhh"], h0)
    outputs = jnp.concatenate([out_f, out_b[::-1]], axis=1)
    cur_hidden = outputs[-1]
    breaks = [0] + list(edu_breaks)
    total = jnp.zeros((1,), jnp.float32)
    for step, start in enumerate(breaks[:-1]):
        dec_seq, cur_hidden = _gru_seq_ref(outputs[start:start + 1],
                                           params["dec_wih"], params["dec_whh"],
                                           params["dec_bih"], params["dec_bhh"],
                                           cur_hidden)
        law = _pointer_ref(outputs[start:], params["w1"], params["w2"],
                           dec_seq[0], atten_model)
        target = breaks[step + 1] - start
        total = total + (-law[0, target])
    return total


# --------------------------------- Params ------------------------------------

def init_params(key, H):
    Hh = H // 2
    k_enc = 1.0 / math.sqrt(Hh)
    k_dec = 1.0 / math.sqrt(H)
    ks = jax.random.split(key, 14)
    u = lambda k, shape, s: jax.random.uniform(k, shape, jnp.float32, -s, s)
    return dict(
        enc_f_wih=u(ks[0], (3 * Hh, H), k_enc),
        enc_f_whh=u(ks[1], (3 * Hh, Hh), k_enc),
        enc_f_bih=u(ks[2], (3 * Hh,), k_enc),
        enc_f_bhh=u(ks[3], (3 * Hh,), k_enc),
        enc_b_wih=u(ks[4], (3 * Hh, H), k_enc),
        enc_b_whh=u(ks[5], (3 * Hh, Hh), k_enc),
        enc_b_bih=u(ks[6], (3 * Hh,), k_enc),
        enc_b_bhh=u(ks[7], (3 * Hh,), k_enc),
        dec_wih=u(ks[8], (3 * H, H), k_dec),
        dec_whh=u(ks[9], (3 * H, H), k_dec),
        dec_bih=u(ks[10], (3 * H,), k_dec),
        dec_bhh=u(ks[11], (3 * H,), k_dec),
        w1=u(ks[12], (H, H), k_dec),     # PointerAtten.weight1 (no bias)
        w2=u(ks[13], (1, H), k_dec),     # PointerAtten.weight2 (no bias)
    )


def prepare_params(p):
    """One-time packing into the device layout: pre-transposed GRU weights,
    direction-concatenated encoder input-gate weights (no per-call .T)."""
    return dict(
        # [H, 6Hh]: columns [fwd (r,z,n) | bwd (r,z,n)]
        enc_wih_t=jnp.concatenate([p["enc_f_wih"].T, p["enc_b_wih"].T], axis=1),
        enc_whh_f_t=p["enc_f_whh"].T,                                 # [Hh, 3Hh]
        enc_whh_b_t=p["enc_b_whh"].T,                                 # [Hh, 3Hh]
        enc_bih=jnp.concatenate([p["enc_f_bih"], p["enc_b_bih"]])[None, :],
        enc_bhh_f=p["enc_f_bhh"][None, :],
        enc_bhh_b=p["enc_b_bhh"][None, :],
        dec_wih_t=p["dec_wih"].T,        # [H, 3H]
        dec_whh_t=p["dec_whh"].T,        # [H, 3H]
        dec_bih=p["dec_bih"][None, :],   # [1, 3H]
        dec_bhh=p["dec_bhh"][None, :],   # [1, 3H]
        w1=p["w1"],                      # [H, H]
        w2=p["w2"],                      # [1, H]
    )


# ----------------------------------- Main -------------------------------------

if __name__ == "__main__":
    H = 32              # hidden_size (== decoder_input_size), rnn_layers = 1
    L = 8               # sequence length (number of word embeddings)
    edu_breaks = (2, 5, 7)

    key = jax.random.PRNGKey(0)
    kp, kx = jax.random.split(key)
    params = init_params(kp, H)
    dp = prepare_params(params)
    word_embeddings = jax.random.normal(kx, (L, H), jnp.float32)

    for atten_model in ("Dotproduct", "Biaffine"):
        loss = train_segment_loss(dp, word_embeddings, edu_breaks, atten_model)
        jax.block_until_ready(loss)
        loss_ref = train_segment_loss_ref(params, word_embeddings,
                                          list(edu_breaks), atten_model)
        assert np.allclose(np.asarray(loss), np.asarray(loss_ref),
                           rtol=1e-3, atol=1e-4), (loss, loss_ref, atten_model)

    print("KERNEL_OK")
</pallas_src>

<mosaic_0001>
module attributes {stable_mosaic.version = 11 : i64} {
  func.func @_segment_loss_kernel(%arg0: i32, %arg1: memref<3xi32, #tpu.memory_space<smem>>, %arg2: memref<3xi32, #tpu.memory_space<smem>>, %arg3: memref<8x32xf32, #tpu.memory_space<vmem>>, %arg4: memref<32x96xf32, #tpu.memory_space<vmem>>, %arg5: memref<32x96xf32, #tpu.memory_space<vmem>>, %arg6: memref<1x96xf32, #tpu.memory_space<vmem>>, %arg7: memref<1x96xf32, #tpu.memory_space<vmem>>, %arg8: memref<32x32xf32, #tpu.memory_space<vmem>>, %arg9: memref<1x32xf32, #tpu.memory_space<vmem>>, %arg10: memref<1x1xf32, #tpu.memory_space<vmem>>, %arg11: memref<3x32xf32, #tpu.memory_space<vmem>>, %arg12: memref<3x96xf32, #tpu.memory_space<vmem>>) attributes {dimension_semantics = [#tpu.dimension_semantics<arbitrary>], iteration_bounds = array<i64: 1>, scalar_prefetch = 2 : i64, scratch_operands = 2 : i64, tpu.core_type = #tpu.core_type<tc>, window_params = [{pipeline_mode = #tpu.pipeline_mode<synchronous>, transform_indices = @transform_0, window_bounds = array<i64: 8, 32>}, {pipeline_mode = #tpu.pipeline_mode<synchronous>, transform_indices = @transform_1, window_bounds = array<i64: 32, 96>}, {pipeline_mode = #tpu.pipeline_mode<synchronous>, transform_indices = @transform_2, window_bounds = array<i64: 32, 96>}, {pipeline_mode = #tpu.pipeline_mode<synchronous>, transform_indices = @transform_3, window_bounds = array<i64: 1, 96>}, {pipeline_mode = #tpu.pipeline_mode<synchronous>, transform_indices = @transform_4, window_bounds = array<i64: 1, 96>}, {pipeline_mode = #tpu.pipeline_mode<synchronous>, transform_indices = @transform_5, window_bounds = array<i64: 32, 32>}, {pipeline_mode = #tpu.pipeline_mode<synchronous>, transform_indices = @transform_6, window_bounds = array<i64: 1, 32>}, {pipeline_mode = #tpu.pipeline_mode<synchronous>, transform_indices = @transform_7, window_bounds = array<i64: 1, 1>}]} {
    %0 = tpu.iota {dimensions = array<i32: 1>} : vector<1x8xi32>
    %c0 = arith.constant 0 : index
    %c0_0 = arith.constant 0 : index
    %1 = vector.load %arg3[%c0, %c0_0] : memref<8x32xf32, #tpu.memory_space<vmem>>, vector<8x32xf32>
    %c0_i32 = arith.constant 0 : i32
    %2 = arith.index_cast %c0_i32 : i32 to index
    %3 = memref.load %arg1[%2] : memref<3xi32, #tpu.memory_space<smem>>
    %4 = arith.index_cast %3 : i32 to index
    %c0_1 = arith.constant 0 : index
    %5 = vector.load %arg3[%4, %c0_1] : memref<8x32xf32, #tpu.memory_space<vmem>>, vector<1x32xf32>
    %6 = arith.index_cast %c0_i32 : i32 to index
    %c0_2 = arith.constant 0 : index
    %7 = vector.load %arg11[%6, %c0_2] : memref<3x32xf32, #tpu.memory_space<vmem>>, vector<1x32xf32>
    tpu.vector_store %arg11[%6, %c0_2], %5 {strides = array<i32>} : memref<3x32xf32, #tpu.memory_space<vmem>>, vector<1x32xf32>,
    %c1_i32 = arith.constant 1 : i32
    %8 = arith.index_cast %c1_i32 : i32 to index
    %9 = memref.load %arg1[%8] : memref<3xi32, #tpu.memory_space<smem>>
    %10 = arith.index_cast %9 : i32 to index
    %c0_3 = arith.constant 0 : index
    %11 = vector.load %arg3[%10, %c0_3] : memref<8x32xf32, #tpu.memory_space<vmem>>, vector<1x32xf32>
    %12 = arith.index_cast %c1_i32 : i32 to index
    %c0_4 = arith.constant 0 : index
    %13 = vector.load %arg11[%12, %c0_4] : memref<3x32xf32, #tpu.memory_space<vmem>>, vector<1x32xf32>
    tpu.vector_store %arg11[%12, %c0_4], %11 {strides = array<i32>} : memref<3x32xf32, #tpu.memory_space<vmem>>, vector<1x32xf32>,
    %c2_i32 = arith.constant 2 : i32
    %14 = arith.index_cast %c2_i32 : i32 to index
    %15 = memref.load %arg1[%14] : memref<3xi32, #tpu.memory_space<smem>>
    %16 = arith.index_cast %15 : i32 to index
    %c0_5 = arith.constant 0 : index
    %17 = vector.load %arg3[%16, %c0_5] : memref<8x32xf32, #tpu.memory_space<vmem>>, vector<1x32xf32>
    %18 = arith.index_cast %c2_i32 : i32 to index
    %c0_6 = arith.constant 0 : index
    %19 = vector.load %arg11[%18, %c0_6] : memref<3x32xf32, #tpu.memory_space<vmem>>, vector<1x32xf32>
    tpu.vector_store %arg11[%18, %c0_6], %17 {strides = array<i32>} : memref<3x32xf32, #tpu.memory_space<vmem>>, vector<1x32xf32>,
    %c3_i32 = arith.constant 3 : i32
    %c0_7 = arith.constant 0 : index
    %c0_8 = arith.constant 0 : index
    %20 = vector.load %arg11[%c0_7, %c0_8] : memref<3x32xf32, #tpu.memory_space<vmem>>, vector<3x32xf32>
    %c0_9 = arith.constant 0 : index
    %c0_10 = arith.constant 0 : index
    %21 = vector.load %arg4[%c0_9, %c0_10] : memref<32x96xf32, #tpu.memory_space<vmem>>, vector<32x96xf32>
    %cst = arith.constant dense<0.000000e+00> : vector<3x96xf32>
    %22 = tpu.matmul %20, %21, %cst {dimension_numbers = #tpu.dot_dimension_numbers<[1], [0], [0], [1], [0, 0, 1, 1], [], []>} : vector<3x32xf32>, vector<32x96xf32>, vector<3x96xf32> -> vector<3x96xf32>
    %c0_11 = arith.constant 0 : index
    %c0_12 = arith.constant 0 : index
    %23 = vector.load %arg6[%c0_11, %c0_12] : memref<1x96xf32, #tpu.memory_space<vmem>>, vector<1x96xf32>
    %24 = vector.broadcast %23 : vector<1x96xf32> to vector<3x96xf32>
    %25 = arith.addf %22, %24 : vector<3x96xf32>
    %c0_13 = arith.constant 0 : index
    %c0_14 = arith.constant 0 : index
    %26 = vector.load %arg12[%c0_13, %c0_14] : memref<3x96xf32, #tpu.memory_space<vmem>>, vector<3x96xf32>
    tpu.vector_store %arg12[%c0_13, %c0_14], %25 {strides = array<i32>} : memref<3x96xf32, #tpu.memory_space<vmem>>, vector<3x96xf32>,
    %c7 = arith.constant 7 : index
    %c0_15 = arith.constant 0 : index
    %27 = vector.load %arg3[%c7, %c0_15] : memref<8x32xf32, #tpu.memory_space<vmem>>, vector<1x32xf32>
    %cst_16 = arith.constant 0.000000e+00 : f32
    %28 = vector.broadcast %cst_16 : f32 to vector<1x1xf32>
    %c0_i32_17 = arith.constant 0 : i32
    %29 = arith.index_cast %c0_i32_17 : i32 to index
    %30 = memref.load %arg1[%29] : memref<3xi32, #tpu.memory_space<smem>>
    %31 = arith.index_cast %c0_i32_17 : i32 to index
    %32 = memref.load %arg2[%31] : memref<3xi32, #tpu.memory_space<smem>>
    %33 = arith.index_cast %c0_i32_17 : i32 to index
    %c0_18 = arith.constant 0 : index
    %34 = vector.load %arg12[%33, %c0_18] : memref<3x96xf32, #tpu.memory_space<vmem>>, vector<1x96xf32>
    %c0_19 = arith.constant 0 : index
    %c0_20 = arith.constant 0 : index
    %35 = vector.load %arg5[%c0_19, %c0_20] : memref<32x96xf32, #tpu.memory_space<vmem>>, vector<32x96xf32>
    %cst_21 = arith.constant dense<0.000000e+00> : vector<1x96xf32>
    %36 = tpu.matmul %27, %35, %cst_21 {dimension_numbers = #tpu.dot_dimension_numbers<[1], [0], [0], [1], [0, 0, 1, 1], [], []>} : vector<1x32xf32>, vector<32x96xf32>, vector<1x96xf32> -> vector<1x96xf32>
    %c0_22 = arith.constant 0 : index
    %c0_23 = arith.constant 0 : index
    %37 = vector.load %arg7[%c0_22, %c0_23] : memref<1x96xf32, #tpu.memory_space<vmem>>, vector<1x96xf32>
    %38 = arith.addf %36, %37 : vector<1x96xf32>
    %39 = vector.extract_strided_slice %34 {offsets = [0, 0], sizes = [1, 32], strides = [1, 1]} : vector<1x96xf32> to vector<1x32xf32>
    %40 = vector.extract_strided_slice %38 {offsets = [0, 0], sizes = [1, 32], strides = [1, 1]} : vector<1x96xf32> to vector<1x32xf32>
    %41 = arith.addf %39, %40 : vector<1x32xf32>
    %42 = arith.negf %41 : vector<1x32xf32>
    %43 = math.exp %42 : vector<1x32xf32>
    %cst_24 = arith.constant 1.000000e+00 : f32
    %44 = vector.broadcast %cst_24 : f32 to vector<1x32xf32>
    %45 = arith.addf %44, %43 : vector<1x32xf32>
    %46 = arith.divf %44, %45 : vector<1x32xf32>
    %47 = vector.extract_strided_slice %34 {offsets = [0, 32], sizes = [1, 32], strides = [1, 1]} : vector<1x96xf32> to vector<1x32xf32>
    %48 = vector.extract_strided_slice %38 {offsets = [0, 32], sizes = [1, 32], strides = [1, 1]} : vector<1x96xf32> to vector<1x32xf32>
    %49 = arith.addf %47, %48 : vector<1x32xf32>
    %50 = arith.negf %49 : vector<1x32xf32>
    %51 = math.exp %50 : vector<1x32xf32>
    %cst_25 = arith.constant 1.000000e+00 : f32
    %52 = vector.broadcast %cst_25 : f32 to vector<1x32xf32>
    %53 = arith.addf %52, %51 : vector<1x32xf32>
    %54 = arith.divf %52, %53 : vector<1x32xf32>
    %55 = vector.extract_strided_slice %34 {offsets = [0, 64], sizes = [1, 32], strides = [1, 1]} : vector<1x96xf32> to vector<1x32xf32>
    %56 = vector.extract_strided_slice %38 {offsets = [0, 64], sizes = [1, 32], strides = [1, 1]} : vector<1x96xf32> to vector<1x32xf32>
    %57 = arith.mulf %46, %56 : vector<1x32xf32>
    %58 = arith.addf %55, %57 : vector<1x32xf32>
    %59 = math.tanh %58 : vector<1x32xf32>
    %cst_26 = arith.constant 1.000000e+00 : f32
    %60 = vector.broadcast %cst_26 : f32 to vector<1x32xf32>
    %61 = arith.subf %60, %54 : vector<1x32xf32>
    %62 = arith.mulf %61, %59 : vector<1x32xf32>
    %63 = arith.mulf %54, %27 : vector<1x32xf32>
    %64 = arith.addf %62, %63 : vector<1x32xf32>
    %cst_27 = arith.constant dense<0.000000e+00> : vector<1x8xf32>
    %65 = tpu.matmul %64, %1, %cst_27 {dimension_numbers = #tpu.dot_dimension_numbers<[1], [1], [0], [0], [0, 0, 1, 0], [], []>} : vector<1x32xf32>, vector<8x32xf32>, vector<1x8xf32> -> vector<1x8xf32>
    %66 = vector.broadcast %30 : i32 to vector<1x8xi32>
    %67 = arith.cmpi sge, %0, %66 : vector<1x8xi32>
    %cst_28 = arith.constant -1.000000e+30 : f32
    %68 = vector.broadcast %cst_28 : f32 to vector<1x8xf32>
    %69 = arith.select %67, %65, %68 : vector<1x8xi1>, vector<1x8xf32>
    %cst_29 = arith.constant dense<0xFF800000> : vector<1xf32>
    %70 = vector.multi_reduction <maximumf>, %69, %cst_29 [1] : vector<1x8xf32> to vector<1xf32>
    %71 = vector.shape_cast %70 : vector<1xf32> to vector<1x1xf32>
    %72 = vector.broadcast %71 : vector<1x1xf32> to vector<1x8xf32>
    %73 = arith.subf %69, %72 : vector<1x8xf32>
    %74 = vector.broadcast %71 : vector<1x1xf32> to vector<1x8xf32>
    %75 = arith.subf %69, %74 : vector<1x8xf32>
    %76 = math.exp %75 : vector<1x8xf32>
    %cst_30 = arith.constant dense<0.000000e+00> : vector<1xf32>
    %77 = vector.multi_reduction <add>, %76, %cst_30 [1] : vector<1x8xf32> to vector<1xf32>
    %78 = vector.shape_cast %77 : vector<1xf32> to vector<1x1xf32>
    %79 = math.log %78 : vector<1x1xf32>
    %80 = vector.broadcast %79 : vector<1x1xf32> to vector<1x8xf32>
    %81 = arith.subf %73, %80 : vector<1x8xf32>
    %82 = vector.broadcast %32 : i32 to vector<1x8xi32>
    %83 = arith.cmpi eq, %0, %82 : vector<1x8xi32>
    %cst_31 = arith.constant 0.000000e+00 : f32
    %84 = vector.broadcast %cst_31 : f32 to vector<1x8xf32>
    %85 = arith.select %83, %81, %84 : vector<1x8xi1>, vector<1x8xf32>
    %86 = vector.shape_cast %85 : vector<1x8xf32> to vector<1x1x8xf32>
    %cst_32 = arith.constant dense<0.000000e+00> : vector<1xf32>
    %87 = vector.multi_reduction <add>, %86, %cst_32 [1, 2] : vector<1x1x8xf32> to vector<1xf32>
    %88 = vector.shape_cast %87 : vector<1xf32> to vector<1x1x1xf32>
    %89 = vector.extract %88[0, 0, 0] : f32 from vector<1x1x1xf32>
    %90 = vector.broadcast %89 : f32 to vector<1x1xf32>
    %cst_33 = arith.constant 0.000000e+00 : f32
    %91 = vector.broadcast %cst_33 : f32 to vector<1x1xf32>
    %92 = arith.subf %91, %90 : vector<1x1xf32>
    %93 = arith.addf %28, %92 : vector<1x1xf32>
    %c1_i32_34 = arith.constant 1 : i32
    %94 = arith.index_cast %c1_i32_34 : i32 to index
    %95 = memref.load %arg1[%94] : memref<3xi32, #tpu.memory_space<smem>>
    %96 = arith.index_cast %c1_i32_34 : i32 to index
    %97 = memref.load %arg2[%96] : memref<3xi32, #tpu.memory_space<smem>>
    %98 = arith.index_cast %c1_i32_34 : i32 to index
    %c0_35 = arith.constant 0 : index
    %99 = vector.load %arg12[%98, %c0_35] : memref<3x96xf32, #tpu.memory_space<vmem>>, vector<1x96xf32>
    %c0_36 = arith.constant 0 : index
    %c0_37 = arith.constant 0 : index
    %100 = vector.load %arg5[%c0_36, %c0_37] : memref<32x96xf32, #tpu.memory_space<vmem>>, vector<32x96xf32>
    %cst_38 = arith.constant dense<0.000000e+00> : vector<1x96xf32>
    %101 = tpu.matmul %64, %100, %cst_38 {dimension_numbers = #tpu.dot_dimension_numbers<[1], [0], [0], [1], [0, 0, 1, 1], [], []>} : vector<1x32xf32>, vector<32x96xf32>, vector<1x96xf32> -> vector<1x96xf32>
    %c0_39 = arith.constant 0 : index
    %c0_40 = arith.constant 0 : index
    %102 = vector.load %arg7[%c0_39, %c0_40] : memref<1x96xf32, #tpu.memory_space<vmem>>, vector<1x96xf32>
    %103 = arith.addf %101, %102 : vector<1x96xf32>
    %104 = vector.extract_strided_slice %99 {offsets = [0, 0], sizes = [1, 32], strides = [1, 1]} : vector<1x96xf32> to vector<1x32xf32>
    %105 = vector.extract_strided_slice %103 {offsets = [0, 0], sizes = [1, 32], strides = [1, 1]} : vector<1x96xf32> to vector<1x32xf32>
    %106 = arith.addf %104, %105 : vector<1x32xf32>
    %107 = arith.negf %106 : vector<1x32xf32>
    %108 = math.exp %107 : vector<1x32xf32>
    %cst_41 = arith.constant 1.000000e+00 : f32
    %109 = vector.broadcast %cst_41 : f32 to vector<1x32xf32>
    %110 = arith.addf %109, %108 : vector<1x32xf32>
    %111 = arith.divf %109, %110 : vector<1x32xf32>
    %112 = vector.extract_strided_slice %99 {offsets = [0, 32], sizes = [1, 32], strides = [1, 1]} : vector<1x96xf32> to vector<1x32xf32>
    %113 = vector.extract_strided_slice %103 {offsets = [0, 32], sizes = [1, 32], strides = [1, 1]} : vector<1x96xf32> to vector<1x32xf32>
    %114 = arith.addf %112, %113 : vector<1x32xf32>
    %115 = arith.negf %114 : vector<1x32xf32>
    %116 = math.exp %115 : vector<1x32xf32>
    %cst_42 = arith.constant 1.000000e+00 : f32
    %117 = vector.broadcast %cst_42 : f32 to vector<1x32xf32>
    %118 = arith.addf %117, %116 : vector<1x32xf32>
    %119 = arith.divf %117, %118 : vector<1x32xf32>
    %120 = vector.extract_strided_slice %99 {offsets = [0, 64], sizes = [1, 32], strides = [1, 1]} : vector<1x96xf32> to vector<1x32xf32>
    %121 = vector.extract_strided_slice %103 {offsets = [0, 64], sizes = [1, 32], strides = [1, 1]} : vector<1x96xf32> to vector<1x32xf32>
    %122 = arith.mulf %111, %121 : vector<1x32xf32>
    %123 = arith.addf %120, %122 : vector<1x32xf32>
    %124 = math.tanh %123 : vector<1x32xf32>
    %cst_43 = arith.constant 1.000000e+00 : f32
    %125 = vector.broadcast %cst_43 : f32 to vector<1x32xf32>
    %126 = arith.subf %125, %119 : vector<1x32xf32>
    %127 = arith.mulf %126, %124 : vector<1x32xf32>
    %128 = arith.mulf %119, %64 : vector<1x32xf32>
    %129 = arith.addf %127, %128 : vector<1x32xf32>
    %cst_44 = arith.constant dense<0.000000e+00> : vector<1x8xf32>
    %130 = tpu.matmul %129, %1, %cst_44 {dimension_numbers = #tpu.dot_dimension_numbers<[1], [1], [0], [0], [0, 0, 1, 0], [], []>} : vector<1x32xf32>, vector<8x32xf32>, vector<1x8xf32> -> vector<1x8xf32>
    %131 = vector.broadcast %95 : i32 to vector<1x8xi32>
    %132 = arith.cmpi sge, %0, %131 : vector<1x8xi32>
    %cst_45 = arith.constant -1.000000e+30 : f32
    %133 = vector.broadcast %cst_45 : f32 to vector<1x8xf32>
    %134 = arith.select %132, %130, %133 : vector<1x8xi1>, vector<1x8xf32>
    %cst_46 = arith.constant dense<0xFF800000> : vector<1xf32>
    %135 = vector.multi_reduction <maximumf>, %134, %cst_46 [1] : vector<1x8xf32> to vector<1xf32>
    %136 = vector.shape_cast %135 : vector<1xf32> to vector<1x1xf32>
    %137 = vector.broadcast %136 : vector<1x1xf32> to vector<1x8xf32>
    %138 = arith.subf %134, %137 : vector<1x8xf32>
    %139 = vector.broadcast %136 : vector<1x1xf32> to vector<1x8xf32>
    %140 = arith.subf %134, %139 : vector<1x8xf32>
    %141 = math.exp %140 : vector<1x8xf32>
    %cst_47 = arith.constant dense<0.000000e+00> : vector<1xf32>
    %142 = vector.multi_reduction <add>, %141, %cst_47 [1] : vector<1x8xf32> to vector<1xf32>
    %143 = vector.shape_cast %142 : vector<1xf32> to vector<1x1xf32>
    %144 = math.log %143 : vector<1x1xf32>
    %145 = vector.broadcast %144 : vector<1x1xf32> to vector<1x8xf32>
    %146 = arith.subf %138, %145 : vector<1x8xf32>
    %147 = vector.broadcast %97 : i32 to vector<1x8xi32>
    %148 = arith.cmpi eq, %0, %147 : vector<1x8xi32>
    %cst_48 = arith.constant 0.000000e+00 : f32
    %149 = vector.broadcast %cst_48 : f32 to vector<1x8xf32>
    %150 = arith.select %148, %146, %149 : vector<1x8xi1>, vector<1x8xf32>
    %151 = vector.shape_cast %150 : vector<1x8xf32> to vector<1x1x8xf32>
    %cst_49 = arith.constant dense<0.000000e+00> : vector<1xf32>
    %152 = vector.multi_reduction <add>, %151, %cst_49 [1, 2] : vector<1x1x8xf32> to vector<1xf32>
    %153 = vector.shape_cast %152 : vector<1xf32> to vector<1x1x1xf32>
    %154 = vector.extract %153[0, 0, 0] : f32 from vector<1x1x1xf32>
    %155 = vector.broadcast %154 : f32 to vector<1x1xf32>
    %cst_50 = arith.constant 0.000000e+00 : f32
    %156 = vector.broadcast %cst_50 : f32 to vector<1x1xf32>
    %157 = arith.subf %156, %155 : vector<1x1xf32>
    %158 = arith.addf %93, %157 : vector<1x1xf32>
    %c2_i32_51 = arith.constant 2 : i32
    %159 = arith.index_cast %c2_i32_51 : i32 to index
    %160 = memref.load %arg1[%159] : memref<3xi32, #tpu.memory_space<smem>>
    %161 = arith.index_cast %c2_i32_51 : i32 to index
    %162 = memref.load %arg2[%161] : memref<3xi32, #tpu.memory_space<smem>>
    %163 = arith.index_cast %c2_i32_51 : i32 to index
    %c0_52 = arith.constant 0 : index
    %164 = vector.load %arg12[%163, %c0_52] : memref<3x96xf32, #tpu.memory_space<vmem>>, vector<1x96xf32>
    %c0_53 = arith.constant 0 : index
    %c0_54 = arith.constant 0 : index
    %165 = vector.load %arg5[%c0_53, %c0_54] : memref<32x96xf32, #tpu.memory_space<vmem>>, vector<32x96xf32>
    %cst_55 = arith.constant dense<0.000000e+00> : vector<1x96xf32>
    %166 = tpu.matmul %129, %165, %cst_55 {dimension_numbers = #tpu.dot_dimension_numbers<[1], [0], [0], [1], [0, 0, 1, 1], [], []>} : vector<1x32xf32>, vector<32x96xf32>, vector<1x96xf32> -> vector<1x96xf32>
    %c0_56 = arith.constant 0 : index
    %c0_57 = arith.constant 0 : index
    %167 = vector.load %arg7[%c0_56, %c0_57] : memref<1x96xf32, #tpu.memory_space<vmem>>, vector<1x96xf32>
    %168 = arith.addf %166, %167 : vector<1x96xf32>
    %169 = vector.extract_strided_slice %164 {offsets = [0, 0], sizes = [1, 32], strides = [1, 1]} : vector<1x96xf32> to vector<1x32xf32>
    %170 = vector.extract_strided_slice %168 {offsets = [0, 0], sizes = [1, 32], strides = [1, 1]} : vector<1x96xf32> to vector<1x32xf32>
    %171 = arith.addf %169, %170 : vector<1x32xf32>
    %172 = arith.negf %171 : vector<1x32xf32>
    %173 = math.exp %172 : vector<1x32xf32>
    %cst_58 = arith.constant 1.000000e+00 : f32
    %174 = vector.broadcast %cst_58 : f32 to vector<1x32xf32>
    %175 = arith.addf %174, %173 : vector<1x32xf32>
    %176 = arith.divf %174, %175 : vector<1x32xf32>
    %177 = vector.extract_strided_slice %164 {offsets = [0, 32], sizes = [1, 32], strides = [1, 1]} : vector<1x96xf32> to vector<1x32xf32>
    %178 = vector.extract_strided_slice %168 {offsets = [0, 32], sizes = [1, 32], strides = [1, 1]} : vector<1x96xf32> to vector<1x32xf32>
    %179 = arith.addf %177, %178 : vector<1x32xf32>
    %180 = arith.negf %179 : vector<1x32xf32>
    %181 = math.exp %180 : vector<1x32xf32>
    %cst_59 = arith.constant 1.000000e+00 : f32
    %182 = vector.broadcast %cst_59 : f32 to vector<1x32xf32>
    %183 = arith.addf %182, %181 : vector<1x32xf32>
    %184 = arith.divf %182, %183 : vector<1x32xf32>
    %185 = vector.extract_strided_slice %164 {offsets = [0, 64], sizes = [1, 32], strides = [1, 1]} : vector<1x96xf32> to vector<1x32xf32>
    %186 = vector.extract_strided_slice %168 {offsets = [0, 64], sizes = [1, 32], strides = [1, 1]} : vector<1x96xf32> to vector<1x32xf32>
    %187 = arith.mulf %176, %186 : vector<1x32xf32>
    %188 = arith.addf %185, %187 : vector<1x32xf32>
    %189 = math.tanh %188 : vector<1x32xf32>
    %cst_60 = arith.constant 1.000000e+00 : f32
    %190 = vector.broadcast %cst_60 : f32 to vector<1x32xf32>
    %191 = arith.subf %190, %184 : vector<1x32xf32>
    %192 = arith.mulf %191, %189 : vector<1x32xf32>
    %193 = arith.mulf %184, %129 : vector<1x32xf32>
    %194 = arith.addf %192, %193 : vector<1x32xf32>
    %cst_61 = arith.constant dense<0.000000e+00> : vector<1x8xf32>
    %195 = tpu.matmul %194, %1, %cst_61 {dimension_numbers = #tpu.dot_dimension_numbers<[1], [1], [0], [0], [0, 0, 1, 0], [], []>} : vector<1x32xf32>, vector<8x32xf32>, vector<1x8xf32> -> vector<1x8xf32>
    %196 = vector.broadcast %160 : i32 to vector<1x8xi32>
    %197 = arith.cmpi sge, %0, %196 : vector<1x8xi32>
    %cst_62 = arith.constant -1.000000e+30 : f32
    %198 = vector.broadcast %cst_62 : f32 to vector<1x8xf32>
    %199 = arith.select %197, %195, %198 : vector<1x8xi1>, vector<1x8xf32>
    %cst_63 = arith.constant dense<0xFF800000> : vector<1xf32>
    %200 = vector.multi_reduction <maximumf>, %199, %cst_63 [1] : vector<1x8xf32> to vector<1xf32>
    %201 = vector.shape_cast %200 : vector<1xf32> to vector<1x1xf32>
    %202 = vector.broadcast %201 : vector<1x1xf32> to vector<1x8xf32>
    %203 = arith.subf %199, %202 : vector<1x8xf32>
    %204 = vector.broadcast %201 : vector<1x1xf32> to vector<1x8xf32>
    %205 = arith.subf %199, %204 : vector<1x8xf32>
    %206 = math.exp %205 : vector<1x8xf32>
    %cst_64 = arith.constant dense<0.000000e+00> : vector<1xf32>
    %207 = vector.multi_reduction <add>, %206, %cst_64 [1] : vector<1x8xf32> to vector<1xf32>
    %208 = vector.shape_cast %207 : vector<1xf32> to vector<1x1xf32>
    %209 = math.log %208 : vector<1x1xf32>
    %210 = vector.broadcast %209 : vector<1x1xf32> to vector<1x8xf32>
    %211 = arith.subf %203, %210 : vector<1x8xf32>
    %212 = vector.broadcast %162 : i32 to vector<1x8xi32>
    %213 = arith.cmpi eq, %0, %212 : vector<1x8xi32>
    %cst_65 = arith.constant 0.000000e+00 : f32
    %214 = vector.broadcast %cst_65 : f32 to vector<1x8xf32>
    %215 = arith.select %213, %211, %214 : vector<1x8xi1>, vector<1x8xf32>
    %216 = vector.shape_cast %215 : vector<1x8xf32> to vector<1x1x8xf32>
    %cst_66 = arith.constant dense<0.000000e+00> : vector<1xf32>
    %217 = vector.multi_reduction <add>, %216, %cst_66 [1, 2] : vector<1x1x8xf32> to vector<1xf32>
    %218 = vector.shape_cast %217 : vector<1xf32> to vector<1x1x1xf32>
    %219 = vector.extract %218[0, 0, 0] : f32 from vector<1x1x1xf32>
    %220 = vector.broadcast %219 : f32 to vector<1x1xf32>
    %cst_67 = arith.constant 0.000000e+00 : f32
    %221 = vector.broadcast %cst_67 : f32 to vector<1x1xf32>
    %222 = arith.subf %221, %220 : vector<1x1xf32>
    %223 = arith.addf %158, %222 : vector<1x1xf32>
    %c3_i32_68 = arith.constant 3 : i32
    %c0_69 = arith.constant 0 : index
    %c0_70 = arith.constant 0 : index
    %224 = vector.load %arg10[%c0_69, %c0_70] : memref<1x1xf32, #tpu.memory_space<vmem>>, vector<1x1xf32>
    tpu.vector_store %arg10[%c0_69, %c0_70], %223 {strides = array<i32>} : memref<1x1xf32, #tpu.memory_space<vmem>>, vector<1x1xf32>,
    return
  }
  func.func @transform_0(%arg0: i32, %arg1: memref<3xi32, #tpu.memory_space<smem>>, %arg2: memref<3xi32, #tpu.memory_space<smem>>) -> (i32, i32) {
    %c0_i32 = arith.constant 0 : i32
    %c0_i32_0 = arith.constant 0 : i32
    %c0_i32_1 = arith.constant 0 : i32
    return %c0_i32, %c0_i32_0 : i32, i32
  }
  func.func @transform_1(%arg0: i32, %arg1: memref<3xi32, #tpu.memory_space<smem>>, %arg2: memref<3xi32, #tpu.memory_space<smem>>) -> (i32, i32) {
    %c0_i32 = arith.constant 0 : i32
    %c0_i32_0 = arith.constant 0 : i32
    %c0_i32_1 = arith.constant 0 : i32
    return %c0_i32, %c0_i32_0 : i32, i32
  }
  func.func @transform_2(%arg0: i32, %arg1: memref<3xi32, #tpu.memory_space<smem>>, %arg2: memref<3xi32, #tpu.memory_space<smem>>) -> (i32, i32) {
    %c0_i32 = arith.constant 0 : i32
    %c0_i32_0 = arith.constant 0 : i32
    %c0_i32_1 = arith.constant 0 : i32
    return %c0_i32, %c0_i32_0 : i32, i32
  }
  func.func @transform_3(%arg0: i32, %arg1: memref<3xi32, #tpu.memory_space<smem>>, %arg2: memref<3xi32, #tpu.memory_space<smem>>) -> (i32, i32) {
    %c0_i32 = arith.constant 0 : i32
    %c0_i32_0 = arith.constant 0 : i32
    %c0_i32_1 = arith.constant 0 : i32
    return %c0_i32, %c0_i32_0 : i32, i32
  }
  func.func @transform_4(%arg0: i32, %arg1: memref<3xi32, #tpu.memory_space<smem>>, %arg2: memref<3xi32, #tpu.memory_space<smem>>) -> (i32, i32) {
    %c0_i32 = arith.constant 0 : i32
    %c0_i32_0 = arith.constant 0 : i32
    %c0_i32_1 = arith.constant 0 : i32
    return %c0_i32, %c0_i32_0 : i32, i32
  }
  func.func @transform_5(%arg0: i32, %arg1: memref<3xi32, #tpu.memory_space<smem>>, %arg2: memref<3xi32, #tpu.memory_space<smem>>) -> (i32, i32) {
    %c0_i32 = arith.constant 0 : i32
    %c0_i32_0 = arith.constant 0 : i32
    %c0_i32_1 = arith.constant 0 : i32
    return %c0_i32, %c0_i32_0 : i32, i32
  }
  func.func @transform_6(%arg0: i32, %arg1: memref<3xi32, #tpu.memory_space<smem>>, %arg2: memref<3xi32, #tpu.memory_space<smem>>) -> (i32, i32) {
    %c0_i32 = arith.constant 0 : i32
    %c0_i32_0 = arith.constant 0 : i32
    %c0_i32_1 = arith.constant 0 : i32
    return %c0_i32, %c0_i32_0 : i32, i32
  }
  func.func @transform_7(%arg0: i32, %arg1: memref<3xi32, #tpu.memory_space<smem>>, %arg2: memref<3xi32, #tpu.memory_space<smem>>) -> (i32, i32) {
    %c0_i32 = arith.constant 0 : i32
    %c0_i32_0 = arith.constant 0 : i32
    %c0_i32_1 = arith.constant 0 : i32
    return %c0_i32, %c0_i32_0 : i32, i32
  }
}

module attributes {stable_mosaic.version = 11 : i64} {
  func.func @_bigru_fused_kernel(%arg0: i32, %arg1: memref<8x32xf32, #tpu.memory_space<vmem>>, %arg2: memref<32x96xf32, #tpu.memory_space<vmem>>, %arg3: memref<16x48xf32, #tpu.memory_space<vmem>>, %arg4: memref<16x48xf32, #tpu.memory_space<vmem>>, %arg5: memref<1x96xf32, #tpu.memory_space<vmem>>, %arg6: memref<1x48xf32, #tpu.memory_space<vmem>>, %arg7: memref<1x48xf32, #tpu.memory_space<vmem>>, %arg8: memref<8x32xf32, #tpu.memory_space<vmem>>, %arg9: memref<8x96xf32, #tpu.memory_space<vmem>>) attributes {dimension_semantics = [#tpu.dimension_semantics<arbitrary>], iteration_bounds = array<i64: 1>, scalar_prefetch = 0 : i64, scratch_operands = 1 : i64, tpu.core_type = #tpu.core_type<tc>, window_params = [{pipeline_mode = #tpu.pipeline_mode<synchronous>, transform_indices = @transform_0, window_bounds = array<i64: 8, 32>}, {pipeline_mode = #tpu.pipeline_mode<synchronous>, transform_indices = @transform_1, window_bounds = array<i64: 32, 96>}, {pipeline_mode = #tpu.pipeline_mode<synchronous>, transform_indices = @transform_2, window_bounds = array<i64: 16, 48>}, {pipeline_mode = #tpu.pipeline_mode<synchronous>, transform_indices = @transform_3, window_bounds = array<i64: 16, 48>}, {pipeline_mode = #tpu.pipeline_mode<synchronous>, transform_indices = @transform_4, window_bounds = array<i64: 1, 96>}, {pipeline_mode = #tpu.pipeline_mode<synchronous>, transform_indices = @transform_5, window_bounds = array<i64: 1, 48>}, {pipeline_mode = #tpu.pipeline_mode<synchronous>, transform_indices = @transform_6, window_bounds = array<i64: 1, 48>}, {pipeline_mode = #tpu.pipeline_mode<synchronous>, transform_indices = @transform_7, window_bounds = array<i64: 8, 32>}]} {
    %c0 = arith.constant 0 : index
    %c0_0 = arith.constant 0 : index
    %0 = vector.load %arg1[%c0, %c0_0] : memref<8x32xf32, #tpu.memory_space<vmem>>, vector<8x32xf32>
    %c0_1 = arith.constant 0 : index
    %c0_2 = arith.constant 0 : index
    %1 = vector.load %arg2[%c0_1, %c0_2] : memref<32x96xf32, #tpu.memory_space<vmem>>, vector<32x96xf32>
    %cst = arith.constant dense<0.000000e+00> : vector<8x96xf32>
    %2 = tpu.matmul %0, %1, %cst {dimension_numbers = #tpu.dot_dimension_numbers<[1], [0], [0], [1], [0, 0, 1, 1], [], []>} : vector<8x32xf32>, vector<32x96xf32>, vector<8x96xf32> -> vector<8x96xf32>
    %c0_3 = arith.constant 0 : index
    %c0_4 = arith.constant 0 : index
    %3 = vector.load %arg5[%c0_3, %c0_4] : memref<1x96xf32, #tpu.memory_space<vmem>>, vector<1x96xf32>
    %4 = vector.broadcast %3 : vector<1x96xf32> to vector<8x96xf32>
    %5 = arith.addf %2, %4 : vector<8x96xf32>
    %c0_5 = arith.constant 0 : index
    %c0_6 = arith.constant 0 : index
    %6 = vector.load %arg9[%c0_5, %c0_6] : memref<8x96xf32, #tpu.memory_space<vmem>>, vector<8x96xf32>
    tpu.vector_store %arg9[%c0_5, %c0_6], %5 {strides = array<i32>} : memref<8x96xf32, #tpu.memory_space<vmem>>, vector<8x96xf32>,
    %cst_7 = arith.constant 0.000000e+00 : f32
    %7 = vector.broadcast %cst_7 : f32 to vector<1x16xf32>
    %c0_i32 = arith.constant 0 : i32
    %c7_i32 = arith.constant 7 : i32
    %8 = arith.subi %c7_i32, %c0_i32 : i32
    %9 = arith.index_cast %c0_i32 : i32 to index
    %c0_8 = arith.constant 0 : index
    %10 = vector.load %arg9[%9, %c0_8] : memref<8x96xf32, #tpu.memory_space<vmem>>, vector<1x48xf32>
    %11 = arith.index_cast %8 : i32 to index
    %c48 = arith.constant 48 : index
    %12 = vector.load %arg9[%11, %c48] : memref<8x96xf32, #tpu.memory_space<vmem>>, vector<1x48xf32>
    %c0_9 = arith.constant 0 : index
    %c0_10 = arith.constant 0 : index
    %13 = vector.load %arg3[%c0_9, %c0_10] : memref<16x48xf32, #tpu.memory_space<vmem>>, vector<16x48xf32>
    %cst_11 = arith.constant dense<0.000000e+00> : vector<1x48xf32>
    %14 = tpu.matmul %7, %13, %cst_11 {dimension_numbers = #tpu.dot_dimension_numbers<[1], [0], [0], [1], [0, 0, 1, 1], [], []>} : vector<1x16xf32>, vector<16x48xf32>, vector<1x48xf32> -> vector<1x48xf32>
    %c0_12 = arith.constant 0 : index
    %c0_13 = arith.constant 0 : index
    %15 = vector.load %arg6[%c0_12, %c0_13] : memref<1x48xf32, #tpu.memory_space<vmem>>, vector<1x48xf32>
    %16 = arith.addf %14, %15 : vector<1x48xf32>
    %c0_14 = arith.constant 0 : index
    %c0_15 = arith.constant 0 : index
    %17 = vector.load %arg4[%c0_14, %c0_15] : memref<16x48xf32, #tpu.memory_space<vmem>>, vector<16x48xf32>
    %cst_16 = arith.constant dense<0.000000e+00> : vector<1x48xf32>
    %18 = tpu.matmul %7, %17, %cst_16 {dimension_numbers = #tpu.dot_dimension_numbers<[1], [0], [0], [1], [0, 0, 1, 1], [], []>} : vector<1x16xf32>, vector<16x48xf32>, vector<1x48xf32> -> vector<1x48xf32>
    %c0_17 = arith.constant 0 : index
    %c0_18 = arith.constant 0 : index
    %19 = vector.load %arg7[%c0_17, %c0_18] : memref<1x48xf32, #tpu.memory_space<vmem>>, vector<1x48xf32>
    %20 = arith.addf %18, %19 : vector<1x48xf32>
    %21 = vector.extract_strided_slice %10 {offsets = [0, 0], sizes = [1, 16], strides = [1, 1]} : vector<1x48xf32> to vector<1x16xf32>
    %22 = vector.extract_strided_slice %16 {offsets = [0, 0], sizes = [1, 16], strides = [1, 1]} : vector<1x48xf32> to vector<1x16xf32>
    %23 = arith.addf %21, %22 : vector<1x16xf32>
    %24 = arith.negf %23 : vector<1x16xf32>
    %25 = math.exp %24 : vector<1x16xf32>
    %cst_19 = arith.constant 1.000000e+00 : f32
    %26 = vector.broadcast %cst_19 : f32 to vector<1x16xf32>
    %27 = arith.addf %26, %25 : vector<1x16xf32>
    %28 = arith.divf %26, %27 : vector<1x16xf32>
    %29 = vector.extract_strided_slice %10 {offsets = [0, 16], sizes = [1, 16], strides = [1, 1]} : vector<1x48xf32> to vector<1x16xf32>
    %30 = vector.extract_strided_slice %16 {offsets = [0, 16], sizes = [1, 16], strides = [1, 1]} : vector<1x48xf32> to vector<1x16xf32>
    %31 = arith.addf %29, %30 : vector<1x16xf32>
    %32 = arith.negf %31 : vector<1x16xf32>
    %33 = math.exp %32 : vector<1x16xf32>
    %cst_20 = arith.constant 1.000000e+00 : f32
    %34 = vector.broadcast %cst_20 : f32 to vector<1x16xf32>
    %35 = arith.addf %34, %33 : vector<1x16xf32>
    %36 = arith.divf %34, %35 : vector<1x16xf32>
    %37 = vector.extract_strided_slice %10 {offsets = [0, 32], sizes = [1, 16], strides = [1, 1]} : vector<1x48xf32> to vector<1x16xf32>
    %38 = vector.extract_strided_slice %16 {offsets = [0, 32], sizes = [1, 16], strides = [1, 1]} : vector<1x48xf32> to vector<1x16xf32>
    %39 = arith.mulf %28, %38 : vector<1x16xf32>
    %40 = arith.addf %37, %39 : vector<1x16xf32>
    %41 = math.tanh %40 : vector<1x16xf32>
    %cst_21 = arith.constant 1.000000e+00 : f32
    %42 = vector.broadcast %cst_21 : f32 to vector<1x16xf32>
    %43 = arith.subf %42, %36 : vector<1x16xf32>
    %44 = arith.mulf %43, %41 : vector<1x16xf32>
    %45 = arith.mulf %36, %7 : vector<1x16xf32>
    %46 = arith.addf %44, %45 : vector<1x16xf32>
    %47 = vector.extract_strided_slice %12 {offsets = [0, 0], sizes = [1, 16], strides = [1, 1]} : vector<1x48xf32> to vector<1x16xf32>
    %48 = vector.extract_strided_slice %20 {offsets = [0, 0], sizes = [1, 16], strides = [1, 1]} : vector<1x48xf32> to vector<1x16xf32>
    %49 = arith.addf %47, %48 : vector<1x16xf32>
    %50 = arith.negf %49 : vector<1x16xf32>
    %51 = math.exp %50 : vector<1x16xf32>
    %cst_22 = arith.constant 1.000000e+00 : f32
    %52 = vector.broadcast %cst_22 : f32 to vector<1x16xf32>
    %53 = arith.addf %52, %51 : vector<1x16xf32>
    %54 = arith.divf %52, %53 : vector<1x16xf32>
    %55 = vector.extract_strided_slice %12 {offsets = [0, 16], sizes = [1, 16], strides = [1, 1]} : vector<1x48xf32> to vector<1x16xf32>
    %56 = vector.extract_strided_slice %20 {offsets = [0, 16], sizes = [1, 16], strides = [1, 1]} : vector<1x48xf32> to vector<1x16xf32>
    %57 = arith.addf %55, %56 : vector<1x16xf32>
    %58 = arith.negf %57 : vector<1x16xf32>
    %59 = math.exp %58 : vector<1x16xf32>
    %cst_23 = arith.constant 1.000000e+00 : f32
    %60 = vector.broadcast %cst_23 : f32 to vector<1x16xf32>
    %61 = arith.addf %60, %59 : vector<1x16xf32>
    %62 = arith.divf %60, %61 : vector<1x16xf32>
    %63 = vector.extract_strided_slice %12 {offsets = [0, 32], sizes = [1, 16], strides = [1, 1]} : vector<1x48xf32> to vector<1x16xf32>
    %64 = vector.extract_strided_slice %20 {offsets = [0, 32], sizes = [1, 16], strides = [1, 1]} : vector<1x48xf32> to vector<1x16xf32>
    %65 = arith.mulf %54, %64 : vector<1x16xf32>
    %66 = arith.addf %63, %65 : vector<1x16xf32>
    %67 = math.tanh %66 : vector<1x16xf32>
    %cst_24 = arith.constant 1.000000e+00 : f32
    %68 = vector.broadcast %cst_24 : f32 to vector<1x16xf32>
    %69 = arith.subf %68, %62 : vector<1x16xf32>
    %70 = arith.mulf %69, %67 : vector<1x16xf32>
    %71 = arith.mulf %62, %7 : vector<1x16xf32>
    %72 = arith.addf %70, %71 : vector<1x16xf32>
    %73 = arith.index_cast %c0_i32 : i32 to index
    %c0_25 = arith.constant 0 : index
    %74 = vector.load %arg8[%73, %c0_25] : memref<8x32xf32, #tpu.memory_space<vmem>>, vector<1x16xf32>
    tpu.vector_store %arg8[%73, %c0_25], %46 {strides = array<i32>} : memref<8x32xf32, #tpu.memory_space<vmem>>, vector<1x16xf32>,
    %75 = arith.index_cast %8 : i32 to index
    %c16 = arith.constant 16 : index
    %76 = vector.load %arg8[%75, %c16] : memref<8x32xf32, #tpu.memory_space<vmem>>, vector<1x16xf32>
    tpu.vector_store %arg8[%75, %c16], %72 {strides = array<i32>} : memref<8x32xf32, #tpu.memory_space<vmem>>, vector<1x16xf32>,
    %c1_i32 = arith.constant 1 : i32
    %c7_i32_26 = arith.constant 7 : i32
    %77 = arith.subi %c7_i32_26, %c1_i32 : i32
    %78 = arith.index_cast %c1_i32 : i32 to index
    %c0_27 = arith.constant 0 : index
    %79 = vector.load %arg9[%78, %c0_27] : memref<8x96xf32, #tpu.memory_space<vmem>>, vector<1x48xf32>
    %80 = arith.index_cast %77 : i32 to index
    %c48_28 = arith.constant 48 : index
    %81 = vector.load %arg9[%80, %c48_28] : memref<8x96xf32, #tpu.memory_space<vmem>>, vector<1x48xf32>
    %c0_29 = arith.constant 0 : index
    %c0_30 = arith.constant 0 : index
    %82 = vector.load %arg3[%c0_29, %c0_30] : memref<16x48xf32, #tpu.memory_space<vmem>>, vector<16x48xf32>
    %cst_31 = arith.constant dense<0.000000e+00> : vector<1x48xf32>
    %83 = tpu.matmul %46, %82, %cst_31 {dimension_numbers = #tpu.dot_dimension_numbers<[1], [0], [0], [1], [0, 0, 1, 1], [], []>} : vector<1x16xf32>, vector<16x48xf32>, vector<1x48xf32> -> vector<1x48xf32>
    %c0_32 = arith.constant 0 : index
    %c0_33 = arith.constant 0 : index
    %84 = vector.load %arg6[%c0_32, %c0_33] : memref<1x48xf32, #tpu.memory_space<vmem>>, vector<1x48xf32>
    %85 = arith.addf %83, %84 : vector<1x48xf32>
    %c0_34 = arith.constant 0 : index
    %c0_35 = arith.constant 0 : index
    %86 = vector.load %arg4[%c0_34, %c0_35] : memref<16x48xf32, #tpu.memory_space<vmem>>, vector<16x48xf32>
    %cst_36 = arith.constant dense<0.000000e+00> : vector<1x48xf32>
    %87 = tpu.matmul %72, %86, %cst_36 {dimension_numbers = #tpu.dot_dimension_numbers<[1], [0], [0], [1], [0, 0, 1, 1], [], []>} : vector<1x16xf32>, vector<16x48xf32>, vector<1x48xf32> -> vector<1x48xf32>
    %c0_37 = arith.constant 0 : index
    %c0_38 = arith.constant 0 : index
    %88 = vector.load %arg7[%c0_37, %c0_38] : memref<1x48xf32, #tpu.memory_space<vmem>>, vector<1x48xf32>
    %89 = arith.addf %87, %88 : vector<1x48xf32>
    %90 = vector.extract_strided_slice %79 {offsets = [0, 0], sizes = [1, 16], strides = [1, 1]} : vector<1x48xf32> to vector<1x16xf32>
    %91 = vector.extract_strided_slice %85 {offsets = [0, 0], sizes = [1, 16], strides = [1, 1]} : vector<1x48xf32> to vector<1x16xf32>
    %92 = arith.addf %90, %91 : vector<1x16xf32>
    %93 = arith.negf %92 : vector<1x16xf32>
    %94 = math.exp %93 : vector<1x16xf32>
    %cst_39 = arith.constant 1.000000e+00 : f32
    %95 = vector.broadcast %cst_39 : f32 to vector<1x16xf32>
    %96 = arith.addf %95, %94 : vector<1x16xf32>
    %97 = arith.divf %95, %96 : vector<1x16xf32>
    %98 = vector.extract_strided_slice %79 {offsets = [0, 16], sizes = [1, 16], strides = [1, 1]} : vector<1x48xf32> to vector<1x16xf32>
    %99 = vector.extract_strided_slice %85 {offsets = [0, 16], sizes = [1, 16], strides = [1, 1]} : vector<1x48xf32> to vector<1x16xf32>
    %100 = arith.addf %98, %99 : vector<1x16xf32>
    %101 = arith.negf %100 : vector<1x16xf32>
    %102 = math.exp %101 : vector<1x16xf32>
    %cst_40 = arith.constant 1.000000e+00 : f32
    %103 = vector.broadcast %cst_40 : f32 to vector<1x16xf32>
    %104 = arith.addf %103, %102 : vector<1x16xf32>
    %105 = arith.divf %103, %104 : vector<1x16xf32>
    %106 = vector.extract_strided_slice %79 {offsets = [0, 32], sizes = [1, 16], strides = [1, 1]} : vector<1x48xf32> to vector<1x16xf32>
    %107 = vector.extract_strided_slice %85 {offsets = [0, 32], sizes = [1, 16], strides = [1, 1]} : vector<1x48xf32> to vector<1x16xf32>
    %108 = arith.mulf %97, %107 : vector<1x16xf32>
    %109 = arith.addf %106, %108 : vector<1x16xf32>
    %110 = math.tanh %109 : vector<1x16xf32>
    %cst_41 = arith.constant 1.000000e+00 : f32
    %111 = vector.broadcast %cst_41 : f32 to vector<1x16xf32>
    %112 = arith.subf %111, %105 : vector<1x16xf32>
    %113 = arith.mulf %112, %110 : vector<1x16xf32>
    %114 = arith.mulf %105, %46 : vector<1x16xf32>
    %115 = arith.addf %113, %114 : vector<1x16xf32>
    %116 = vector.extract_strided_slice %81 {offsets = [0, 0], sizes = [1, 16], strides = [1, 1]} : vector<1x48xf32> to vector<1x16xf32>
    %117 = vector.extract_strided_slice %89 {offsets = [0, 0], sizes = [1, 16], strides = [1, 1]} : vector<1x48xf32> to vector<1x16xf32>
    %118 = arith.addf %116, %117 : vector<1x16xf32>
    %119 = arith.negf %118 : vector<1x16xf32>
    %120 = math.exp %119 : vector<1x16xf32>
    %cst_42 = arith.constant 1.000000e+00 : f32
    %121 = vector.broadcast %cst_42 : f32 to vector<1x16xf32>
    %122 = arith.addf %121, %120 : vector<1x16xf32>
    %123 = arith.divf %121, %122 : vector<1x16xf32>
    %124 = vector.extract_strided_slice %81 {offsets = [0, 16], sizes = [1, 16], strides = [1, 1]} : vector<1x48xf32> to vector<1x16xf32>
    %125 = vector.extract_strided_slice %89 {offsets = [0, 16], sizes = [1, 16], strides = [1, 1]} : vector<1x48xf32> to vector<1x16xf32>
    %126 = arith.addf %124, %125 : vector<1x16xf32>
    %127 = arith.negf %126 : vector<1x16xf32>
    %128 = math.exp %127 : vector<1x16xf32>
    %cst_43 = arith.constant 1.000000e+00 : f32
    %129 = vector.broadcast %cst_43 : f32 to vector<1x16xf32>
    %130 = arith.addf %129, %128 : vector<1x16xf32>
    %131 = arith.divf %129, %130 : vector<1x16xf32>
    %132 = vector.extract_strided_slice %81 {offsets = [0, 32], sizes = [1, 16], strides = [1, 1]} : vector<1x48xf32> to vector<1x16xf32>
    %133 = vector.extract_strided_slice %89 {offsets = [0, 32], sizes = [1, 16], strides = [1, 1]} : vector<1x48xf32> to vector<1x16xf32>
    %134 = arith.mulf %123, %133 : vector<1x16xf32>
    %135 = arith.addf %132, %134 : vector<1x16xf32>
    %136 = math.tanh %135 : vector<1x16xf32>
    %cst_44 = arith.constant 1.000000e+00 : f32
    %137 = vector.broadcast %cst_44 : f32 to vector<1x16xf32>
    %138 = arith.subf %137, %131 : vector<1x16xf32>
    %139 = arith.mulf %138, %136 : vector<1x16xf32>
    %140 = arith.mulf %131, %72 : vector<1x16xf32>
    %141 = arith.addf %139, %140 : vector<1x16xf32>
    %142 = arith.index_cast %c1_i32 : i32 to index
    %c0_45 = arith.constant 0 : index
    %143 = vector.load %arg8[%142, %c0_45] : memref<8x32xf32, #tpu.memory_space<vmem>>, vector<1x16xf32>
    tpu.vector_store %arg8[%142, %c0_45], %115 {strides = array<i32>} : memref<8x32xf32, #tpu.memory_space<vmem>>, vector<1x16xf32>,
    %144 = arith.index_cast %77 : i32 to index
    %c16_46 = arith.constant 16 : index
    %145 = vector.load %arg8[%144, %c16_46] : memref<8x32xf32, #tpu.memory_space<vmem>>, vector<1x16xf32>
    tpu.vector_store %arg8[%144, %c16_46], %141 {strides = array<i32>} : memref<8x32xf32, #tpu.memory_space<vmem>>, vector<1x16xf32>,
    %c2_i32 = arith.constant 2 : i32
    %c7_i32_47 = arith.constant 7 : i32
    %146 = arith.subi %c7_i32_47, %c2_i32 : i32
    %147 = arith.index_cast %c2_i32 : i32 to index
    %c0_48 = arith.constant 0 : index
    %148 = vector.load %arg9[%147, %c0_48] : memref<8x96xf32, #tpu.memory_space<vmem>>, vector<1x48xf32>
    %149 = arith.index_cast %146 : i32 to index
    %c48_49 = arith.constant 48 : index
    %150 = vector.load %arg9[%149, %c48_49] : memref<8x96xf32, #tpu.memory_space<vmem>>, vector<1x48xf32>
    %c0_50 = arith.constant 0 : index
    %c0_51 = arith.constant 0 : index
    %151 = vector.load %arg3[%c0_50, %c0_51] : memref<16x48xf32, #tpu.memory_space<vmem>>, vector<16x48xf32>
    %cst_52 = arith.constant dense<0.000000e+00> : vector<1x48xf32>
    %152 = tpu.matmul %115, %151, %cst_52 {dimension_numbers = #tpu.dot_dimension_numbers<[1], [0], [0], [1], [0, 0, 1, 1], [], []>} : vector<1x16xf32>, vector<16x48xf32>, vector<1x48xf32> -> vector<1x48xf32>
    %c0_53 = arith.constant 0 : index
    %c0_54 = arith.constant 0 : index
    %153 = vector.load %arg6[%c0_53, %c0_54] : memref<1x48xf32, #tpu.memory_space<vmem>>, vector<1x48xf32>
    %154 = arith.addf %152, %153 : vector<1x48xf32>
    %c0_55 = arith.constant 0 : index
    %c0_56 = arith.constant 0 : index
    %155 = vector.load %arg4[%c0_55, %c0_56] : memref<16x48xf32, #tpu.memory_space<vmem>>, vector<16x48xf32>
    %cst_57 = arith.constant dense<0.000000e+00> : vector<1x48xf32>
    %156 = tpu.matmul %141, %155, %cst_57 {dimension_numbers = #tpu.dot_dimension_numbers<[1], [0], [0], [1], [0, 0, 1, 1], [], []>} : vector<1x16xf32>, vector<16x48xf32>, vector<1x48xf32> -> vector<1x48xf32>
    %c0_58 = arith.constant 0 : index
    %c0_59 = arith.constant 0 : index
    %157 = vector.load %arg7[%c0_58, %c0_59] : memref<1x48xf32, #tpu.memory_space<vmem>>, vector<1x48xf32>
    %158 = arith.addf %156, %157 : vector<1x48xf32>
    %159 = vector.extract_strided_slice %148 {offsets = [0, 0], sizes = [1, 16], strides = [1, 1]} : vector<1x48xf32> to vector<1x16xf32>
    %160 = vector.extract_strided_slice %154 {offsets = [0, 0], sizes = [1, 16], strides = [1, 1]} : vector<1x48xf32> to vector<1x16xf32>
    %161 = arith.addf %159, %160 : vector<1x16xf32>
    %162 = arith.negf %161 : vector<1x16xf32>
    %163 = math.exp %162 : vector<1x16xf32>
    %cst_60 = arith.constant 1.000000e+00 : f32
    %164 = vector.broadcast %cst_60 : f32 to vector<1x16xf32>
    %165 = arith.addf %164, %163 : vector<1x16xf32>
    %166 = arith.divf %164, %165 : vector<1x16xf32>
    %167 = vector.extract_strided_slice %148 {offsets = [0, 16], sizes = [1, 16], strides = [1, 1]} : vector<1x48xf32> to vector<1x16xf32>
    %168 = vector.extract_strided_slice %154 {offsets = [0, 16], sizes = [1, 16], strides = [1, 1]} : vector<1x48xf32> to vector<1x16xf32>
    %169 = arith.addf %167, %168 : vector<1x16xf32>
    %170 = arith.negf %169 : vector<1x16xf32>
    %171 = math.exp %170 : vector<1x16xf32>
    %cst_61 = arith.constant 1.000000e+00 : f32
    %172 = vector.broadcast %cst_61 : f32 to vector<1x16xf32>
    %173 = arith.addf %172, %171 : vector<1x16xf32>
    %174 = arith.divf %172, %173 : vector<1x16xf32>
    %175 = vector.extract_strided_slice %148 {offsets = [0, 32], sizes = [1, 16], strides = [1, 1]} : vector<1x48xf32> to vector<1x16xf32>
    %176 = vector.extract_strided_slice %154 {offsets = [0, 32], sizes = [1, 16], strides = [1, 1]} : vector<1x48xf32> to vector<1x16xf32>
    %177 = arith.mulf %166, %176 : vector<1x16xf32>
    %178 = arith.addf %175, %177 : vector<1x16xf32>
    %179 = math.tanh %178 : vector<1x16xf32>
    %cst_62 = arith.constant 1.000000e+00 : f32
    %180 = vector.broadcast %cst_62 : f32 to vector<1x16xf32>
    %181 = arith.subf %180, %174 : vector<1x16xf32>
    %182 = arith.mulf %181, %179 : vector<1x16xf32>
    %183 = arith.mulf %174, %115 : vector<1x16xf32>
    %184 = arith.addf %182, %183 : vector<1x16xf32>
    %185 = vector.extract_strided_slice %150 {offsets = [0, 0], sizes = [1, 16], strides = [1, 1]} : vector<1x48xf32> to vector<1x16xf32>
    %186 = vector.extract_strided_slice %158 {offsets = [0, 0], sizes = [1, 16], strides = [1, 1]} : vector<1x48xf32> to vector<1x16xf32>
    %187 = arith.addf %185, %186 : vector<1x16xf32>
    %188 = arith.negf %187 : vector<1x16xf32>
    %189 = math.exp %188 : vector<1x16xf32>
    %cst_63 = arith.constant 1.000000e+00 : f32
    %190 = vector.broadcast %cst_63 : f32 to vector<1x16xf32>
    %191 = arith.addf %190, %189 : vector<1x16xf32>
    %192 = arith.divf %190, %191 : vector<1x16xf32>
    %193 = vector.extract_strided_slice %150 {offsets = [0, 16], sizes = [1, 16], strides = [1, 1]} : vector<1x48xf32> to vector<1x16xf32>
    %194 = vector.extract_strided_slice %158 {offsets = [0, 16], sizes = [1, 16], strides = [1, 1]} : vector<1x48xf32> to vector<1x16xf32>
    %195 = arith.addf %193, %194 : vector<1x16xf32>
    %196 = arith.negf %195 : vector<1x16xf32>
    %197 = math.exp %196 : vector<1x16xf32>
    %cst_64 = arith.constant 1.000000e+00 : f32
    %198 = vector.broadcast %cst_64 : f32 to vector<1x16xf32>
    %199 = arith.addf %198, %197 : vector<1x16xf32>
    %200 = arith.divf %198, %199 : vector<1x16xf32>
    %201 = vector.extract_strided_slice %150 {offsets = [0, 32], sizes = [1, 16], strides = [1, 1]} : vector<1x48xf32> to vector<1x16xf32>
    %202 = vector.extract_strided_slice %158 {offsets = [0, 32], sizes = [1, 16], strides = [1, 1]} : vector<1x48xf32> to vector<1x16xf32>
    %203 = arith.mulf %192, %202 : vector<1x16xf32>
    %204 = arith.addf %201, %203 : vector<1x16xf32>
    %205 = math.tanh %204 : vector<1x16xf32>
    %cst_65 = arith.constant 1.000000e+00 : f32
    %206 = vector.broadcast %cst_65 : f32 to vector<1x16xf32>
    %207 = arith.subf %206, %200 : vector<1x16xf32>
    %208 = arith.mulf %207, %205 : vector<1x16xf32>
    %209 = arith.mulf %200, %141 : vector<1x16xf32>
    %210 = arith.addf %208, %209 : vector<1x16xf32>
    %211 = arith.index_cast %c2_i32 : i32 to index
    %c0_66 = arith.constant 0 : index
    %212 = vector.load %arg8[%211, %c0_66] : memref<8x32xf32, #tpu.memory_space<vmem>>, vector<1x16xf32>
    tpu.vector_store %arg8[%211, %c0_66], %184 {strides = array<i32>} : memref<8x32xf32, #tpu.memory_space<vmem>>, vector<1x16xf32>,
    %213 = arith.index_cast %146 : i32 to index
    %c16_67 = arith.constant 16 : index
    %214 = vector.load %arg8[%213, %c16_67] : memref<8x32xf32, #tpu.memory_space<vmem>>, vector<1x16xf32>
    tpu.vector_store %arg8[%213, %c16_67], %210 {strides = array<i32>} : memref<8x32xf32, #tpu.memory_space<vmem>>, vector<1x16xf32>,
    %c3_i32 = arith.constant 3 : i32
    %c7_i32_68 = arith.constant 7 : i32
    %215 = arith.subi %c7_i32_68, %c3_i32 : i32
    %216 = arith.index_cast %c3_i32 : i32 to index
    %c0_69 = arith.constant 0 : index
    %217 = vector.load %arg9[%216, %c0_69] : memref<8x96xf32, #tpu.memory_space<vmem>>, vector<1x48xf32>
    %218 = arith.index_cast %215 : i32 to index
    %c48_70 = arith.constant 48 : index
    %219 = vector.load %arg9[%218, %c48_70] : memref<8x96xf32, #tpu.memory_space<vmem>>, vector<1x48xf32>
    %c0_71 = arith.constant 0 : index
    %c0_72 = arith.constant 0 : index
    %220 = vector.load %arg3[%c0_71, %c0_72] : memref<16x48xf32, #tpu.memory_space<vmem>>, vector<16x48xf32>
    %cst_73 = arith.constant dense<0.000000e+00> : vector<1x48xf32>
    %221 = tpu.matmul %184, %220, %cst_73 {dimension_numbers = #tpu.dot_dimension_numbers<[1], [0], [0], [1], [0, 0, 1, 1], [], []>} : vector<1x16xf32>, vector<16x48xf32>, vector<1x48xf32> -> vector<1x48xf32>
    %c0_74 = arith.constant 0 : index
    %c0_75 = arith.constant 0 : index
    %222 = vector.load %arg6[%c0_74, %c0_75] : memref<1x48xf32, #tpu.memory_space<vmem>>, vector<1x48xf32>
    %223 = arith.addf %221, %222 : vector<1x48xf32>
    %c0_76 = arith.constant 0 : index
    %c0_77 = arith.constant 0 : index
    %224 = vector.load %arg4[%c0_76, %c0_77] : memref<16x48xf32, #tpu.memory_space<vmem>>, vector<16x48xf32>
    %cst_78 = arith.constant dense<0.000000e+00> : vector<1x48xf32>
    %225 = tpu.matmul %210, %224, %cst_78 {dimension_numbers = #tpu.dot_dimension_numbers<[1], [0], [0], [1], [0, 0, 1, 1], [], []>} : vector<1x16xf32>, vector<16x48xf32>, vector<1x48xf32> -> vector<1x48xf32>
    %c0_79 = arith.constant 0 : index
    %c0_80 = arith.constant 0 : index
    %226 = vector.load %arg7[%c0_79, %c0_80] : memref<1x48xf32, #tpu.memory_space<vmem>>, vector<1x48xf32>
    %227 = arith.addf %225, %226 : vector<1x48xf32>
    %228 = vector.extract_strided_slice %217 {offsets = [0, 0], sizes = [1, 16], strides = [1, 1]} : vector<1x48xf32> to vector<1x16xf32>
    %229 = vector.extract_strided_slice %223 {offsets = [0, 0], sizes = [1, 16], strides = [1, 1]} : vector<1x48xf32> to vector<1x16xf32>
    %230 = arith.addf %228, %229 : vector<1x16xf32>
    %231 = arith.negf %230 : vector<1x16xf32>
    %232 = math.exp %231 : vector<1x16xf32>
    %cst_81 = arith.constant 1.000000e+00 : f32
    %233 = vector.broadcast %cst_81 : f32 to vector<1x16xf32>
    %234 = arith.addf %233, %232 : vector<1x16xf32>
    %235 = arith.divf %233, %234 : vector<1x16xf32>
    %236 = vector.extract_strided_slice %217 {offsets = [0, 16], sizes = [1, 16], strides = [1, 1]} : vector<1x48xf32> to vector<1x16xf32>
    %237 = vector.extract_strided_slice %223 {offsets = [0, 16], sizes = [1, 16], strides = [1, 1]} : vector<1x48xf32> to vector<1x16xf32>
    %238 = arith.addf %236, %237 : vector<1x16xf32>
    %239 = arith.negf %238 : vector<1x16xf32>
    %240 = math.exp %239 : vector<1x16xf32>
    %cst_82 = arith.constant 1.000000e+00 : f32
    %241 = vector.broadcast %cst_82 : f32 to vector<1x16xf32>
    %242 = arith.addf %241, %240 : vector<1x16xf32>
    %243 = arith.divf %241, %242 : vector<1x16xf32>
    %244 = vector.extract_strided_slice %217 {offsets = [0, 32], sizes = [1, 16], strides = [1, 1]} : vector<1x48xf32> to vector<1x16xf32>
    %245 = vector.extract_strided_slice %223 {offsets = [0, 32], sizes = [1, 16], strides = [1, 1]} : vector<1x48xf32> to vector<1x16xf32>
    %246 = arith.mulf %235, %245 : vector<1x16xf32>
    %247 = arith.addf %244, %246 : vector<1x16xf32>
    %248 = math.tanh %247 : vector<1x16xf32>
    %cst_83 = arith.constant 1.000000e+00 : f32
    %249 = vector.broadcast %cst_83 : f32 to vector<1x16xf32>
    %250 = arith.subf %249, %243 : vector<1x16xf32>
    %251 = arith.mulf %250, %248 : vector<1x16xf32>
    %252 = arith.mulf %243, %184 : vector<1x16xf32>
    %253 = arith.addf %251, %252 : vector<1x16xf32>
    %254 = vector.extract_strided_slice %219 {offsets = [0, 0], sizes = [1, 16], strides = [1, 1]} : vector<1x48xf32> to vector<1x16xf32>
    %255 = vector.extract_strided_slice %227 {offsets = [0, 0], sizes = [1, 16], strides = [1, 1]} : vector<1x48xf32> to vector<1x16xf32>
    %256 = arith.addf %254, %255 : vector<1x16xf32>
    %257 = arith.negf %256 : vector<1x16xf32>
    %258 = math.exp %257 : vector<1x16xf32>
    %cst_84 = arith.constant 1.000000e+00 : f32
    %259 = vector.broadcast %cst_84 : f32 to vector<1x16xf32>
    %260 = arith.addf %259, %258 : vector<1x16xf32>
    %261 = arith.divf %259, %260 : vector<1x16xf32>
    %262 = vector.extract_strided_slice %219 {offsets = [0, 16], sizes = [1, 16], strides = [1, 1]} : vector<1x48xf32> to vector<1x16xf32>
    %263 = vector.extract_strided_slice %227 {offsets = [0, 16], sizes = [1, 16], strides = [1, 1]} : vector<1x48xf32> to vector<1x16xf32>
    %264 = arith.addf %262, %263 : vector<1x16xf32>
    %265 = arith.negf %264 : vector<1x16xf32>
    %266 = math.exp %265 : vector<1x16xf32>
    %cst_85 = arith.constant 1.000000e+00 : f32
    %267 = vector.broadcast %cst_85 : f32 to vector<1x16xf32>
    %268 = arith.addf %267, %266 : vector<1x16xf32>
    %269 = arith.divf %267, %268 : vector<1x16xf32>
    %270 = vector.extract_strided_slice %219 {offsets = [0, 32], sizes = [1, 16], strides = [1, 1]} : vector<1x48xf32> to vector<1x16xf32>
    %271 = vector.extract_strided_slice %227 {offsets = [0, 32], sizes = [1, 16], strides = [1, 1]} : vector<1x48xf32> to vector<1x16xf32>
    %272 = arith.mulf %261, %271 : vector<1x16xf32>
    %273 = arith.addf %270, %272 : vector<1x16xf32>
    %274 = math.tanh %273 : vector<1x16xf32>
    %cst_86 = arith.constant 1.000000e+00 : f32
    %275 = vector.broadcast %cst_86 : f32 to vector<1x16xf32>
    %276 = arith.subf %275, %269 : vector<1x16xf32>
    %277 = arith.mulf %276, %274 : vector<1x16xf32>
    %278 = arith.mulf %269, %210 : vector<1x16xf32>
    %279 = arith.addf %277, %278 : vector<1x16xf32>
    %280 = arith.index_cast %c3_i32 : i32 to index
    %c0_87 = arith.constant 0 : index
    %281 = vector.load %arg8[%280, %c0_87] : memref<8x32xf32, #tpu.memory_space<vmem>>, vector<1x16xf32>
    tpu.vector_store %arg8[%280, %c0_87], %253 {strides = array<i32>} : memref<8x32xf32, #tpu.memory_space<vmem>>, vector<1x16xf32>,
    %282 = arith.index_cast %215 : i32 to index
    %c16_88 = arith.constant 16 : index
    %283 = vector.load %arg8[%282, %c16_88] : memref<8x32xf32, #tpu.memory_space<vmem>>, vector<1x16xf32>
    tpu.vector_store %arg8[%282, %c16_88], %279 {strides = array<i32>} : memref<8x32xf32, #tpu.memory_space<vmem>>, vector<1x16xf32>,
    %c4_i32 = arith.constant 4 : i32
    %c7_i32_89 = arith.constant 7 : i32
    %284 = arith.subi %c7_i32_89, %c4_i32 : i32
    %285 = arith.index_cast %c4_i32 : i32 to index
    %c0_90 = arith.constant 0 : index
    %286 = vector.load %arg9[%285, %c0_90] : memref<8x96xf32, #tpu.memory_space<vmem>>, vector<1x48xf32>
    %287 = arith.index_cast %284 : i32 to index
    %c48_91 = arith.constant 48 : index
    %288 = vector.load %arg9[%287, %c48_91] : memref<8x96xf32, #tpu.memory_space<vmem>>, vector<1x48xf32>
    %c0_92 = arith.constant 0 : index
    %c0_93 = arith.constant 0 : index
    %289 = vector.load %arg3[%c0_92, %c0_93] : memref<16x48xf32, #tpu.memory_space<vmem>>, vector<16x48xf32>
    %cst_94 = arith.constant dense<0.000000e+00> : vector<1x48xf32>
    %290 = tpu.matmul %253, %289, %cst_94 {dimension_numbers = #tpu.dot_dimension_numbers<[1], [0], [0], [1], [0, 0, 1, 1], [], []>} : vector<1x16xf32>, vector<16x48xf32>, vector<1x48xf32> -> vector<1x48xf32>
    %c0_95 = arith.constant 0 : index
    %c0_96 = arith.constant 0 : index
    %291 = vector.load %arg6[%c0_95, %c0_96] : memref<1x48xf32, #tpu.memory_space<vmem>>, vector<1x48xf32>
    %292 = arith.addf %290, %291 : vector<1x48xf32>
    %c0_97 = arith.constant 0 : index
    %c0_98 = arith.constant 0 : index
    %293 = vector.load %arg4[%c0_97, %c0_98] : memref<16x48xf32, #tpu.memory_space<vmem>>, vector<16x48xf32>
    %cst_99 = arith.constant dense<0.000000e+00> : vector<1x48xf32>
    %294 = tpu.matmul %279, %293, %cst_99 {dimension_numbers = #tpu.dot_dimension_numbers<[1], [0], [0], [1], [0, 0, 1, 1], [], []>} : vector<1x16xf32>, vector<16x48xf32>, vector<1x48xf32> -> vector<1x48xf32>
    %c0_100 = arith.constant 0 : index
    %c0_101 = arith.constant 0 : index
    %295 = vector.load %arg7[%c0_100, %c0_101] : memref<1x48xf32, #tpu.memory_space<vmem>>, vector<1x48xf32>
    %296 = arith.addf %294, %295 : vector<1x48xf32>
    %297 = vector.extract_strided_slice %286 {offsets = [0, 0], sizes = [1, 16], strides = [1, 1]} : vector<1x48xf32> to vector<1x16xf32>
    %298 = vector.extract_strided_slice %292 {offsets = [0, 0], sizes = [1, 16], strides = [1, 1]} : vector<1x48xf32> to vector<1x16xf32>
    %299 = arith.addf %297, %298 : vector<1x16xf32>
    %300 = arith.negf %299 : vector<1x16xf32>
    %301 = math.exp %300 : vector<1x16xf32>
    %cst_102 = arith.constant 1.000000e+00 : f32
    %302 = vector.broadcast %cst_102 : f32 to vector<1x16xf32>
    %303 = arith.addf %302, %301 : vector<1x16xf32>
    %304 = arith.divf %302, %303 : vector<1x16xf32>
    %305 = vector.extract_strided_slice %286 {offsets = [0, 16], sizes = [1, 16], strides = [1, 1]} : vector<1x48xf32> to vector<1x16xf32>
    %306 = vector.extract_strided_slice %292 {offsets = [0, 16], sizes = [1, 16], strides = [1, 1]} : vector<1x48xf32> to vector<1x16xf32>
    %307 = arith.addf %305, %306 : vector<1x16xf32>
    %308 = arith.negf %307 : vector<1x16xf32>
    %309 = math.exp %308 : vector<1x16xf32>
    %cst_103 = arith.constant 1.000000e+00 : f32
    %310 = vector.broadcast %cst_103 : f32 to vector<1x16xf32>
    %311 = arith.addf %310, %309 : vector<1x16xf32>
    %312 = arith.divf %310, %311 : vector<1x16xf32>
    %313 = vector.extract_strided_slice %286 {offsets = [0, 32], sizes = [1, 16], strides = [1, 1]} : vector<1x48xf32> to vector<1x16xf32>
    %314 = vector.extract_strided_slice %292 {offsets = [0, 32], sizes = [1, 16], strides = [1, 1]} : vector<1x48xf32> to vector<1x16xf32>
    %315 = arith.mulf %304, %314 : vector<1x16xf32>
    %316 = arith.addf %313, %315 : vector<1x16xf32>
    %317 = math.tanh %316 : vector<1x16xf32>
    %cst_104 = arith.constant 1.000000e+00 : f32
    %318 = vector.broadcast %cst_104 : f32 to vector<1x16xf32>
    %319 = arith.subf %318, %312 : vector<1x16xf32>
    %320 = arith.mulf %319, %317 : vector<1x16xf32>
    %321 = arith.mulf %312, %253 : vector<1x16xf32>
    %322 = arith.addf %320, %321 : vector<1x16xf32>
    %323 = vector.extract_strided_slice %288 {offsets = [0, 0], sizes = [1, 16], strides = [1, 1]} : vector<1x48xf32> to vector<1x16xf32>
    %324 = vector.extract_strided_slice %296 {offsets = [0, 0], sizes = [1, 16], strides = [1, 1]} : vector<1x48xf32> to vector<1x16xf32>
    %325 = arith.addf %323, %324 : vector<1x16xf32>
    %326 = arith.negf %325 : vector<1x16xf32>
    %327 = math.exp %326 : vector<1x16xf32>
    %cst_105 = arith.constant 1.000000e+00 : f32
    %328 = vector.broadcast %cst_105 : f32 to vector<1x16xf32>
    %329 = arith.addf %328, %327 : vector<1x16xf32>
    %330 = arith.divf %328, %329 : vector<1x16xf32>
    %331 = vector.extract_strided_slice %288 {offsets = [0, 16], sizes = [1, 16], strides = [1, 1]} : vector<1x48xf32> to vector<1x16xf32>
    %332 = vector.extract_strided_slice %296 {offsets = [0, 16], sizes = [1, 16], strides = [1, 1]} : vector<1x48xf32> to vector<1x16xf32>
    %333 = arith.addf %331, %332 : vector<1x16xf32>
    %334 = arith.negf %333 : vector<1x16xf32>
    %335 = math.exp %334 : vector<1x16xf32>
    %cst_106 = arith.constant 1.000000e+00 : f32
    %336 = vector.broadcast %cst_106 : f32 to vector<1x16xf32>
    %337 = arith.addf %336, %335 : vector<1x16xf32>
    %338 = arith.divf %336, %337 : vector<1x16xf32>
    %339 = vector.extract_strided_slice %288 {offsets = [0, 32], sizes = [1, 16], strides = [1, 1]} : vector<1x48xf32> to vector<1x16xf32>
    %340 = vector.extract_strided_slice %296 {offsets = [0, 32], sizes = [1, 16], strides = [1, 1]} : vector<1x48xf32> to vector<1x16xf32>
    %341 = arith.mulf %330, %340 : vector<1x16xf32>
    %342 = arith.addf %339, %341 : vector<1x16xf32>
    %343 = math.tanh %342 : vector<1x16xf32>
    %cst_107 = arith.constant 1.000000e+00 : f32
    %344 = vector.broadcast %cst_107 : f32 to vector<1x16xf32>
    %345 = arith.subf %344, %338 : vector<1x16xf32>
    %346 = arith.mulf %345, %343 : vector<1x16xf32>
    %347 = arith.mulf %338, %279 : vector<1x16xf32>
    %348 = arith.addf %346, %347 : vector<1x16xf32>
    %349 = arith.index_cast %c4_i32 : i32 to index
    %c0_108 = arith.constant 0 : index
    %350 = vector.load %arg8[%349, %c0_108] : memref<8x32xf32, #tpu.memory_space<vmem>>, vector<1x16xf32>
    tpu.vector_store %arg8[%349, %c0_108], %322 {strides = array<i32>} : memref<8x32xf32, #tpu.memory_space<vmem>>, vector<1x16xf32>,
    %351 = arith.index_cast %284 : i32 to index
    %c16_109 = arith.constant 16 : index
    %352 = vector.load %arg8[%351, %c16_109] : memref<8x32xf32, #tpu.memory_space<vmem>>, vector<1x16xf32>
    tpu.vector_store %arg8[%351, %c16_109], %348 {strides = array<i32>} : memref<8x32xf32, #tpu.memory_space<vmem>>, vector<1x16xf32>,
    %c5_i32 = arith.constant 5 : i32
    %c7_i32_110 = arith.constant 7 : i32
    %353 = arith.subi %c7_i32_110, %c5_i32 : i32
    %354 = arith.index_cast %c5_i32 : i32 to index
    %c0_111 = arith.constant 0 : index
    %355 = vector.load %arg9[%354, %c0_111] : memref<8x96xf32, #tpu.memory_space<vmem>>, vector<1x48xf32>
    %356 = arith.index_cast %353 : i32 to index
    %c48_112 = arith.constant 48 : index
    %357 = vector.load %arg9[%356, %c48_112] : memref<8x96xf32, #tpu.memory_space<vmem>>, vector<1x48xf32>
    %c0_113 = arith.constant 0 : index
    %c0_114 = arith.constant 0 : index
    %358 = vector.load %arg3[%c0_113, %c0_114] : memref<16x48xf32, #tpu.memory_space<vmem>>, vector<16x48xf32>
    %cst_115 = arith.constant dense<0.000000e+00> : vector<1x48xf32>
    %359 = tpu.matmul %322, %358, %cst_115 {dimension_numbers = #tpu.dot_dimension_numbers<[1], [0], [0], [1], [0, 0, 1, 1], [], []>} : vector<1x16xf32>, vector<16x48xf32>, vector<1x48xf32> -> vector<1x48xf32>
    %c0_116 = arith.constant 0 : index
    %c0_117 = arith.constant 0 : index
    %360 = vector.load %arg6[%c0_116, %c0_117] : memref<1x48xf32, #tpu.memory_space<vmem>>, vector<1x48xf32>
    %361 = arith.addf %359, %360 : vector<1x48xf32>
    %c0_118 = arith.constant 0 : index
    %c0_119 = arith.constant 0 : index
    %362 = vector.load %arg4[%c0_118, %c0_119] : memref<16x48xf32, #tpu.memory_space<vmem>>, vector<16x48xf32>
    %cst_120 = arith.constant dense<0.000000e+00> : vector<1x48xf32>
    %363 = tpu.matmul %348, %362, %cst_120 {dimension_numbers = #tpu.dot_dimension_numbers<[1], [0], [0], [1], [0, 0, 1, 1], [], []>} : vector<1x16xf32>, vector<16x48xf32>, vector<1x48xf32> -> vector<1x48xf32>
    %c0_121 = arith.constant 0 : index
    %c0_122 = arith.constant 0 : index
    %364 = vector.load %arg7[%c0_121, %c0_122] : memref<1x48xf32, #tpu.memory_space<vmem>>, vector<1x48xf32>
    %365 = arith.addf %363, %364 : vector<1x48xf32>
    %366 = vector.extract_strided_slice %355 {offsets = [0, 0], sizes = [1, 16], strides = [1, 1]} : vector<1x48xf32> to vector<1x16xf32>
    %367 = vector.extract_strided_slice %361 {offsets = [0, 0], sizes = [1, 16], strides = [1, 1]} : vector<1x48xf32> to vector<1x16xf32>
    %368 = arith.addf %366, %367 : vector<1x16xf32>
    %369 = arith.negf %368 : vector<1x16xf32>
    %370 = math.exp %369 : vector<1x16xf32>
    %cst_123 = arith.constant 1.000000e+00 : f32
    %371 = vector.broadcast %cst_123 : f32 to vector<1x16xf32>
    %372 = arith.addf %371, %370 : vector<1x16xf32>
    %373 = arith.divf %371, %372 : vector<1x16xf32>
    %374 = vector.extract_strided_slice %355 {offsets = [0, 16], sizes = [1, 16], strides = [1, 1]} : vector<1x48xf32> to vector<1x16xf32>
    %375 = vector.extract_strided_slice %361 {offsets = [0, 16], sizes = [1, 16], strides = [1, 1]} : vector<1x48xf32> to vector<1x16xf32>
    %376 = arith.addf %374, %375 : vector<1x16xf32>
    %377 = arith.negf %376 : vector<1x16xf32>
    %378 = math.exp %377 : vector<1x16xf32>
    %cst_124 = arith.constant 1.000000e+00 : f32
    %379 = vector.broadcast %cst_124 : f32 to vector<1x16xf32>
    %380 = arith.addf %379, %378 : vector<1x16xf32>
    %381 = arith.divf %379, %380 : vector<1x16xf32>
    %382 = vector.extract_strided_slice %355 {offsets = [0, 32], sizes = [1, 16], strides = [1, 1]} : vector<1x48xf32> to vector<1x16xf32>
    %383 = vector.extract_strided_slice %361 {offsets = [0, 32], sizes = [1, 16], strides = [1, 1]} : vector<1x48xf32> to vector<1x16xf32>
    %384 = arith.mulf %373, %383 : vector<1x16xf32>
    %385 = arith.addf %382, %384 : vector<1x16xf32>
    %386 = math.tanh %385 : vector<1x16xf32>
    %cst_125 = arith.constant 1.000000e+00 : f32
    %387 = vector.broadcast %cst_125 : f32 to vector<1x16xf32>
    %388 = arith.subf %387, %381 : vector<1x16xf32>
    %389 = arith.mulf %388, %386 : vector<1x16xf32>
    %390 = arith.mulf %381, %322 : vector<1x16xf32>
    %391 = arith.addf %389, %390 : vector<1x16xf32>
    %392 = vector.extract_strided_slice %357 {offsets = [0, 0], sizes = [1, 16], strides = [1, 1]} : vector<1x48xf32> to vector<1x16xf32>
    %393 = vector.extract_strided_slice %365 {offsets = [0, 0], sizes = [1, 16], strides = [1, 1]} : vector<1x48xf32> to vector<1x16xf32>
    %394 = arith.addf %392, %393 : vector<1x16xf32>
    %395 = arith.negf %394 : vector<1x16xf32>
    %396 = math.exp %395 : vector<1x16xf32>
    %cst_126 = arith.constant 1.000000e+00 : f32
    %397 = vector.broadcast %cst_126 : f32 to vector<1x16xf32>
    %398 = arith.addf %397, %396 : vector<1x16xf32>
    %399 = arith.divf %397, %398 : vector<1x16xf32>
    %400 = vector.extract_strided_slice %357 {offsets = [0, 16], sizes = [1, 16], strides = [1, 1]} : vector<1x48xf32> to vector<1x16xf32>
    %401 = vector.extract_strided_slice %365 {offsets = [0, 16], sizes = [1, 16], strides = [1, 1]} : vector<1x48xf32> to vector<1x16xf32>
    %402 = arith.addf %400, %401 : vector<1x16xf32>
    %403 = arith.negf %402 : vector<1x16xf32>
    %404 = math.exp %403 : vector<1x16xf32>
    %cst_127 = arith.constant 1.000000e+00 : f32
    %405 = vector.broadcast %cst_127 : f32 to vector<1x16xf32>
    %406 = arith.addf %405, %404 : vector<1x16xf32>
    %407 = arith.divf %405, %406 : vector<1x16xf32>
    %408 = vector.extract_strided_slice %357 {offsets = [0, 32], sizes = [1, 16], strides = [1, 1]} : vector<1x48xf32> to vector<1x16xf32>
    %409 = vector.extract_strided_slice %365 {offsets = [0, 32], sizes = [1, 16], strides = [1, 1]} : vector<1x48xf32> to vector<1x16xf32>
    %410 = arith.mulf %399, %409 : vector<1x16xf32>
    %411 = arith.addf %408, %410 : vector<1x16xf32>
    %412 = math.tanh %411 : vector<1x16xf32>
    %cst_128 = arith.constant 1.000000e+00 : f32
    %413 = vector.broadcast %cst_128 : f32 to vector<1x16xf32>
    %414 = arith.subf %413, %407 : vector<1x16xf32>
    %415 = arith.mulf %414, %412 : vector<1x16xf32>
    %416 = arith.mulf %407, %348 : vector<1x16xf32>
    %417 = arith.addf %415, %416 : vector<1x16xf32>
    %418 = arith.index_cast %c5_i32 : i32 to index
    %c0_129 = arith.constant 0 : index
    %419 = vector.load %arg8[%418, %c0_129] : memref<8x32xf32, #tpu.memory_space<vmem>>, vector<1x16xf32>
    tpu.vector_store %arg8[%418, %c0_129], %391 {strides = array<i32>} : memref<8x32xf32, #tpu.memory_space<vmem>>, vector<1x16xf32>,
    %420 = arith.index_cast %353 : i32 to index
    %c16_130 = arith.constant 16 : index
    %421 = vector.load %arg8[%420, %c16_130] : memref<8x32xf32, #tpu.memory_space<vmem>>, vector<1x16xf32>
    tpu.vector_store %arg8[%420, %c16_130], %417 {strides = array<i32>} : memref<8x32xf32, #tpu.memory_space<vmem>>, vector<1x16xf32>,
    %c6_i32 = arith.constant 6 : i32
    %c7_i32_131 = arith.constant 7 : i32
    %422 = arith.subi %c7_i32_131, %c6_i32 : i32
    %423 = arith.index_cast %c6_i32 : i32 to index
    %c0_132 = arith.constant 0 : index
    %424 = vector.load %arg9[%423, %c0_132] : memref<8x96xf32, #tpu.memory_space<vmem>>, vector<1x48xf32>
    %425 = arith.index_cast %422 : i32 to index
    %c48_133 = arith.constant 48 : index
    %426 = vector.load %arg9[%425, %c48_133] : memref<8x96xf32, #tpu.memory_space<vmem>>, vector<1x48xf32>
    %c0_134 = arith.constant 0 : index
    %c0_135 = arith.constant 0 : index
    %427 = vector.load %arg3[%c0_134, %c0_135] : memref<16x48xf32, #tpu.memory_space<vmem>>, vector<16x48xf32>
    %cst_136 = arith.constant dense<0.000000e+00> : vector<1x48xf32>
    %428 = tpu.matmul %391, %427, %cst_136 {dimension_numbers = #tpu.dot_dimension_numbers<[1], [0], [0], [1], [0, 0, 1, 1], [], []>} : vector<1x16xf32>, vector<16x48xf32>, vector<1x48xf32> -> vector<1x48xf32>
    %c0_137 = arith.constant 0 : index
    %c0_138 = arith.constant 0 : index
    %429 = vector.load %arg6[%c0_137, %c0_138] : memref<1x48xf32, #tpu.memory_space<vmem>>, vector<1x48xf32>
    %430 = arith.addf %428, %429 : vector<1x48xf32>
    %c0_139 = arith.constant 0 : index
    %c0_140 = arith.constant 0 : index
    %431 = vector.load %arg4[%c0_139, %c0_140] : memref<16x48xf32, #tpu.memory_space<vmem>>, vector<16x48xf32>
    %cst_141 = arith.constant dense<0.000000e+00> : vector<1x48xf32>
    %432 = tpu.matmul %417, %431, %cst_141 {dimension_numbers = #tpu.dot_dimension_numbers<[1], [0], [0], [1], [0, 0, 1, 1], [], []>} : vector<1x16xf32>, vector<16x48xf32>, vector<1x48xf32> -> vector<1x48xf32>
    %c0_142 = arith.constant 0 : index
    %c0_143 = arith.constant 0 : index
    %433 = vector.load %arg7[%c0_142, %c0_143] : memref<1x48xf32, #tpu.memory_space<vmem>>, vector<1x48xf32>
    %434 = arith.addf %432, %433 : vector<1x48xf32>
    %435 = vector.extract_strided_slice %424 {offsets = [0, 0], sizes = [1, 16], strides = [1, 1]} : vector<1x48xf32> to vector<1x16xf32>
    %436 = vector.extract_strided_slice %430 {offsets = [0, 0], sizes = [1, 16], strides = [1, 1]} : vector<1x48xf32> to vector<1x16xf32>
    %437 = arith.addf %435, %436 : vector<1x16xf32>
    %438 = arith.negf %437 : vector<1x16xf32>
    %439 = math.exp %438 : vector<1x16xf32>
    %cst_144 = arith.constant 1.000000e+00 : f32
    %440 = vector.broadcast %cst_144 : f32 to vector<1x16xf32>
    %441 = arith.addf %440, %439 : vector<1x16xf32>
    %442 = arith.divf %440, %441 : vector<1x16xf32>
    %443 = vector.extract_strided_slice %424 {offsets = [0, 16], sizes = [1, 16], strides = [1, 1]} : vector<1x48xf32> to vector<1x16xf32>
    %444 = vector.extract_strided_slice %430 {offsets = [0, 16], sizes = [1, 16], strides = [1, 1]} : vector<1x48xf32> to vector<1x16xf32>
    %445 = arith.addf %443, %444 : vector<1x16xf32>
    %446 = arith.negf %445 : vector<1x16xf32>
    %447 = math.exp %446 : vector<1x16xf32>
    %cst_145 = arith.constant 1.000000e+00 : f32
    %448 = vector.broadcast %cst_145 : f32 to vector<1x16xf32>
    %449 = arith.addf %448, %447 : vector<1x16xf32>
    %450 = arith.divf %448, %449 : vector<1x16xf32>
    %451 = vector.extract_strided_slice %424 {offsets = [0, 32], sizes = [1, 16], strides = [1, 1]} : vector<1x48xf32> to vector<1x16xf32>
    %452 = vector.extract_strided_slice %430 {offsets = [0, 32], sizes = [1, 16], strides = [1, 1]} : vector<1x48xf32> to vector<1x16xf32>
    %453 = arith.mulf %442, %452 : vector<1x16xf32>
    %454 = arith.addf %451, %453 : vector<1x16xf32>
    %455 = math.tanh %454 : vector<1x16xf32>
    %cst_146 = arith.constant 1.000000e+00 : f32
    %456 = vector.broadcast %cst_146 : f32 to vector<1x16xf32>
    %457 = arith.subf %456, %450 : vector<1x16xf32>
    %458 = arith.mulf %457, %455 : vector<1x16xf32>
    %459 = arith.mulf %450, %391 : vector<1x16xf32>
    %460 = arith.addf %458, %459 : vector<1x16xf32>
    %461 = vector.extract_strided_slice %426 {offsets = [0, 0], sizes = [1, 16], strides = [1, 1]} : vector<1x48xf32> to vector<1x16xf32>
    %462 = vector.extract_strided_slice %434 {offsets = [0, 0], sizes = [1, 16], strides = [1, 1]} : vector<1x48xf32> to vector<1x16xf32>
    %463 = arith.addf %461, %462 : vector<1x16xf32>
    %464 = arith.negf %463 : vector<1x16xf32>
    %465 = math.exp %464 : vector<1x16xf32>
    %cst_147 = arith.constant 1.000000e+00 : f32
    %466 = vector.broadcast %cst_147 : f32 to vector<1x16xf32>
    %467 = arith.addf %466, %465 : vector<1x16xf32>
    %468 = arith.divf %466, %467 : vector<1x16xf32>
    %469 = vector.extract_strided_slice %426 {offsets = [0, 16], sizes = [1, 16], strides = [1, 1]} : vector<1x48xf32> to vector<1x16xf32>
    %470 = vector.extract_strided_slice %434 {offsets = [0, 16], sizes = [1, 16], strides = [1, 1]} : vector<1x48xf32> to vector<1x16xf32>
    %471 = arith.addf %469, %470 : vector<1x16xf32>
    %472 = arith.negf %471 : vector<1x16xf32>
    %473 = math.exp %472 : vector<1x16xf32>
    %cst_148 = arith.constant 1.000000e+00 : f32
    %474 = vector.broadcast %cst_148 : f32 to vector<1x16xf32>
    %475 = arith.addf %474, %473 : vector<1x16xf32>
    %476 = arith.divf %474, %475 : vector<1x16xf32>
    %477 = vector.extract_strided_slice %426 {offsets = [0, 32], sizes = [1, 16], strides = [1, 1]} : vector<1x48xf32> to vector<1x16xf32>
    %478 = vector.extract_strided_slice %434 {offsets = [0, 32], sizes = [1, 16], strides = [1, 1]} : vector<1x48xf32> to vector<1x16xf32>
    %479 = arith.mulf %468, %478 : vector<1x16xf32>
    %480 = arith.addf %477, %479 : vector<1x16xf32>
    %481 = math.tanh %480 : vector<1x16xf32>
    %cst_149 = arith.constant 1.000000e+00 : f32
    %482 = vector.broadcast %cst_149 : f32 to vector<1x16xf32>
    %483 = arith.subf %482, %476 : vector<1x16xf32>
    %484 = arith.mulf %483, %481 : vector<1x16xf32>
    %485 = arith.mulf %476, %417 : vector<1x16xf32>
    %486 = arith.addf %484, %485 : vector<1x16xf32>
    %487 = arith.index_cast %c6_i32 : i32 to index
    %c0_150 = arith.constant 0 : index
    %488 = vector.load %arg8[%487, %c0_150] : memref<8x32xf32, #tpu.memory_space<vmem>>, vector<1x16xf32>
    tpu.vector_store %arg8[%487, %c0_150], %460 {strides = array<i32>} : memref<8x32xf32, #tpu.memory_space<vmem>>, vector<1x16xf32>,
    %489 = arith.index_cast %422 : i32 to index
    %c16_151 = arith.constant 16 : index
    %490 = vector.load %arg8[%489, %c16_151] : memref<8x32xf32, #tpu.memory_space<vmem>>, vector<1x16xf32>
    tpu.vector_store %arg8[%489, %c16_151], %486 {strides = array<i32>} : memref<8x32xf32, #tpu.memory_space<vmem>>, vector<1x16xf32>,
    %c7_i32_152 = arith.constant 7 : i32
    %c7_i32_153 = arith.constant 7 : i32
    %491 = arith.subi %c7_i32_153, %c7_i32_152 : i32
    %492 = arith.index_cast %c7_i32_152 : i32 to index
    %c0_154 = arith.constant 0 : index
    %493 = vector.load %arg9[%492, %c0_154] : memref<8x96xf32, #tpu.memory_space<vmem>>, vector<1x48xf32>
    %494 = arith.index_cast %491 : i32 to index
    %c48_155 = arith.constant 48 : index
    %495 = vector.load %arg9[%494, %c48_155] : memref<8x96xf32, #tpu.memory_space<vmem>>, vector<1x48xf32>
    %c0_156 = arith.constant 0 : index
    %c0_157 = arith.constant 0 : index
    %496 = vector.load %arg3[%c0_156, %c0_157] : memref<16x48xf32, #tpu.memory_space<vmem>>, vector<16x48xf32>
    %cst_158 = arith.constant dense<0.000000e+00> : vector<1x48xf32>
    %497 = tpu.matmul %460, %496, %cst_158 {dimension_numbers = #tpu.dot_dimension_numbers<[1], [0], [0], [1], [0, 0, 1, 1], [], []>} : vector<1x16xf32>, vector<16x48xf32>, vector<1x48xf32> -> vector<1x48xf32>
    %c0_159 = arith.constant 0 : index
    %c0_160 = arith.constant 0 : index
    %498 = vector.load %arg6[%c0_159, %c0_160] : memref<1x48xf32, #tpu.memory_space<vmem>>, vector<1x48xf32>
    %499 = arith.addf %497, %498 : vector<1x48xf32>
    %c0_161 = arith.constant 0 : index
    %c0_162 = arith.constant 0 : index
    %500 = vector.load %arg4[%c0_161, %c0_162] : memref<16x48xf32, #tpu.memory_space<vmem>>, vector<16x48xf32>
    %cst_163 = arith.constant dense<0.000000e+00> : vector<1x48xf32>
    %501 = tpu.matmul %486, %500, %cst_163 {dimension_numbers = #tpu.dot_dimension_numbers<[1], [0], [0], [1], [0, 0, 1, 1], [], []>} : vector<1x16xf32>, vector<16x48xf32>, vector<1x48xf32> -> vector<1x48xf32>
    %c0_164 = arith.constant 0 : index
    %c0_165 = arith.constant 0 : index
    %502 = vector.load %arg7[%c0_164, %c0_165] : memref<1x48xf32, #tpu.memory_space<vmem>>, vector<1x48xf32>
    %503 = arith.addf %501, %502 : vector<1x48xf32>
    %504 = vector.extract_strided_slice %493 {offsets = [0, 0], sizes = [1, 16], strides = [1, 1]} : vector<1x48xf32> to vector<1x16xf32>
    %505 = vector.extract_strided_slice %499 {offsets = [0, 0], sizes = [1, 16], strides = [1, 1]} : vector<1x48xf32> to vector<1x16xf32>
    %506 = arith.addf %504, %505 : vector<1x16xf32>
    %507 = arith.negf %506 : vector<1x16xf32>
    %508 = math.exp %507 : vector<1x16xf32>
    %cst_166 = arith.constant 1.000000e+00 : f32
    %509 = vector.broadcast %cst_166 : f32 to vector<1x16xf32>
    %510 = arith.addf %509, %508 : vector<1x16xf32>
    %511 = arith.divf %509, %510 : vector<1x16xf32>
    %512 = vector.extract_strided_slice %493 {offsets = [0, 16], sizes = [1, 16], strides = [1, 1]} : vector<1x48xf32> to vector<1x16xf32>
    %513 = vector.extract_strided_slice %499 {offsets = [0, 16], sizes = [1, 16], strides = [1, 1]} : vector<1x48xf32> to vector<1x16xf32>
    %514 = arith.addf %512, %513 : vector<1x16xf32>
    %515 = arith.negf %514 : vector<1x16xf32>
    %516 = math.exp %515 : vector<1x16xf32>
    %cst_167 = arith.constant 1.000000e+00 : f32
    %517 = vector.broadcast %cst_167 : f32 to vector<1x16xf32>
    %518 = arith.addf %517, %516 : vector<1x16xf32>
    %519 = arith.divf %517, %518 : vector<1x16xf32>
    %520 = vector.extract_strided_slice %493 {offsets = [0, 32], sizes = [1, 16], strides = [1, 1]} : vector<1x48xf32> to vector<1x16xf32>
    %521 = vector.extract_strided_slice %499 {offsets = [0, 32], sizes = [1, 16], strides = [1, 1]} : vector<1x48xf32> to vector<1x16xf32>
    %522 = arith.mulf %511, %521 : vector<1x16xf32>
    %523 = arith.addf %520, %522 : vector<1x16xf32>
    %524 = math.tanh %523 : vector<1x16xf32>
    %cst_168 = arith.constant 1.000000e+00 : f32
    %525 = vector.broadcast %cst_168 : f32 to vector<1x16xf32>
    %526 = arith.subf %525, %519 : vector<1x16xf32>
    %527 = arith.mulf %526, %524 : vector<1x16xf32>
    %528 = arith.mulf %519, %460 : vector<1x16xf32>
    %529 = arith.addf %527, %528 : vector<1x16xf32>
    %530 = vector.extract_strided_slice %495 {offsets = [0, 0], sizes = [1, 16], strides = [1, 1]} : vector<1x48xf32> to vector<1x16xf32>
    %531 = vector.extract_strided_slice %503 {offsets = [0, 0], sizes = [1, 16], strides = [1, 1]} : vector<1x48xf32> to vector<1x16xf32>
    %532 = arith.addf %530, %531 : vector<1x16xf32>
    %533 = arith.negf %532 : vector<1x16xf32>
    %534 = math.exp %533 : vector<1x16xf32>
    %cst_169 = arith.constant 1.000000e+00 : f32
    %535 = vector.broadcast %cst_169 : f32 to vector<1x16xf32>
    %536 = arith.addf %535, %534 : vector<1x16xf32>
    %537 = arith.divf %535, %536 : vector<1x16xf32>
    %538 = vector.extract_strided_slice %495 {offsets = [0, 16], sizes = [1, 16], strides = [1, 1]} : vector<1x48xf32> to vector<1x16xf32>
    %539 = vector.extract_strided_slice %503 {offsets = [0, 16], sizes = [1, 16], strides = [1, 1]} : vector<1x48xf32> to vector<1x16xf32>
    %540 = arith.addf %538, %539 : vector<1x16xf32>
    %541 = arith.negf %540 : vector<1x16xf32>
    %542 = math.exp %541 : vector<1x16xf32>
    %cst_170 = arith.constant 1.000000e+00 : f32
    %543 = vector.broadcast %cst_170 : f32 to vector<1x16xf32>
    %544 = arith.addf %543, %542 : vector<1x16xf32>
    %545 = arith.divf %543, %544 : vector<1x16xf32>
    %546 = vector.extract_strided_slice %495 {offsets = [0, 32], sizes = [1, 16], strides = [1, 1]} : vector<1x48xf32> to vector<1x16xf32>
    %547 = vector.extract_strided_slice %503 {offsets = [0, 32], sizes = [1, 16], strides = [1, 1]} : vector<1x48xf32> to vector<1x16xf32>
    %548 = arith.mulf %537, %547 : vector<1x16xf32>
    %549 = arith.addf %546, %548 : vector<1x16xf32>
    %550 = math.tanh %549 : vector<1x16xf32>
    %cst_171 = arith.constant 1.000000e+00 : f32
    %551 = vector.broadcast %cst_171 : f32 to vector<1x16xf32>
    %552 = arith.subf %551, %545 : vector<1x16xf32>
    %553 = arith.mulf %552, %550 : vector<1x16xf32>
    %554 = arith.mulf %545, %486 : vector<1x16xf32>
    %555 = arith.addf %553, %554 : vector<1x16xf32>
    %556 = arith.index_cast %c7_i32_152 : i32 to index
    %c0_172 = arith.constant 0 : index
    %557 = vector.load %arg8[%556, %c0_172] : memref<8x32xf32, #tpu.memory_space<vmem>>, vector<1x16xf32>
    tpu.vector_store %arg8[%556, %c0_172], %529 {strides = array<i32>} : memref<8x32xf32, #tpu.memory_space<vmem>>, vector<1x16xf32>,
    %558 = arith.index_cast %491 : i32 to index
    %c16_173 = arith.constant 16 : index
    %559 = vector.load %arg8[%558, %c16_173] : memref<8x32xf32, #tpu.memory_space<vmem>>, vector<1x16xf32>
    tpu.vector_store %arg8[%558, %c16_173], %555 {strides = array<i32>} : memref<8x32xf32, #tpu.memory_space<vmem>>, vector<1x16xf32>,
    %c8_i32 = arith.constant 8 : i32
    return
  }
  func.func @transform_0(%arg0: i32) -> (i32, i32) {
    %c0_i32 = arith.constant 0 : i32
    %c0_i32_0 = arith.constant 0 : i32
    %c0_i32_1 = arith.constant 0 : i32
    return %c0_i32, %c0_i32_0 : i32, i32
  }
  func.func @transform_1(%arg0: i32) -> (i32, i32) {
    %c0_i32 = arith.constant 0 : i32
    %c0_i32_0 = arith.constant 0 : i32
    %c0_i32_1 = arith.constant 0 : i32
    return %c0_i32, %c0_i32_0 : i32, i32
  }
  func.func @transform_2(%arg0: i32) -> (i32, i32) {
    %c0_i32 = arith.constant 0 : i32
    %c0_i32_0 = arith.constant 0 : i32
    %c0_i32_1 = arith.constant 0 : i32
    return %c0_i32, %c0_i32_0 : i32, i32
  }
  func.func @transform_3(%arg0: i32) -> (i32, i32) {
    %c0_i32 = arith.constant 0 : i32
    %c0_i32_0 = arith.constant 0 : i32
    %c0_i32_1 = arith.constant 0 : i32
    return %c0_i32, %c0_i32_0 : i32, i32
  }
  func.func @transform_4(%arg0: i32) -> (i32, i32) {
    %c0_i32 = arith.constant 0 : i32
    %c0_i32_0 = arith.constant 0 : i32
    %c0_i32_1 = arith.constant 0 : i32
    return %c0_i32, %c0_i32_0 : i32, i32
  }
  func.func @transform_5(%arg0: i32) -> (i32, i32) {
    %c0_i32 = arith.constant 0 : i32
    %c0_i32_0 = arith.constant 0 : i32
    %c0_i32_1 = arith.constant 0 : i32
    return %c0_i32, %c0_i32_0 : i32, i32
  }
  func.func @transform_6(%arg0: i32) -> (i32, i32) {
    %c0_i32 = arith.constant 0 : i32
    %c0_i32_0 = arith.constant 0 : i32
    %c0_i32_1 = arith.constant 0 : i32
    return %c0_i32, %c0_i32_0 : i32, i32
  }
  func.func @transform_7(%arg0: i32) -> (i32, i32) {
    %c0_i32 = arith.constant 0 : i32
    %c0_i32_0 = arith.constant 0 : i32
    %c0_i32_1 = arith.constant 0 : i32
    return %c0_i32, %c0_i32_0 : i32, i32
  }
}

</mosaic_0001>

<llo_original>
// kernel: train_segment_loss.3
$region0: #{train_segment_loss.3}
  #allocation0 [shape = 'u32[]', space=smem, size = 0x4, offset = 0x4, fixed_abs, tag = 'smem constant byte address 0x4 - core index']
  #allocation1 [shape = 'u32[144,128]{1,0:T(1,128)}', space=vmem, size = 0x12000, scoped, tag = 'internal scratch']
  #allocation2 [shape = 'f32[3,32]{1,0:T(4,128)}', space=vmem, size = 0x800, scoped, tag = 'scratch operand']
  #allocation3 [shape = 'f32[3,96]{1,0:T(4,128)}', space=vmem, size = 0x800, scoped, tag = 'scratch operand']
  #allocation4 [shape = 's32[1]{0}', space=sflag, size = 0x4, scoped, tag = 'scoped memory for train_segment_loss.3']
  #allocation5 [shape = 'u8[512]{0}', space=smem, size = 0x200, scoped, tag = 'prefetched SMEM operand 0']
  #allocation6 [shape = 'u8[512]{0}', space=smem, size = 0x200, scoped, tag = 'prefetched SMEM operand 1']
  %s0 = inlined_call_operand.vmem [shape: s32[3], index: 0, kind: input, shape index: {}]
  %s1 = inlined_call_operand.vmem [shape: s32[3], index: 1, kind: input, shape index: {}]
  %s2 = inlined_call_operand.vmem [shape: f32[8,32], index: 2, kind: input, shape index: {}]
  %s3 = inlined_call_operand.vmem [shape: f32[32,96], index: 3, kind: input, shape index: {}]
  %s4 = inlined_call_operand.vmem [shape: f32[32,96], index: 4, kind: input, shape index: {}]
  %s5 = inlined_call_operand.hbm [shape: f32[1,96], index: 5, kind: input, shape index: {}]
  %s6 = inlined_call_operand.hbm [shape: f32[1,96], index: 6, kind: input, shape index: {}]
  %s7 = inlined_call_operand.vmem [shape: f32[32,32], index: 7, kind: input, shape index: {}]
  %s8 = inlined_call_operand.hbm [shape: f32[1,32], index: 8, kind: input, shape index: {}]
  %s9 = inlined_call_operand.hbm [shape: f32[1,1], index: 9, kind: output, shape index: {}]
  %s10 = sld [smem:[#allocation0]]
  $region50: #{train_segment_loss.3} parent=0
    _
  %s12 = ssub.s32 1, %s10
  %s13 = scalar_select 0, %s12, %s10
  %s14 = sshll.u32 %s0, 4
  %s15 = int_to_ptr.vmem [resolvable:$true] %s14
  %17 = dma.vmem_to_smem %s15, 16, [#allocation5], [#allocation4]
  %s18 = sshll.u32 %s1, 4
  %s19 = int_to_ptr.vmem [resolvable:$true] %s18
  %21 = dma.vmem_to_smem %s19, 16, [#allocation6], [#allocation4]
  %22 = dma.done [#allocation4], 32
  %23 = sfence
  $region1: #{train_segment_loss.3} parent=0
    #allocation7 [shape = 'u8[512]{0}', space=vmem, size = 0x400, scoped, tag = 'input window, operand 5, single buffered']
    #allocation8 [shape = 's32[1]{0}', space=sflag, size = 0x4, scoped, tag = 'scoped memory for train_segment_loss.3']
    #allocation9 [shape = 's32[1]{0}', space=sflag, size = 0x4, scoped, tag = 'scoped memory for train_segment_loss.3']
    #allocation10 [shape = 'u8[512]{0}', space=vmem, size = 0x400, scoped, tag = 'input window, operand 6, single buffered']
    #allocation11 [shape = 's32[1]{0}', space=sflag, size = 0x4, scoped, tag = 'scoped memory for train_segment_loss.3']
    #allocation12 [shape = 'u8[512]{0}', space=vmem, size = 0x400, scoped, tag = 'input window, operand 8, single buffered']
    #allocation13 [shape = 'u8[512]{0}', space=vmem, size = 0x400, scoped, tag = 'output window, operand 0, single buffered']
    %24 = vsyncpa [#allocation8], 0
    %25 = vsyncpa [#allocation11], 0
    %26 = vsyncpa [#allocation9], 0
    // Predicated region
    $region2: #{train_segment_loss.3} parent=1 // pred_check
      _
    $region3: #{train_segment_loss.3} parent=1 // pred_check_branch
      %28 = sbr.rel (0) target = $region5
    $region4: #{train_segment_loss.3} parent=1 // pred_region
      _
    $region5: #{train_segment_loss.3} parent=1 // pred_fallthru
      _
    // Predicated region
    $region6: #{train_segment_loss.3} parent=1 // pred_check
      _
    $region7: #{train_segment_loss.3} parent=1 // pred_check_branch
      %30 = sbr.rel (0) target = $region9
    $region8: #{train_segment_loss.3} parent=1 // pred_region
      _
    $region9: #{train_segment_loss.3} parent=1 // pred_fallthru
      _
    // Predicated region
    $region10: #{train_segment_loss.3} parent=1 // pred_check
      _
    $region11: #{train_segment_loss.3} parent=1 // pred_check_branch
      %32 = sbr.rel (0) target = $region13
    $region12: #{train_segment_loss.3} parent=1 // pred_region
      _
    $region13: #{train_segment_loss.3} parent=1 // pred_fallthru
      _
    // Predicated region
    $region14: #{train_segment_loss.3} parent=1 // pred_check
      _
    $region15: #{train_segment_loss.3} parent=1 // pred_check_branch
      %34 = sbr.rel (0) target = $region17
    $region16: #{train_segment_loss.3} parent=1 // pred_region
      %s36 = ssub.s32 16, 16
      %37 = vsyncadd [#allocation8], %s36
      %s39 = sshll.u32 [#allocation7], 4
      %s40 = int_to_ptr.vmem [resolvable:$true] %s39
      %42 = dma.hbm_to_vmem [thread:$0]  %s5, 16, %s40, [#allocation8]
    $region17: #{train_segment_loss.3} parent=1 // pred_fallthru
      _
    // Predicated region
    $region18: #{train_segment_loss.3} parent=1 // pred_check
      _
    $region19: #{train_segment_loss.3} parent=1 // pred_check_branch
      %44 = sbr.rel (0) target = $region21
    $region20: #{train_segment_loss.3} parent=1 // pred_region
      %s46 = ssub.s32 16, 16
      %47 = vsyncadd [#allocation11], %s46
      %s49 = sshll.u32 [#allocation10], 4
      %s50 = int_to_ptr.vmem [resolvable:$true] %s49
      %52 = dma.hbm_to_vmem [thread:$0]  %s6, 16, %s50, [#allocation11]
    $region21: #{train_segment_loss.3} parent=1 // pred_fallthru
      _
    // Predicated region
    $region22: #{train_segment_loss.3} parent=1 // pred_check
      _
    $region23: #{train_segment_loss.3} parent=1 // pred_check_branch
      %54 = sbr.rel (0) target = $region25
    $region24: #{train_segment_loss.3} parent=1 // pred_region
      _
    $region25: #{train_segment_loss.3} parent=1 // pred_fallthru
      _
    // Predicated region
    $region26: #{train_segment_loss.3} parent=1 // pred_check
      _
    $region27: #{train_segment_loss.3} parent=1 // pred_check_branch
      %56 = sbr.rel (0) target = $region29
    $region28: #{train_segment_loss.3} parent=1 // pred_region
      %s58 = ssub.s32 16, 16
      %59 = vsyncadd [#allocation11], %s58
      %s61 = sshll.u32 [#allocation12], 4
      %s62 = int_to_ptr.vmem [resolvable:$true] %s61
      %64 = dma.hbm_to_vmem [thread:$0]  %s8, 16, %s62, [#allocation11]
    $region29: #{train_segment_loss.3} parent=1 // pred_fallthru
      _
    // Predicated region
    $region30: #{train_segment_loss.3} parent=1 // pred_check
      _
    $region31: #{train_segment_loss.3} parent=1 // pred_check_branch
      %66 = sbr.rel (0) target = $region33
    $region32: #{train_segment_loss.3} parent=1 // pred_region
      %67 = dma.done [#allocation8], 16
    $region33: #{train_segment_loss.3} parent=1 // pred_fallthru
      _
    // Predicated region
    $region34: #{train_segment_loss.3} parent=1 // pred_check
      _
    $region35: #{train_segment_loss.3} parent=1 // pred_check_branch
      %69 = sbr.rel (0) target = $region37
    $region36: #{train_segment_loss.3} parent=1 // pred_region
      %70 = dma.done [#allocation11], 16
    $region37: #{train_segment_loss.3} parent=1 // pred_fallthru
      _
    // Predicated region
    $region38: #{train_segment_loss.3} parent=1 // pred_check
      _
    $region39: #{train_segment_loss.3} parent=1 // pred_check_branch
      %72 = sbr.rel (0) target = $region41
    $region40: #{train_segment_loss.3} parent=1 // pred_region
      %73 = dma.done [#allocation11], 16
    $region41: #{train_segment_loss.3} parent=1 // pred_fallthru
      _
    %v74 = vlaneseq
    %v75 = vand.u32 %v74, 127
    %v76 = vld [vmem:[%s2] sm:$0xff]
    %s77 = sld [smem:[#allocation5]]
    %s78 = scalar_lea.vmem %s2, %s77
    %v79 = vld [vmem:[%s78] sm:$0x1]
    %vm80 = vcmask 253952
    %81 = vst.msk [vmem:[#allocation2] sm:$0x1] %vm80, %v79
    %s82 = sld [smem:[#allocation5 + $0x1]]
    %s83 = scalar_lea.vmem %s2, %s82
    %v84 = vld [vmem:[%s83] sm:$0x1]
    %85 = vst.msk [vmem:[#allocation2 + $0x1] sm:$0x1] %vm80, %v84
    %s86 = sld [smem:[#allocation5 + $0x2]]
    %s87 = scalar_lea.vmem %s2, %s86
    %v88 = vld [vmem:[%s87] sm:$0x1]
    %89 = vst.msk [vmem:[#allocation2 + $0x2] sm:$0x1] %vm80, %v88
    %v90 = vld [vmem:[#allocation2] sm:$0x7]
    %v91 = vld [vmem:[%s3] sm:$0xff]
    %v92 = vld [vmem:[%s3 + $0x8] sm:$0xff]
    %v93 = vld [vmem:[%s3 + $0x10] sm:$0xff]
    %v94 = vld [vmem:[%s3 + $0x18] sm:$0xff]
    %v95 = vld [vmem:[#allocation7] sm:$0x1]
    %v97 = vlaneseq
    %v98 = vshrl.u32 %v97, 7
    %v99 = vsub.s32 0, %v98
    %v100 = vrot.slane %v95, %v99
    %vm102 = vcmask 261120
    %v104 = vsel %vm102, %v90, 0
    %106 = vmatprep.subr.mxu0 0.0
    %107 = vmatpush1.msra.mxu0 0.0
    %108 = vmatprep.subr.mxu0 0.0
    %109 = vmatpush1.msra.mxu0 0.0
    %110 = vmatprep.subr.mxu0 0.0
    %111 = vmatpush1.msra.mxu0 0.0
    %112 = vmatprep.subr.mxu0 0.0
    %113 = vmatpush1.msra.mxu0 0.0
    %114 = vmatprep.subr.mxu0 0.0
    %115 = vmatpush1.msra.mxu0 0.0
    %116 = vmatprep.subr.mxu0 0.0
    %117 = vmatpush1.msra.mxu0 0.0
    %118 = vmatprep.subr.mxu0 0.0
    %119 = vmatpush1.msra.mxu0 0.0
    %120 = vmatprep.subr.mxu0 0.0
    %121 = vmatpush1.msra.mxu0 0.0
    %122 = vmatprep.subr.mxu0 0.0
    %123 = vmatpush1.msra.mxu0 0.0
    %124 = vmatprep.subr.mxu0 0.0
    %125 = vmatpush1.msra.mxu0 0.0
    %126 = vmatprep.subr.mxu0 0.0
    %127 = vmatpush1.msra.mxu0 0.0
    %128 = vmatprep.subr.mxu0 0.0
    %129 = vmatpush1.msra.mxu0 0.0
    %130 = vmatprep.subr.mxu0 0.0
    %131 = vmatpush1.msra.mxu0 %v94
    %132 = vmatprep.subr.mxu0 0.0
    %133 = vmatpush1.msra.mxu0 %v93
    %134 = vmatprep.subr.mxu0 0.0
    %135 = vmatpush1.msra.mxu0 %v92
    %136 = vmatprep.subr.mxu0 0.0
    %137 = vmatpush1.msra.mxu0 %v91
    %138 = vmatprep.subr.mxu0 0.0
    %139 = vmatpush2.msra.mxu0 0.0
    %140 = vmatprep.subr.mxu0 0.0
    %141 = vmatpush2.msra.mxu0 0.0
    %142 = vmatprep.subr.mxu0 0.0
    %143 = vmatpush2.msra.mxu0 0.0
    %144 = vmatprep.subr.mxu0 0.0
    %145 = vmatpush2.msra.mxu0 0.0
    %146 = vmatprep.subr.mxu0 0.0
    %147 = vmatpush2.msra.mxu0 0.0
    %148 = vmatprep.subr.mxu0 0.0
    %149 = vmatpush2.msra.mxu0 0.0
    %150 = vmatprep.subr.mxu0 0.0
    %151 = vmatpush2.msra.mxu0 0.0
    %152 = vmatprep.subr.mxu0 0.0
    %153 = vmatpush2.msra.mxu0 0.0
    %154 = vmatprep.subr.mxu0 0.0
    %155 = vmatpush2.msra.mxu0 0.0
    %156 = vmatprep.subr.mxu0 0.0
    %157 = vmatpush2.msra.mxu0 0.0
    %158 = vmatprep.subr.mxu0 0.0
    %159 = vmatpush2.msra.mxu0 0.0
    %160 = vmatprep.subr.mxu0 0.0
    %161 = vmatpush2.msra.mxu0 0.0
    %162 = vmatprep.subr.mxu0 0.0
    %163 = vmatpush2.msra.mxu0 0.0
    %164 = vmatprep.subr.mxu0 0.0
    %165 = vmatpush2.msra.mxu0 0.0
    %166 = vmatprep.subr.mxu0 0.0
    %167 = vmatpush2.msra.mxu0 0.0
    %168 = vmatprep.subr.mxu0 0.0
    %169 = vmatpush2.msra.mxu0 0.0
    %170 = vmatprep.mubr.f32.mxu0 0.0
    %171 = vmatmul.mubr.f32.gmra.mxu0 %v104
    %v172 = vpop.f32.mrf.mxu0
    %v173 = vadd.f32 %v100, %v172
    %v174 = vpop.f32.mrf.mxu0
    %175 = vdwg.mxu0
    %vm176 = vcmask 780288
    %177 = vst.msk [vmem:[#allocation3] sm:$0x7] %vm176, %v173
    %v178 = vld [vmem:[%s2 + $0x7] sm:$0x1]
    %s179 = sld [smem:[#allocation5]]
    %s180 = sld [smem:[#allocation6]]
    %v181 = vld [vmem:[#allocation3] sm:$0x1]
    %v182 = vld [vmem:[%s4] sm:$0xff]
    %v183 = vld [vmem:[%s4 + $0x8] sm:$0xff]
    %v184 = vld [vmem:[%s4 + $0x10] sm:$0xff]
    %v185 = vld [vmem:[%s4 + $0x18] sm:$0xff]
    %v186 = vld [vmem:[#allocation10] sm:$0x1]
    %v188 = vsel %vm102, %v178, 0
    %190 = vmatprep.subr.mxu0 0.0
    %191 = vmatpush1.msra.mxu0 0.0
    %192 = vmatprep.subr.mxu0 0.0
    %193 = vmatpush1.msra.mxu0 0.0
    %194 = vmatprep.subr.mxu0 0.0
    %195 = vmatpush1.msra.mxu0 0.0
    %196 = vmatprep.subr.mxu0 0.0
    %197 = vmatpush1.msra.mxu0 0.0
    %198 = vmatprep.subr.mxu0 0.0
    %199 = vmatpush1.msra.mxu0 0.0
    %200 = vmatprep.subr.mxu0 0.0
    %201 = vmatpush1.msra.mxu0 0.0
    %202 = vmatprep.subr.mxu0 0.0
    %203 = vmatpush1.msra.mxu0 0.0
    %204 = vmatprep.subr.mxu0 0.0
    %205 = vmatpush1.msra.mxu0 0.0
    %206 = vmatprep.subr.mxu0 0.0
    %207 = vmatpush1.msra.mxu0 0.0
    %208 = vmatprep.subr.mxu0 0.0
    %209 = vmatpush1.msra.mxu0 0.0
    %210 = vmatprep.subr.mxu0 0.0
    %211 = vmatpush1.msra.mxu0 0.0
    %212 = vmatprep.subr.mxu0 0.0
    %213 = vmatpush1.msra.mxu0 0.0
    %214 = vmatprep.subr.mxu0 0.0
    %215 = vmatpush1.msra.mxu0 %v185
    %216 = vmatprep.subr.mxu0 0.0
    %217 = vmatpush1.msra.mxu0 %v184
    %218 = vmatprep.subr.mxu0 0.0
    %219 = vmatpush1.msra.mxu0 %v183
    %220 = vmatprep.subr.mxu0 0.0
    %221 = vmatpush1.msra.mxu0 %v182
    %222 = vmatprep.subr.mxu0 0.0
    %223 = vmatpush2.msra.mxu0 0.0
    %224 = vmatprep.subr.mxu0 0.0
    %225 = vmatpush2.msra.mxu0 0.0
    %226 = vmatprep.subr.mxu0 0.0
    %227 = vmatpush2.msra.mxu0 0.0
    %228 = vmatprep.subr.mxu0 0.0
    %229 = vmatpush2.msra.mxu0 0.0
    %230 = vmatprep.subr.mxu0 0.0
    %231 = vmatpush2.msra.mxu0 0.0
    %232 = vmatprep.subr.mxu0 0.0
    %233 = vmatpush2.msra.mxu0 0.0
    %234 = vmatprep.subr.mxu0 0.0
    %235 = vmatpush2.msra.mxu0 0.0
    %236 = vmatprep.subr.mxu0 0.0
    %237 = vmatpush2.msra.mxu0 0.0
    %238 = vmatprep.subr.mxu0 0.0
    %239 = vmatpush2.msra.mxu0 0.0
    %240 = vmatprep.subr.mxu0 0.0
    %241 = vmatpush2.msra.mxu0 0.0
    %242 = vmatprep.subr.mxu0 0.0
    %243 = vmatpush2.msra.mxu0 0.0
    %244 = vmatprep.subr.mxu0 0.0
    %245 = vmatpush2.msra.mxu0 0.0
    %246 = vmatprep.subr.mxu0 0.0
    %247 = vmatpush2.msra.mxu0 0.0
    %248 = vmatprep.subr.mxu0 0.0
    %249 = vmatpush2.msra.mxu0 0.0
    %250 = vmatprep.subr.mxu0 0.0
    %251 = vmatpush2.msra.mxu0 0.0
    %252 = vmatprep.subr.mxu0 0.0
    %253 = vmatpush2.msra.mxu0 0.0
    %254 = vmatprep.mubr.f32.mxu0 0.0
    %255 = vmatmul.mubr.f32.gmra.mxu0 %v188
    %v256 = vpop.f32.mrf.mxu0
    %v257 = vadd.f32 %v186, %v256
    %v258 = vpop.f32.mrf.mxu0
    %259 = vdwg.mxu0
    %v260 = vadd.f32 %v181, %v257
    %v261 = vxor.u32 %v260, 2147483648
    %v262 = vmul.f32 %v261, 1.442695
    %v263 = vpow.pop %v262
    %v264 = vadd.f32 %v263, 1.0
    %v265 = vrcp.pop %v264
    %v266 = vmul.f32 1.0, %v265
    %268 = vrot.lane.b32.xlu0 %v257, 64
    %v269 = vpop.permute.xlu0 %268
    %v271 = vmul.f32 %v266, %v269
    %273 = vrot.lane.b32.xlu0 %v271, 64
    %v274 = vpop.permute.xlu0 %273
    %v276 = vadd.f32 %v181, %v274
    %v277 = vtanh.pop %v276
    %v278 = vsub.f32 1.0, %v266
    %280 = vrot.lane.b32.xlu0 %v277, 96
    %v281 = vpop.permute.xlu0 %280
    %v283 = vmul.f32 %v278, %v281
    %284 = vrot.lane.b32.xlu0 %v178, 32
    %v285 = vpop.permute.xlu0 %284
    %v287 = vmul.f32 %v266, %v285
    %v288 = vadd.f32 %v283, %v287
    %290 = vrot.lane.b32.xlu0 %v288, 96
    %v291 = vpop.permute.xlu0 %290
    %v292 = vsel %vm102, %v291, 0
    %v295 = vsel %vm102, %v76, 0
    %297 = vmatprep.subr.mxu0 0.0
    %298 = vmatpush1.xpose.msra.mxu0 0.0
    %299 = vmatprep.subr.mxu0 0.0
    %300 = vmatpush1.xpose.msra.mxu0 0.0
    %301 = vmatprep.subr.mxu0 0.0
    %302 = vmatpush1.xpose.msra.mxu0 0.0
    %303 = vmatprep.subr.mxu0 0.0
    %304 = vmatpush1.xpose.msra.mxu0 0.0
    %305 = vmatprep.subr.mxu0 0.0
    %306 = vmatpush1.xpose.msra.mxu0 0.0
    %307 = vmatprep.subr.mxu0 0.0
    %308 = vmatpush1.xpose.msra.mxu0 0.0
    %309 = vmatprep.subr.mxu0 0.0
    %310 = vmatpush1.xpose.msra.mxu0 0.0
    %311 = vmatprep.subr.mxu0 0.0
    %312 = vmatpush1.xpose.msra.mxu0 0.0
    %313 = vmatprep.subr.mxu0 0.0
    %314 = vmatpush1.xpose.msra.mxu0 0.0
    %315 = vmatprep.subr.mxu0 0.0
    %316 = vmatpush1.xpose.msra.mxu0 0.0
    %317 = vmatprep.subr.mxu0 0.0
    %318 = vmatpush1.xpose.msra.mxu0 0.0
    %319 = vmatprep.subr.mxu0 0.0
    %320 = vmatpush1.xpose.msra.mxu0 0.0
    %321 = vmatprep.subr.mxu0 0.0
    %322 = vmatpush1.xpose.msra.mxu0 0.0
    %323 = vmatprep.subr.mxu0 0.0
    %324 = vmatpush1.xpose.msra.mxu0 0.0
    %325 = vmatprep.subr.mxu0 0.0
    %326 = vmatpush1.xpose.msra.mxu0 0.0
    %327 = vmatprep.subr.mxu0 0.0
    %328 = vmatpush1.xpose.msra.mxu0 %v295
    %329 = vmatprep.subr.mxu0 0.0
    %330 = vmatpush2.xpose.msra.mxu0 0.0
    %331 = vmatprep.subr.mxu0 0.0
    %332 = vmatpush2.xpose.msra.mxu0 0.0
    %333 = vmatprep.subr.mxu0 0.0
    %334 = vmatpush2.xpose.msra.mxu0 0.0
    %335 = vmatprep.subr.mxu0 0.0
    %336 = vmatpush2.xpose.msra.mxu0 0.0
    %337 = vmatprep.subr.mxu0 0.0
    %338 = vmatpush2.xpose.msra.mxu0 0.0
    %339 = vmatprep.subr.mxu0 0.0
    %340 = vmatpush2.xpose.msra.mxu0 0.0
    %341 = vmatprep.subr.mxu0 0.0
    %342 = vmatpush2.xpose.msra.mxu0 0.0
    %343 = vmatprep.subr.mxu0 0.0
    %344 = vmatpush2.xpose.msra.mxu0 0.0
    %345 = vmatprep.subr.mxu0 0.0
    %346 = vmatpush2.xpose.msra.mxu0 0.0
    %347 = vmatprep.subr.mxu0 0.0
    %348 = vmatpush2.xpose.msra.mxu0 0.0
    %349 = vmatprep.subr.mxu0 0.0
    %350 = vmatpush2.xpose.msra.mxu0 0.0
    %351 = vmatprep.subr.mxu0 0.0
    %352 = vmatpush2.xpose.msra.mxu0 0.0
    %353 = vmatprep.subr.mxu0 0.0
    %354 = vmatpush2.xpose.msra.mxu0 0.0
    %355 = vmatprep.subr.mxu0 0.0
    %356 = vmatpush2.xpose.msra.mxu0 0.0
    %357 = vmatprep.subr.mxu0 0.0
    %358 = vmatpush2.xpose.msra.mxu0 0.0
    %359 = vmatprep.subr.mxu0 0.0
    %360 = vmatpush2.xpose.msra.mxu0 0.0
    %361 = vmatprep.mubr.f32.mxu0 0.0
    %362 = vmatmul.mubr.f32.gmra.mxu0 %v292
    %v363 = vpop.f32.mrf.mxu0
    %v364 = vadd.f32 0.0, %v363
    %v365 = vpop.f32.mrf.mxu0
    %366 = vdwg.mxu0
    %v367 = vstv %s179
    %vm368 = vcmp.ge.s32.totalorder %v75, %v367
    %v369 = vsel %vm368, %v364, -1e+30
    %vm370 = vcmask 57344
    %v371 = vsel %vm370, %v369, -inf
    %372 = vmax.xlane.f32.xlu0 %v371
    %v373 = vpop.xlane.xlu0 %372
    %v374 = vsub.f32 %v369, %v373
    %v375 = vmul.f32 %v374, 1.442695
    %v376 = vpow.pop %v375
    %v377 = vsel %vm370, %v376, 0.0
    %378 = vadd.xlane.f32.xlu0 %v377
    %v379 = vpop.xlane.xlu0 %378
    %v380 = vlog2.pop %v379
    %v381 = vmul.f32 %v380, 0.6931472
    %v382 = vsub.f32 %v374, %v381
    %v383 = vstv %s180
    %vm384 = vcmp.eq.s32.totalorder %v75, %v383
    %v385 = vsel %vm384, %v382, 0.0
    %v386 = vsel %vm370, %v385, 0.0
    %387 = vadd.xlane.f32.xlu0 %v386
    %v388 = vpop.xlane.xlu0 %387
    %v389 = vrot.slane %v388, 4
    %v390 = vadd.f32 %v388, %v389
    %v391 = vrot.slane %v390, 2
    %v392 = vadd.f32 %v390, %v391
    %v393 = vrot.slane %v392, 1
    %v394 = vadd.f32 %v392, %v393
    %s395 = vtos %v394
    %v396 = vstv %s395
    %v397 = vsub.f32 0.0, %v396
    %v398 = vadd.f32 %v397, 0.0
    %s399 = sld [smem:[#allocation5 + $0x1]]
    %s400 = sld [smem:[#allocation6 + $0x1]]
    %v401 = vld [vmem:[#allocation3 + $0x1] sm:$0x1]
    %402 = vmatprep.subr.mxu0 0.0
    %403 = vmatpush1.msra.mxu0 0.0
    %404 = vmatprep.subr.mxu0 0.0
    %405 = vmatpush1.msra.mxu0 0.0
    %406 = vmatprep.subr.mxu0 0.0
    %407 = vmatpush1.msra.mxu0 0.0
    %408 = vmatprep.subr.mxu0 0.0
    %409 = vmatpush1.msra.mxu0 0.0
    %410 = vmatprep.subr.mxu0 0.0
    %411 = vmatpush1.msra.mxu0 0.0
    %412 = vmatprep.subr.mxu0 0.0
    %413 = vmatpush1.msra.mxu0 0.0
    %414 = vmatprep.subr.mxu0 0.0
    %415 = vmatpush1.msra.mxu0 0.0
    %416 = vmatprep.subr.mxu0 0.0
    %417 = vmatpush1.msra.mxu0 0.0
    %418 = vmatprep.subr.mxu0 0.0
    %419 = vmatpush1.msra.mxu0 0.0
    %420 = vmatprep.subr.mxu0 0.0
    %421 = vmatpush1.msra.mxu0 0.0
    %422 = vmatprep.subr.mxu0 0.0
    %423 = vmatpush1.msra.mxu0 0.0
    %424 = vmatprep.subr.mxu0 0.0
    %425 = vmatpush1.msra.mxu0 0.0
    %426 = vmatprep.subr.mxu0 0.0
    %427 = vmatpush1.msra.mxu0 %v185
    %428 = vmatprep.subr.mxu0 0.0
    %429 = vmatpush1.msra.mxu0 %v184
    %430 = vmatprep.subr.mxu0 0.0
    %431 = vmatpush1.msra.mxu0 %v183
    %432 = vmatprep.subr.mxu0 0.0
    %433 = vmatpush1.msra.mxu0 %v182
    %434 = vmatprep.subr.mxu0 0.0
    %435 = vmatpush2.msra.mxu0 0.0
    %436 = vmatprep.subr.mxu0 0.0
    %437 = vmatpush2.msra.mxu0 0.0
    %438 = vmatprep.subr.mxu0 0.0
    %439 = vmatpush2.msra.mxu0 0.0
    %440 = vmatprep.subr.mxu0 0.0
    %441 = vmatpush2.msra.mxu0 0.0
    %442 = vmatprep.subr.mxu0 0.0
    %443 = vmatpush2.msra.mxu0 0.0
    %444 = vmatprep.subr.mxu0 0.0
    %445 = vmatpush2.msra.mxu0 0.0
    %446 = vmatprep.subr.mxu0 0.0
    %447 = vmatpush2.msra.mxu0 0.0
    %448 = vmatprep.subr.mxu0 0.0
    %449 = vmatpush2.msra.mxu0 0.0
    %450 = vmatprep.subr.mxu0 0.0
    %451 = vmatpush2.msra.mxu0 0.0
    %452 = vmatprep.subr.mxu0 0.0
    %453 = vmatpush2.msra.mxu0 0.0
    %454 = vmatprep.subr.mxu0 0.0
    %455 = vmatpush2.msra.mxu0 0.0
    %456 = vmatprep.subr.mxu0 0.0
    %457 = vmatpush2.msra.mxu0 0.0
    %458 = vmatprep.subr.mxu0 0.0
    %459 = vmatpush2.msra.mxu0 0.0
    %460 = vmatprep.subr.mxu0 0.0
    %461 = vmatpush2.msra.mxu0 0.0
    %462 = vmatprep.subr.mxu0 0.0
    %463 = vmatpush2.msra.mxu0 0.0
    %464 = vmatprep.subr.mxu0 0.0
    %465 = vmatpush2.msra.mxu0 0.0
    %466 = vmatprep.mubr.f32.mxu0 0.0
    %467 = vmatmul.mubr.f32.gmra.mxu0 %v292
    %v468 = vpop.f32.mrf.mxu0
    %v469 = vadd.f32 %v186, %v468
    %v470 = vpop.f32.mrf.mxu0
    %471 = vdwg.mxu0
    %v472 = vadd.f32 %v401, %v469
    %v473 = vxor.u32 %v472, 2147483648
    %v474 = vmul.f32 %v473, 1.442695
    %v475 = vpow.pop %v474
    %v476 = vadd.f32 %v475, 1.0
    %v477 = vrcp.pop %v476
    %v478 = vmul.f32 1.0, %v477
    %480 = vrot.lane.b32.xlu0 %v469, 64
    %v481 = vpop.permute.xlu0 %480
    %v483 = vmul.f32 %v478, %v481
    %485 = vrot.lane.b32.xlu0 %v483, 64
    %v486 = vpop.permute.xlu0 %485
    %v488 = vadd.f32 %v401, %v486
    %v489 = vtanh.pop %v488
    %v490 = vsub.f32 1.0, %v478
    %492 = vrot.lane.b32.xlu0 %v489, 96
    %v493 = vpop.permute.xlu0 %492
    %v495 = vmul.f32 %v490, %v493
    %v496 = vmul.f32 %v478, %v288
    %v497 = vadd.f32 %v495, %v496
    %499 = vrot.lane.b32.xlu0 %v497, 96
    %v500 = vpop.permute.xlu0 %499
    %v501 = vsel %vm102, %v500, 0
    %503 = vmatprep.subr.mxu0 0.0
    %504 = vmatpush1.xpose.msra.mxu0 0.0
    %505 = vmatprep.subr.mxu0 0.0
    %506 = vmatpush1.xpose.msra.mxu0 0.0
    %507 = vmatprep.subr.mxu0 0.0
    %508 = vmatpush1.xpose.msra.mxu0 0.0
    %509 = vmatprep.subr.mxu0 0.0
    %510 = vmatpush1.xpose.msra.mxu0 0.0
    %511 = vmatprep.subr.mxu0 0.0
    %512 = vmatpush1.xpose.msra.mxu0 0.0
    %513 = vmatprep.subr.mxu0 0.0
    %514 = vmatpush1.xpose.msra.mxu0 0.0
    %515 = vmatprep.subr.mxu0 0.0
    %516 = vmatpush1.xpose.msra.mxu0 0.0
    %517 = vmatprep.subr.mxu0 0.0
    %518 = vmatpush1.xpose.msra.mxu0 0.0
    %519 = vmatprep.subr.mxu0 0.0
    %520 = vmatpush1.xpose.msra.mxu0 0.0
    %521 = vmatprep.subr.mxu0 0.0
    %522 = vmatpush1.xpose.msra.mxu0 0.0
    %523 = vmatprep.subr.mxu0 0.0
    %524 = vmatpush1.xpose.msra.mxu0 0.0
    %525 = vmatprep.subr.mxu0 0.0
    %526 = vmatpush1.xpose.msra.mxu0 0.0
    %527 = vmatprep.subr.mxu0 0.0
    %528 = vmatpush1.xpose.msra.mxu0 0.0
    %529 = vmatprep.subr.mxu0 0.0
    %530 = vmatpush1.xpose.msra.mxu0 0.0
    %531 = vmatprep.subr.mxu0 0.0
    %532 = vmatpush1.xpose.msra.mxu0 0.0
    %533 = vmatprep.subr.mxu0 0.0
    %534 = vmatpush1.xpose.msra.mxu0 %v295
    %535 = vmatprep.subr.mxu0 0.0
    %536 = vmatpush2.xpose.msra.mxu0 0.0
    %537 = vmatprep.subr.mxu0 0.0
    %538 = vmatpush2.xpose.msra.mxu0 0.0
    %539 = vmatprep.subr.mxu0 0.0
    %540 = vmatpush2.xpose.msra.mxu0 0.0
    %541 = vmatprep.subr.mxu0 0.0
    %542 = vmatpush2.xpose.msra.mxu0 0.0
    %543 = vmatprep.subr.mxu0 0.0
    %544 = vmatpush2.xpose.msra.mxu0 0.0
    %545 = vmatprep.subr.mxu0 0.0
    %546 = vmatpush2.xpose.msra.mxu0 0.0
    %547 = vmatprep.subr.mxu0 0.0
    %548 = vmatpush2.xpose.msra.mxu0 0.0
    %549 = vmatprep.subr.mxu0 0.0
    %550 = vmatpush2.xpose.msra.mxu0 0.0
    %551 = vmatprep.subr.mxu0 0.0
    %552 = vmatpush2.xpose.msra.mxu0 0.0
    %553 = vmatprep.subr.mxu0 0.0
    %554 = vmatpush2.xpose.msra.mxu0 0.0
    %555 = vmatprep.subr.mxu0 0.0
    %556 = vmatpush2.xpose.msra.mxu0 0.0
    %557 = vmatprep.subr.mxu0 0.0
    %558 = vmatpush2.xpose.msra.mxu0 0.0
    %559 = vmatprep.subr.mxu0 0.0
    %560 = vmatpush2.xpose.msra.mxu0 0.0
    %561 = vmatprep.subr.mxu0 0.0
    %562 = vmatpush2.xpose.msra.mxu0 0.0
    %563 = vmatprep.subr.mxu0 0.0
    %564 = vmatpush2.xpose.msra.mxu0 0.0
    %565 = vmatprep.subr.mxu0 0.0
    %566 = vmatpush2.xpose.msra.mxu0 0.0
    %567 = vmatprep.mubr.f32.mxu0 0.0
    %568 = vmatmul.mubr.f32.gmra.mxu0 %v501
    %v569 = vpop.f32.mrf.mxu0
    %v570 = vadd.f32 0.0, %v569
    %v571 = vpop.f32.mrf.mxu0
    %572 = vdwg.mxu0
    %v573 = vstv %s399
    %vm574 = vcmp.ge.s32.totalorder %v75, %v573
    %v575 = vsel %vm574, %v570, -1e+30
    %v576 = vsel %vm370, %v575, -inf
    %577 = vmax.xlane.f32.xlu0 %v576
    %v578 = vpop.xlane.xlu0 %577
    %v579 = vsub.f32 %v575, %v578
    %v580 = vmul.f32 %v579, 1.442695
    %v581 = vpow.pop %v580
    %v582 = vsel %vm370, %v581, 0.0
    %583 = vadd.xlane.f32.xlu0 %v582
    %v584 = vpop.xlane.xlu0 %583
    %v585 = vlog2.pop %v584
    %v586 = vmul.f32 %v585, 0.6931472
    %v587 = vsub.f32 %v579, %v586
    %v588 = vstv %s400
    %vm589 = vcmp.eq.s32.totalorder %v75, %v588
    %v590 = vsel %vm589, %v587, 0.0
    %v591 = vsel %vm370, %v590, 0.0
    %592 = vadd.xlane.f32.xlu0 %v591
    %v593 = vpop.xlane.xlu0 %592
    %v594 = vrot.slane %v593, 4
    %v595 = vadd.f32 %v593, %v594
    %v596 = vrot.slane %v595, 2
    %v597 = vadd.f32 %v595, %v596
    %v598 = vrot.slane %v597, 1
    %v599 = vadd.f32 %v597, %v598
    %s600 = vtos %v599
    %v601 = vstv %s600
    %v602 = vsub.f32 0.0, %v601
    %v603 = vadd.f32 %v398, %v602
    %s604 = sld [smem:[#allocation5 + $0x2]]
    %s605 = sld [smem:[#allocation6 + $0x2]]
    %v606 = vld [vmem:[#allocation3 + $0x2] sm:$0x1]
    %607 = vmatprep.subr.mxu0 0.0
    %608 = vmatpush1.msra.mxu0 0.0
    %609 = vmatprep.subr.mxu0 0.0
    %610 = vmatpush1.msra.mxu0 0.0
    %611 = vmatprep.subr.mxu0 0.0
    %612 = vmatpush1.msra.mxu0 0.0
    %613 = vmatprep.subr.mxu0 0.0
    %614 = vmatpush1.msra.mxu0 0.0
    %615 = vmatprep.subr.mxu0 0.0
    %616 = vmatpush1.msra.mxu0 0.0
    %617 = vmatprep.subr.mxu0 0.0
    %618 = vmatpush1.msra.mxu0 0.0
    %619 = vmatprep.subr.mxu0 0.0
    %620 = vmatpush1.msra.mxu0 0.0
    %621 = vmatprep.subr.mxu0 0.0
    %622 = vmatpush1.msra.mxu0 0.0
    %623 = vmatprep.subr.mxu0 0.0
    %624 = vmatpush1.msra.mxu0 0.0
    %625 = vmatprep.subr.mxu0 0.0
    %626 = vmatpush1.msra.mxu0 0.0
    %627 = vmatprep.subr.mxu0 0.0
    %628 = vmatpush1.msra.mxu0 0.0
    %629 = vmatprep.subr.mxu0 0.0
    %630 = vmatpush1.msra.mxu0 0.0
    %631 = vmatprep.subr.mxu0 0.0
    %632 = vmatpush1.msra.mxu0 %v185
    %633 = vmatprep.subr.mxu0 0.0
    %634 = vmatpush1.msra.mxu0 %v184
    %635 = vmatprep.subr.mxu0 0.0
    %636 = vmatpush1.msra.mxu0 %v183
    %637 = vmatprep.subr.mxu0 0.0
    %638 = vmatpush1.msra.mxu0 %v182
    %639 = vmatprep.subr.mxu0 0.0
    %640 = vmatpush2.msra.mxu0 0.0
    %641 = vmatprep.subr.mxu0 0.0
    %642 = vmatpush2.msra.mxu0 0.0
    %643 = vmatprep.subr.mxu0 0.0
    %644 = vmatpush2.msra.mxu0 0.0
    %645 = vmatprep.subr.mxu0 0.0
    %646 = vmatpush2.msra.mxu0 0.0
    %647 = vmatprep.subr.mxu0 0.0
    %648 = vmatpush2.msra.mxu0 0.0
    %649 = vmatprep.subr.mxu0 0.0
    %650 = vmatpush2.msra.mxu0 0.0
    %651 = vmatprep.subr.mxu0 0.0
    %652 = vmatpush2.msra.mxu0 0.0
    %653 = vmatprep.subr.mxu0 0.0
    %654 = vmatpush2.msra.mxu0 0.0
    %655 = vmatprep.subr.mxu0 0.0
    %656 = vmatpush2.msra.mxu0 0.0
    %657 = vmatprep.subr.mxu0 0.0
    %658 = vmatpush2.msra.mxu0 0.0
    %659 = vmatprep.subr.mxu0 0.0
    %660 = vmatpush2.msra.mxu0 0.0
    %661 = vmatprep.subr.mxu0 0.0
    %662 = vmatpush2.msra.mxu0 0.0
    %663 = vmatprep.subr.mxu0 0.0
    %664 = vmatpush2.msra.mxu0 0.0
    %665 = vmatprep.subr.mxu0 0.0
    %666 = vmatpush2.msra.mxu0 0.0
    %667 = vmatprep.subr.mxu0 0.0
    %668 = vmatpush2.msra.mxu0 0.0
    %669 = vmatprep.subr.mxu0 0.0
    %670 = vmatpush2.msra.mxu0 0.0
    %671 = vmatprep.mubr.f32.mxu0 0.0
    %672 = vmatmul.mubr.f32.gmra.mxu0 %v501
    %v673 = vpop.f32.mrf.mxu0
    %v674 = vadd.f32 %v186, %v673
    %v675 = vpop.f32.mrf.mxu0
    %676 = vdwg.mxu0
    %v677 = vadd.f32 %v606, %v674
    %v678 = vxor.u32 %v677, 2147483648
    %v679 = vmul.f32 %v678, 1.442695
    %v680 = vpow.pop %v679
    %v681 = vadd.f32 %v680, 1.0
    %v682 = vrcp.pop %v681
    %v683 = vmul.f32 1.0, %v682
    %685 = vrot.lane.b32.xlu0 %v674, 64
    %v686 = vpop.permute.xlu0 %685
    %v688 = vmul.f32 %v683, %v686
    %690 = vrot.lane.b32.xlu0 %v688, 64
    %v691 = vpop.permute.xlu0 %690
    %v693 = vadd.f32 %v606, %v691
    %v694 = vtanh.pop %v693
    %v695 = vsub.f32 1.0, %v683
    %697 = vrot.lane.b32.xlu0 %v694, 96
    %v698 = vpop.permute.xlu0 %697
    %v700 = vmul.f32 %v695, %v698
    %v701 = vmul.f32 %v683, %v497
    %v702 = vadd.f32 %v700, %v701
    %704 = vrot.lane.b32.xlu0 %v702, 96
    %v705 = vpop.permute.xlu0 %704
    %v706 = vsel %vm102, %v705, 0
    %708 = vmatprep.subr.mxu0 0.0
    %709 = vmatpush1.xpose.msra.mxu0 0.0
    %710 = vmatprep.subr.mxu0 0.0
    %711 = vmatpush1.xpose.msra.mxu0 0.0
    %712 = vmatprep.subr.mxu0 0.0
    %713 = vmatpush1.xpose.msra.mxu0 0.0
    %714 = vmatprep.subr.mxu0 0.0
    %715 = vmatpush1.xpose.msra.mxu0 0.0
    %716 = vmatprep.subr.mxu0 0.0
    %717 = vmatpush1.xpose.msra.mxu0 0.0
    %718 = vmatprep.subr.mxu0 0.0
    %719 = vmatpush1.xpose.msra.mxu0 0.0
    %720 = vmatprep.subr.mxu0 0.0
    %721 = vmatpush1.xpose.msra.mxu0 0.0
    %722 = vmatprep.subr.mxu0 0.0
    %723 = vmatpush1.xpose.msra.mxu0 0.0
    %724 = vmatprep.subr.mxu0 0.0
    %725 = vmatpush1.xpose.msra.mxu0 0.0
    %726 = vmatprep.subr.mxu0 0.0
    %727 = vmatpush1.xpose.msra.mxu0 0.0
    %728 = vmatprep.subr.mxu0 0.0
    %729 = vmatpush1.xpose.msra.mxu0 0.0
    %730 = vmatprep.subr.mxu0 0.0
    %731 = vmatpush1.xpose.msra.mxu0 0.0
    %732 = vmatprep.subr.mxu0 0.0
    %733 = vmatpush1.xpose.msra.mxu0 0.0
    %734 = vmatprep.subr.mxu0 0.0
    %735 = vmatpush1.xpose.msra.mxu0 0.0
    %736 = vmatprep.subr.mxu0 0.0
    %737 = vmatpush1.xpose.msra.mxu0 0.0
    %738 = vmatprep.subr.mxu0 0.0
    %739 = vmatpush1.xpose.msra.mxu0 %v295
    %740 = vmatprep.subr.mxu0 0.0
    %741 = vmatpush2.xpose.msra.mxu0 0.0
    %742 = vmatprep.subr.mxu0 0.0
    %743 = vmatpush2.xpose.msra.mxu0 0.0
    %744 = vmatprep.subr.mxu0 0.0
    %745 = vmatpush2.xpose.msra.mxu0 0.0
    %746 = vmatprep.subr.mxu0 0.0
    %747 = vmatpush2.xpose.msra.mxu0 0.0
    %748 = vmatprep.subr.mxu0 0.0
    %749 = vmatpush2.xpose.msra.mxu0 0.0
    %750 = vmatprep.subr.mxu0 0.0
    %751 = vmatpush2.xpose.msra.mxu0 0.0
    %752 = vmatprep.subr.mxu0 0.0
    %753 = vmatpush2.xpose.msra.mxu0 0.0
    %754 = vmatprep.subr.mxu0 0.0
    %755 = vmatpush2.xpose.msra.mxu0 0.0
    %756 = vmatprep.subr.mxu0 0.0
    %757 = vmatpush2.xpose.msra.mxu0 0.0
    %758 = vmatprep.subr.mxu0 0.0
    %759 = vmatpush2.xpose.msra.mxu0 0.0
    %760 = vmatprep.subr.mxu0 0.0
    %761 = vmatpush2.xpose.msra.mxu0 0.0
    %762 = vmatprep.subr.mxu0 0.0
    %763 = vmatpush2.xpose.msra.mxu0 0.0
    %764 = vmatprep.subr.mxu0 0.0
    %765 = vmatpush2.xpose.msra.mxu0 0.0
    %766 = vmatprep.subr.mxu0 0.0
    %767 = vmatpush2.xpose.msra.mxu0 0.0
    %768 = vmatprep.subr.mxu0 0.0
    %769 = vmatpush2.xpose.msra.mxu0 0.0
    %770 = vmatprep.subr.mxu0 0.0
    %771 = vmatpush2.xpose.msra.mxu0 0.0
    %772 = vmatprep.mubr.f32.mxu0 0.0
    %773 = vmatmul.mubr.f32.gmra.mxu0 %v706
    %v774 = vpop.f32.mrf.mxu0
    %v775 = vadd.f32 0.0, %v774
    %v776 = vpop.f32.mrf.mxu0
    %777 = vdwg.mxu0
    %v778 = vstv %s604
    %vm779 = vcmp.ge.s32.totalorder %v75, %v778
    %v780 = vsel %vm779, %v775, -1e+30
    %v781 = vsel %vm370, %v780, -inf
    %782 = vmax.xlane.f32.xlu0 %v781
    %v783 = vpop.xlane.xlu0 %782
    %v784 = vsub.f32 %v780, %v783
    %v785 = vmul.f32 %v784, 1.442695
    %v786 = vpow.pop %v785
    %v787 = vsel %vm370, %v786, 0.0
    %788 = vadd.xlane.f32.xlu0 %v787
    %v789 = vpop.xlane.xlu0 %788
    %v790 = vlog2.pop %v789
    %v791 = vmul.f32 %v790, 0.6931472
    %v792 = vsub.f32 %v784, %v791
    %v793 = vstv %s605
    %vm794 = vcmp.eq.s32.totalorder %v75, %v793
    %v795 = vsel %vm794, %v792, 0.0
    %v796 = vsel %vm370, %v795, 0.0
    %797 = vadd.xlane.f32.xlu0 %v796
    %v798 = vpop.xlane.xlu0 %797
    %v799 = vrot.slane %v798, 4
    %v800 = vadd.f32 %v798, %v799
    %v801 = vrot.slane %v800, 2
    %v802 = vadd.f32 %v800, %v801
    %v803 = vrot.slane %v802, 1
    %v804 = vadd.f32 %v802, %v803
    %s805 = vtos %v804
    %v806 = vstv %s805
    %v807 = vsub.f32 0.0, %v806
    %v808 = vadd.f32 %v603, %v807
    %vm809 = vcmask 0
    %810 = vst.msk [vmem:[#allocation13] sm:$0x1] %vm809, %v808
    // Predicated region
    $region42: #{train_segment_loss.3} parent=1 // pred_check
      _
    $region43: #{train_segment_loss.3} parent=1 // pred_check_branch
      %812 = sbr.rel (0) target = $region45
    $region44: #{train_segment_loss.3} parent=1 // pred_region
      %s814 = ssub.s32 16, 16
      %815 = vsyncadd [#allocation9], %s814
      %s817 = sshll.u32 [#allocation13], 4
      %s818 = int_to_ptr.vmem [resolvable:$true] %s817
      %820 = dma.vmem_to_hbm [thread:$0]  %s818, 16, %s9, [#allocation9]
    $region45: #{train_segment_loss.3} parent=1 // pred_fallthru
      _
    // Predicated region
    $region46: #{train_segment_loss.3} parent=1 // pred_check
      _
    $region47: #{train_segment_loss.3} parent=1 // pred_check_branch
      %822 = sbr.rel (0) target = $region49
    $region48: #{train_segment_loss.3} parent=1 // pred_region
      %823 = dma.done [#allocation9], 16
    $region49: #{train_segment_loss.3} parent=1 // pred_fallthru
      _
    %824 = vsyncpa [#allocation8], 1
    %825 = vsyncpa [#allocation11], 1
    %826 = vsyncpa [#allocation9], 1

// kernel: train_segment_loss.2
$region0: #{train_segment_loss.2}
  #allocation0 [shape = 'u32[]', space=smem, size = 0x4, offset = 0x4, fixed_abs, tag = 'smem constant byte address 0x4 - core index']
  #allocation1 [shape = 'u32[144,128]{1,0:T(1,128)}', space=vmem, size = 0x12000, scoped, tag = 'internal scratch']
  #allocation2 [shape = 'f32[8,96]{1,0:T(8,128)}', space=vmem, size = 0x1000, scoped, tag = 'scratch operand']
  %s0 = inlined_call_operand.vmem [shape: f32[8,32], index: 0, kind: input, shape index: {}]
  %s1 = inlined_call_operand.hbm [shape: f32[32,96], index: 1, kind: input, shape index: {}]
  %s2 = inlined_call_operand.hbm [shape: f32[16,48], index: 2, kind: input, shape index: {}]
  %s3 = inlined_call_operand.hbm [shape: f32[16,48], index: 3, kind: input, shape index: {}]
  %s4 = inlined_call_operand.hbm [shape: f32[1,96], index: 4, kind: input, shape index: {}]
  %s5 = inlined_call_operand.hbm [shape: f32[1,48], index: 5, kind: input, shape index: {}]
  %s6 = inlined_call_operand.hbm [shape: f32[1,48], index: 6, kind: input, shape index: {}]
  %s7 = inlined_call_operand.vmem [shape: f32[8,32], index: 7, kind: output, shape index: {}]
  %s8 = sld [smem:[#allocation0]]
  $region62: #{train_segment_loss.2} parent=0
    _
  %s10 = ssub.s32 1, %s8
  %s11 = scalar_select 0, %s10, %s8
  $region1: #{train_segment_loss.2} parent=0
    #allocation3 [shape = 'u8[16384]{0}', space=vmem, size = 0x4000, scoped, tag = 'input window, operand 1, single buffered']
    #allocation4 [shape = 's32[1]{0}', space=sflag, size = 0x4, scoped, tag = 'scoped memory for train_segment_loss.2']
    #allocation5 [shape = 'u8[8192]{0}', space=vmem, size = 0x2000, scoped, tag = 'input window, operand 2, single buffered']
    #allocation6 [shape = 's32[1]{0}', space=sflag, size = 0x4, scoped, tag = 'scoped memory for train_segment_loss.2']
    #allocation7 [shape = 'u8[8192]{0}', space=vmem, size = 0x2000, scoped, tag = 'input window, operand 3, single buffered']
    #allocation8 [shape = 'u8[512]{0}', space=vmem, size = 0x400, scoped, tag = 'input window, operand 4, single buffered']
    #allocation9 [shape = 's32[1]{0}', space=sflag, size = 0x4, scoped, tag = 'scoped memory for train_segment_loss.2']
    #allocation10 [shape = 'u8[512]{0}', space=vmem, size = 0x400, scoped, tag = 'input window, operand 5, single buffered']
    #allocation11 [shape = 'u8[512]{0}', space=vmem, size = 0x400, scoped, tag = 'input window, operand 6, single buffered']
    #allocation12 [shape = 's32[1]{0}', space=sflag, size = 0x4, scoped, tag = 'scoped memory for train_segment_loss.2']
    %12 = vsyncpa [#allocation4], 0
    %13 = vsyncpa [#allocation6], 0
    %14 = vsyncpa [#allocation9], 0
    %15 = vsyncpa [#allocation12], 0
    // Predicated region
    $region2: #{train_segment_loss.2} parent=1 // pred_check
      _
    $region3: #{train_segment_loss.2} parent=1 // pred_check_branch
      %17 = sbr.rel (0) target = $region5
    $region4: #{train_segment_loss.2} parent=1 // pred_region
      _
    $region5: #{train_segment_loss.2} parent=1 // pred_fallthru
      _
    // Predicated region
    $region6: #{train_segment_loss.2} parent=1 // pred_check
      _
    $region7: #{train_segment_loss.2} parent=1 // pred_check_branch
      %19 = sbr.rel (0) target = $region9
    $region8: #{train_segment_loss.2} parent=1 // pred_region
      %s21 = ssub.s32 512, 512
      %22 = vsyncadd [#allocation4], %s21
      %s23 = sshll.u32 [#allocation3], 4
      %s24 = int_to_ptr.vmem [resolvable:$true] %s23
      %29 = dma.hbm_to_vmem [thread:$0]  %s1, 512, %s24, [#allocation4], 128, 128, 8
    $region9: #{train_segment_loss.2} parent=1 // pred_fallthru
      _
    // Predicated region
    $region10: #{train_segment_loss.2} parent=1 // pred_check
      _
    $region11: #{train_segment_loss.2} parent=1 // pred_check_branch
      %31 = sbr.rel (0) target = $region13
    $region12: #{train_segment_loss.2} parent=1 // pred_region
      %s33 = ssub.s32 256, 256
      %34 = vsyncadd [#allocation6], %s33
      %s35 = sshll.u32 [#allocation5], 4
      %s36 = int_to_ptr.vmem [resolvable:$true] %s35
      %41 = dma.hbm_to_vmem [thread:$0]  %s2, 256, %s36, [#allocation6], 128, 128, 8
    $region13: #{train_segment_loss.2} parent=1 // pred_fallthru
      _
    // Predicated region
    $region14: #{train_segment_loss.2} parent=1 // pred_check
      _
    $region15: #{train_segment_loss.2} parent=1 // pred_check_branch
      %43 = sbr.rel (0) target = $region17
    $region16: #{train_segment_loss.2} parent=1 // pred_region
      %s45 = ssub.s32 256, 256
      %46 = vsyncadd [#allocation6], %s45
      %s47 = sshll.u32 [#allocation7], 4
      %s48 = int_to_ptr.vmem [resolvable:$true] %s47
      %53 = dma.hbm_to_vmem [thread:$0]  %s3, 256, %s48, [#allocation6], 128, 128, 8
    $region17: #{train_segment_loss.2} parent=1 // pred_fallthru
      _
    // Predicated region
    $region18: #{train_segment_loss.2} parent=1 // pred_check
      _
    $region19: #{train_segment_loss.2} parent=1 // pred_check_branch
      %55 = sbr.rel (0) target = $region21
    $region20: #{train_segment_loss.2} parent=1 // pred_region
      %s57 = ssub.s32 16, 16
      %58 = vsyncadd [#allocation9], %s57
      %s60 = sshll.u32 [#allocation8], 4
      %s61 = int_to_ptr.vmem [resolvable:$true] %s60
      %63 = dma.hbm_to_vmem [thread:$0]  %s4, 16, %s61, [#allocation9]
    $region21: #{train_segment_loss.2} parent=1 // pred_fallthru
      _
    // Predicated region
    $region22: #{train_segment_loss.2} parent=1 // pred_check
      _
    $region23: #{train_segment_loss.2} parent=1 // pred_check_branch
      %65 = sbr.rel (0) target = $region25
    $region24: #{train_segment_loss.2} parent=1 // pred_region
      %s67 = ssub.s32 16, 16
      %68 = vsyncadd [#allocation9], %s67
      %s70 = sshll.u32 [#allocation10], 4
      %s71 = int_to_ptr.vmem [resolvable:$true] %s70
      %73 = dma.hbm_to_vmem [thread:$0]  %s5, 16, %s71, [#allocation9]
    $region25: #{train_segment_loss.2} parent=1 // pred_fallthru
      _
    // Predicated region
    $region26: #{train_segment_loss.2} parent=1 // pred_check
      _
    $region27: #{train_segment_loss.2} parent=1 // pred_check_branch
      %75 = sbr.rel (0) target = $region29
    $region28: #{train_segment_loss.2} parent=1 // pred_region
      %s77 = ssub.s32 16, 16
      %78 = vsyncadd [#allocation12], %s77
      %s80 = sshll.u32 [#allocation11], 4
      %s81 = int_to_ptr.vmem [resolvable:$true] %s80
      %83 = dma.hbm_to_vmem [thread:$0]  %s6, 16, %s81, [#allocation12]
    $region29: #{train_segment_loss.2} parent=1 // pred_fallthru
      _
    // Predicated region
    $region30: #{train_segment_loss.2} parent=1 // pred_check
      _
    $region31: #{train_segment_loss.2} parent=1 // pred_check_branch
      %85 = sbr.rel (0) target = $region33
    $region32: #{train_segment_loss.2} parent=1 // pred_region
      %86 = dma.done [#allocation4], 512
    $region33: #{train_segment_loss.2} parent=1 // pred_fallthru
      _
    // Predicated region
    $region34: #{train_segment_loss.2} parent=1 // pred_check
      _
    $region35: #{train_segment_loss.2} parent=1 // pred_check_branch
      %88 = sbr.rel (0) target = $region37
    $region36: #{train_segment_loss.2} parent=1 // pred_region
      %89 = dma.done [#allocation6], 256
    $region37: #{train_segment_loss.2} parent=1 // pred_fallthru
      _
    // Predicated region
    $region38: #{train_segment_loss.2} parent=1 // pred_check
      _
    $region39: #{train_segment_loss.2} parent=1 // pred_check_branch
      %91 = sbr.rel (0) target = $region41
    $region40: #{train_segment_loss.2} parent=1 // pred_region
      %92 = dma.done [#allocation6], 256
    $region41: #{train_segment_loss.2} parent=1 // pred_fallthru
      _
    // Predicated region
    $region42: #{train_segment_loss.2} parent=1 // pred_check
      _
    $region43: #{train_segment_loss.2} parent=1 // pred_check_branch
      %94 = sbr.rel (0) target = $region45
    $region44: #{train_segment_loss.2} parent=1 // pred_region
      %95 = dma.done [#allocation9], 16
    $region45: #{train_segment_loss.2} parent=1 // pred_fallthru
      _
    // Predicated region
    $region46: #{train_segment_loss.2} parent=1 // pred_check
      _
    $region47: #{train_segment_loss.2} parent=1 // pred_check_branch
      %97 = sbr.rel (0) target = $region49
    $region48: #{train_segment_loss.2} parent=1 // pred_region
      %98 = dma.done [#allocation9], 16
    $region49: #{train_segment_loss.2} parent=1 // pred_fallthru
      _
    // Predicated region
    $region50: #{train_segment_loss.2} parent=1 // pred_check
      _
    $region51: #{train_segment_loss.2} parent=1 // pred_check_branch
      %100 = sbr.rel (0) target = $region53
    $region52: #{train_segment_loss.2} parent=1 // pred_region
      %101 = dma.done [#allocation12], 16
    $region53: #{train_segment_loss.2} parent=1 // pred_fallthru
      _
    %v102 = vld [vmem:[%s0] sm:$0xff]
    %v103 = vld [vmem:[#allocation3] sm:$0xff]
    %v104 = vld [vmem:[#allocation3 + $0x8] sm:$0xff]
    %v105 = vld [vmem:[#allocation3 + $0x10] sm:$0xff]
    %v106 = vld [vmem:[#allocation3 + $0x18] sm:$0xff]
    %v107 = vld [vmem:[#allocation8] sm:$0x1]
    %v109 = vlaneseq
    %v110 = vshrl.u32 %v109, 7
    %v111 = vsub.s32 0, %v110
    %v112 = vrot.slane %v107, %v111
    %vm114 = vcmask 261120
    %v116 = vsel %vm114, %v102, 0
    %118 = vmatprep.subr.mxu0 0.0
    %119 = vmatpush1.msra.mxu0 0.0
    %120 = vmatprep.subr.mxu0 0.0
    %121 = vmatpush1.msra.mxu0 0.0
    %122 = vmatprep.subr.mxu0 0.0
    %123 = vmatpush1.msra.mxu0 0.0
    %124 = vmatprep.subr.mxu0 0.0
    %125 = vmatpush1.msra.mxu0 0.0
    %126 = vmatprep.subr.mxu0 0.0
    %127 = vmatpush1.msra.mxu0 0.0
    %128 = vmatprep.subr.mxu0 0.0
    %129 = vmatpush1.msra.mxu0 0.0
    %130 = vmatprep.subr.mxu0 0.0
    %131 = vmatpush1.msra.mxu0 0.0
    %132 = vmatprep.subr.mxu0 0.0
    %133 = vmatpush1.msra.mxu0 0.0
    %134 = vmatprep.subr.mxu0 0.0
    %135 = vmatpush1.msra.mxu0 0.0
    %136 = vmatprep.subr.mxu0 0.0
    %137 = vmatpush1.msra.mxu0 0.0
    %138 = vmatprep.subr.mxu0 0.0
    %139 = vmatpush1.msra.mxu0 0.0
    %140 = vmatprep.subr.mxu0 0.0
    %141 = vmatpush1.msra.mxu0 0.0
    %142 = vmatprep.subr.mxu0 0.0
    %143 = vmatpush1.msra.mxu0 %v106
    %144 = vmatprep.subr.mxu0 0.0
    %145 = vmatpush1.msra.mxu0 %v105
    %146 = vmatprep.subr.mxu0 0.0
    %147 = vmatpush1.msra.mxu0 %v104
    %148 = vmatprep.subr.mxu0 0.0
    %149 = vmatpush1.msra.mxu0 %v103
    %150 = vmatprep.subr.mxu0 0.0
    %151 = vmatpush2.msra.mxu0 0.0
    %152 = vmatprep.subr.mxu0 0.0
    %153 = vmatpush2.msra.mxu0 0.0
    %154 = vmatprep.subr.mxu0 0.0
    %155 = vmatpush2.msra.mxu0 0.0
    %156 = vmatprep.subr.mxu0 0.0
    %157 = vmatpush2.msra.mxu0 0.0
    %158 = vmatprep.subr.mxu0 0.0
    %159 = vmatpush2.msra.mxu0 0.0
    %160 = vmatprep.subr.mxu0 0.0
    %161 = vmatpush2.msra.mxu0 0.0
    %162 = vmatprep.subr.mxu0 0.0
    %163 = vmatpush2.msra.mxu0 0.0
    %164 = vmatprep.subr.mxu0 0.0
    %165 = vmatpush2.msra.mxu0 0.0
    %166 = vmatprep.subr.mxu0 0.0
    %167 = vmatpush2.msra.mxu0 0.0
    %168 = vmatprep.subr.mxu0 0.0
    %169 = vmatpush2.msra.mxu0 0.0
    %170 = vmatprep.subr.mxu0 0.0
    %171 = vmatpush2.msra.mxu0 0.0
    %172 = vmatprep.subr.mxu0 0.0
    %173 = vmatpush2.msra.mxu0 0.0
    %174 = vmatprep.subr.mxu0 0.0
    %175 = vmatpush2.msra.mxu0 0.0
    %176 = vmatprep.subr.mxu0 0.0
    %177 = vmatpush2.msra.mxu0 0.0
    %178 = vmatprep.subr.mxu0 0.0
    %179 = vmatpush2.msra.mxu0 0.0
    %180 = vmatprep.subr.mxu0 0.0
    %181 = vmatpush2.msra.mxu0 0.0
    %182 = vmatprep.mubr.f32.mxu0 0.0
    %183 = vmatmul.mubr.f32.gmra.mxu0 %v116
    %v184 = vpop.f32.mrf.mxu0
    %v185 = vadd.f32 %v112, %v184
    %v186 = vpop.f32.mrf.mxu0
    %187 = vdwg.mxu0
    %vm188 = vcmask 785408
    %189 = vst.msk [vmem:[#allocation2] sm:$0xff] %vm188, %v185
    %v190 = vld [vmem:[#allocation2] sm:$0x1]
    %v191 = vld [vmem:[#allocation2 + $0x7] sm:$0x1]
    %v192 = vld [vmem:[#allocation5] sm:$0xff]
    %v193 = vld [vmem:[#allocation5 + $0x8] sm:$0xff]
    %v194 = vld [vmem:[#allocation10] sm:$0x1]
    %vm195 = vcmask 130048
    %v197 = vsel %vm195, 0.0, 0
    %199 = vmatprep.subr.mxu0 0.0
    %200 = vmatpush1.msra.mxu0 0.0
    %201 = vmatprep.subr.mxu0 0.0
    %202 = vmatpush1.msra.mxu0 0.0
    %203 = vmatprep.subr.mxu0 0.0
    %204 = vmatpush1.msra.mxu0 0.0
    %205 = vmatprep.subr.mxu0 0.0
    %206 = vmatpush1.msra.mxu0 0.0
    %207 = vmatprep.subr.mxu0 0.0
    %208 = vmatpush1.msra.mxu0 0.0
    %209 = vmatprep.subr.mxu0 0.0
    %210 = vmatpush1.msra.mxu0 0.0
    %211 = vmatprep.subr.mxu0 0.0
    %212 = vmatpush1.msra.mxu0 0.0
    %213 = vmatprep.subr.mxu0 0.0
    %214 = vmatpush1.msra.mxu0 0.0
    %215 = vmatprep.subr.mxu0 0.0
    %216 = vmatpush1.msra.mxu0 0.0
    %217 = vmatprep.subr.mxu0 0.0
    %218 = vmatpush1.msra.mxu0 0.0
    %219 = vmatprep.subr.mxu0 0.0
    %220 = vmatpush1.msra.mxu0 0.0
    %221 = vmatprep.subr.mxu0 0.0
    %222 = vmatpush1.msra.mxu0 0.0
    %223 = vmatprep.subr.mxu0 0.0
    %224 = vmatpush1.msra.mxu0 0.0
    %225 = vmatprep.subr.mxu0 0.0
    %226 = vmatpush1.msra.mxu0 0.0
    %227 = vmatprep.subr.mxu0 0.0
    %228 = vmatpush1.msra.mxu0 %v193
    %229 = vmatprep.subr.mxu0 0.0
    %230 = vmatpush1.msra.mxu0 %v192
    %231 = vmatprep.subr.mxu0 0.0
    %232 = vmatpush2.msra.mxu0 0.0
    %233 = vmatprep.subr.mxu0 0.0
    %234 = vmatpush2.msra.mxu0 0.0
    %235 = vmatprep.subr.mxu0 0.0
    %236 = vmatpush2.msra.mxu0 0.0
    %237 = vmatprep.subr.mxu0 0.0
    %238 = vmatpush2.msra.mxu0 0.0
    %239 = vmatprep.subr.mxu0 0.0
    %240 = vmatpush2.msra.mxu0 0.0
    %241 = vmatprep.subr.mxu0 0.0
    %242 = vmatpush2.msra.mxu0 0.0
    %243 = vmatprep.subr.mxu0 0.0
    %244 = vmatpush2.msra.mxu0 0.0
    %245 = vmatprep.subr.mxu0 0.0
    %246 = vmatpush2.msra.mxu0 0.0
    %247 = vmatprep.subr.mxu0 0.0
    %248 = vmatpush2.msra.mxu0 0.0
    %249 = vmatprep.subr.mxu0 0.0
    %250 = vmatpush2.msra.mxu0 0.0
    %251 = vmatprep.subr.mxu0 0.0
    %252 = vmatpush2.msra.mxu0 0.0
    %253 = vmatprep.subr.mxu0 0.0
    %254 = vmatpush2.msra.mxu0 0.0
    %255 = vmatprep.subr.mxu0 0.0
    %256 = vmatpush2.msra.mxu0 0.0
    %257 = vmatprep.subr.mxu0 0.0
    %258 = vmatpush2.msra.mxu0 0.0
    %259 = vmatprep.subr.mxu0 0.0
    %260 = vmatpush2.msra.mxu0 0.0
    %261 = vmatprep.subr.mxu0 0.0
    %262 = vmatpush2.msra.mxu0 0.0
    %263 = vmatprep.mubr.f32.mxu0 0.0
    %264 = vmatmul.mubr.f32.gmra.mxu0 %v197
    %v265 = vpop.f32.mrf.mxu0
    %v266 = vadd.f32 %v194, %v265
    %v267 = vpop.f32.mrf.mxu0
    %268 = vdwg.mxu0
    %v269 = vld [vmem:[#allocation7] sm:$0xff]
    %v270 = vld [vmem:[#allocation7 + $0x8] sm:$0xff]
    %v271 = vld [vmem:[#allocation11] sm:$0x1]
    %272 = vmatprep.subr.mxu0 0.0
    %273 = vmatpush1.msra.mxu0 0.0
    %274 = vmatprep.subr.mxu0 0.0
    %275 = vmatpush1.msra.mxu0 0.0
    %276 = vmatprep.subr.mxu0 0.0
    %277 = vmatpush1.msra.mxu0 0.0
    %278 = vmatprep.subr.mxu0 0.0
    %279 = vmatpush1.msra.mxu0 0.0
    %280 = vmatprep.subr.mxu0 0.0
    %281 = vmatpush1.msra.mxu0 0.0
    %282 = vmatprep.subr.mxu0 0.0
    %283 = vmatpush1.msra.mxu0 0.0
    %284 = vmatprep.subr.mxu0 0.0
    %285 = vmatpush1.msra.mxu0 0.0
    %286 = vmatprep.subr.mxu0 0.0
    %287 = vmatpush1.msra.mxu0 0.0
    %288 = vmatprep.subr.mxu0 0.0
    %289 = vmatpush1.msra.mxu0 0.0
    %290 = vmatprep.subr.mxu0 0.0
    %291 = vmatpush1.msra.mxu0 0.0
    %292 = vmatprep.subr.mxu0 0.0
    %293 = vmatpush1.msra.mxu0 0.0
    %294 = vmatprep.subr.mxu0 0.0
    %295 = vmatpush1.msra.mxu0 0.0
    %296 = vmatprep.subr.mxu0 0.0
    %297 = vmatpush1.msra.mxu0 0.0
    %298 = vmatprep.subr.mxu0 0.0
    %299 = vmatpush1.msra.mxu0 0.0
    %300 = vmatprep.subr.mxu0 0.0
    %301 = vmatpush1.msra.mxu0 %v270
    %302 = vmatprep.subr.mxu0 0.0
    %303 = vmatpush1.msra.mxu0 %v269
    %304 = vmatprep.subr.mxu0 0.0
    %305 = vmatpush2.msra.mxu0 0.0
    %306 = vmatprep.subr.mxu0 0.0
    %307 = vmatpush2.msra.mxu0 0.0
    %308 = vmatprep.subr.mxu0 0.0
    %309 = vmatpush2.msra.mxu0 0.0
    %310 = vmatprep.subr.mxu0 0.0
    %311 = vmatpush2.msra.mxu0 0.0
    %312 = vmatprep.subr.mxu0 0.0
    %313 = vmatpush2.msra.mxu0 0.0
    %314 = vmatprep.subr.mxu0 0.0
    %315 = vmatpush2.msra.mxu0 0.0
    %316 = vmatprep.subr.mxu0 0.0
    %317 = vmatpush2.msra.mxu0 0.0
    %318 = vmatprep.subr.mxu0 0.0
    %319 = vmatpush2.msra.mxu0 0.0
    %320 = vmatprep.subr.mxu0 0.0
    %321 = vmatpush2.msra.mxu0 0.0
    %322 = vmatprep.subr.mxu0 0.0
    %323 = vmatpush2.msra.mxu0 0.0
    %324 = vmatprep.subr.mxu0 0.0
    %325 = vmatpush2.msra.mxu0 0.0
    %326 = vmatprep.subr.mxu0 0.0
    %327 = vmatpush2.msra.mxu0 0.0
    %328 = vmatprep.subr.mxu0 0.0
    %329 = vmatpush2.msra.mxu0 0.0
    %330 = vmatprep.subr.mxu0 0.0
    %331 = vmatpush2.msra.mxu0 0.0
    %332 = vmatprep.subr.mxu0 0.0
    %333 = vmatpush2.msra.mxu0 0.0
    %334 = vmatprep.subr.mxu0 0.0
    %335 = vmatpush2.msra.mxu0 0.0
    %336 = vmatprep.mubr.f32.mxu0 0.0
    %337 = vmatmul.mubr.f32.gmra.mxu0 %v197
    %v338 = vpop.f32.mrf.mxu0
    %v339 = vadd.f32 %v271, %v338
    %v340 = vpop.f32.mrf.mxu0
    %341 = vdwg.mxu0
    %v342 = vadd.f32 %v190, %v266
    %v343 = vxor.u32 %v342, 2147483648
    %v344 = vmul.f32 %v343, 1.442695
    %v345 = vpow.pop %v344
    %v346 = vadd.f32 %v345, 1.0
    %v347 = vrcp.pop %v346
    %v348 = vmul.f32 1.0, %v347
    %350 = vrot.lane.b32.xlu0 %v266, 96
    %v351 = vpop.permute.xlu0 %350
    %v353 = vmul.f32 %v348, %v351
    %355 = vrot.lane.b32.xlu0 %v353, 32
    %v356 = vpop.permute.xlu0 %355
    %v358 = vadd.f32 %v190, %v356
    %v359 = vtanh.pop %v358
    %v360 = vsub.f32 1.0, %v348
    %362 = vrot.lane.b32.xlu0 %v359, 112
    %v363 = vpop.permute.xlu0 %362
    %v365 = vmul.f32 %v360, %v363
    %v366 = vmul.f32 %v348, 0.0
    %v367 = vadd.f32 %v365, %v366
    %369 = vrot.lane.b32.xlu0 %v339, 48
    %v370 = vpop.permute.xlu0 %369
    %v372 = vadd.f32 %v191, %v370
    %v373 = vxor.u32 %v372, 2147483648
    %v374 = vmul.f32 %v373, 1.442695
    %v375 = vpow.pop %v374
    %v376 = vadd.f32 %v375, 1.0
    %v377 = vrcp.pop %v376
    %v378 = vmul.f32 1.0, %v377
    %379 = vrot.lane.b32.xlu0 %v339, 16
    %v380 = vpop.permute.xlu0 %379
    %v382 = vmul.f32 %v378, %v380
    %384 = vrot.lane.b32.xlu0 %v382, 32
    %v385 = vpop.permute.xlu0 %384
    %v387 = vadd.f32 %v191, %v385
    %v388 = vtanh.pop %v387
    %v389 = vsub.f32 1.0, %v378
    %391 = vrot.lane.b32.xlu0 %v388, 112
    %v392 = vpop.permute.xlu0 %391
    %v394 = vmul.f32 %v389, %v392
    %v395 = vmul.f32 %v378, 0.0
    %v396 = vadd.f32 %v394, %v395
    %398 = vrot.lane.b32.xlu0 %v367, 112
    %v399 = vpop.permute.xlu0 %398
    %vm401 = vcmask 122880
    %402 = vst.msk [vmem:[%s7] sm:$0x1] %vm401, %v399
    %404 = vrot.lane.b32.xlu0 %v396, 80
    %v405 = vpop.permute.xlu0 %404
    %vm407 = vcmask 254080
    %408 = vst.msk [vmem:[%s7 + $0x7] sm:$0x1] %vm407, %v405
    %v409 = vld [vmem:[#allocation2 + $0x1] sm:$0x1]
    %v410 = vld [vmem:[#allocation2 + $0x6] sm:$0x1]
    %v411 = vld [vmem:[#allocation5] sm:$0xff]
    %v412 = vld [vmem:[#allocation5 + $0x8] sm:$0xff]
    %v413 = vld [vmem:[#allocation10] sm:$0x1]
    %v414 = vsel %vm195, %v399, 0
    %416 = vmatprep.subr.mxu0 0.0
    %417 = vmatpush1.msra.mxu0 0.0
    %418 = vmatprep.subr.mxu0 0.0
    %419 = vmatpush1.msra.mxu0 0.0
    %420 = vmatprep.subr.mxu0 0.0
    %421 = vmatpush1.msra.mxu0 0.0
    %422 = vmatprep.subr.mxu0 0.0
    %423 = vmatpush1.msra.mxu0 0.0
    %424 = vmatprep.subr.mxu0 0.0
    %425 = vmatpush1.msra.mxu0 0.0
    %426 = vmatprep.subr.mxu0 0.0
    %427 = vmatpush1.msra.mxu0 0.0
    %428 = vmatprep.subr.mxu0 0.0
    %429 = vmatpush1.msra.mxu0 0.0
    %430 = vmatprep.subr.mxu0 0.0
    %431 = vmatpush1.msra.mxu0 0.0
    %432 = vmatprep.subr.mxu0 0.0
    %433 = vmatpush1.msra.mxu0 0.0
    %434 = vmatprep.subr.mxu0 0.0
    %435 = vmatpush1.msra.mxu0 0.0
    %436 = vmatprep.subr.mxu0 0.0
    %437 = vmatpush1.msra.mxu0 0.0
    %438 = vmatprep.subr.mxu0 0.0
    %439 = vmatpush1.msra.mxu0 0.0
    %440 = vmatprep.subr.mxu0 0.0
    %441 = vmatpush1.msra.mxu0 0.0
    %442 = vmatprep.subr.mxu0 0.0
    %443 = vmatpush1.msra.mxu0 0.0
    %444 = vmatprep.subr.mxu0 0.0
    %445 = vmatpush1.msra.mxu0 %v412
    %446 = vmatprep.subr.mxu0 0.0
    %447 = vmatpush1.msra.mxu0 %v411
    %448 = vmatprep.subr.mxu0 0.0
    %449 = vmatpush2.msra.mxu0 0.0
    %450 = vmatprep.subr.mxu0 0.0
    %451 = vmatpush2.msra.mxu0 0.0
    %452 = vmatprep.subr.mxu0 0.0
    %453 = vmatpush2.msra.mxu0 0.0
    %454 = vmatprep.subr.mxu0 0.0
    %455 = vmatpush2.msra.mxu0 0.0
    %456 = vmatprep.subr.mxu0 0.0
    %457 = vmatpush2.msra.mxu0 0.0
    %458 = vmatprep.subr.mxu0 0.0
    %459 = vmatpush2.msra.mxu0 0.0
    %460 = vmatprep.subr.mxu0 0.0
    %461 = vmatpush2.msra.mxu0 0.0
    %462 = vmatprep.subr.mxu0 0.0
    %463 = vmatpush2.msra.mxu0 0.0
    %464 = vmatprep.subr.mxu0 0.0
    %465 = vmatpush2.msra.mxu0 0.0
    %466 = vmatprep.subr.mxu0 0.0
    %467 = vmatpush2.msra.mxu0 0.0
    %468 = vmatprep.subr.mxu0 0.0
    %469 = vmatpush2.msra.mxu0 0.0
    %470 = vmatprep.subr.mxu0 0.0
    %471 = vmatpush2.msra.mxu0 0.0
    %472 = vmatprep.subr.mxu0 0.0
    %473 = vmatpush2.msra.mxu0 0.0
    %474 = vmatprep.subr.mxu0 0.0
    %475 = vmatpush2.msra.mxu0 0.0
    %476 = vmatprep.subr.mxu0 0.0
    %477 = vmatpush2.msra.mxu0 0.0
    %478 = vmatprep.subr.mxu0 0.0
    %479 = vmatpush2.msra.mxu0 0.0
    %480 = vmatprep.mubr.f32.mxu0 0.0
    %481 = vmatmul.mubr.f32.gmra.mxu0 %v414
    %v482 = vpop.f32.mrf.mxu0
    %v483 = vadd.f32 %v413, %v482
    %v484 = vpop.f32.mrf.mxu0
    %485 = vdwg.mxu0
    %v486 = vld [vmem:[#allocation7] sm:$0xff]
    %v487 = vld [vmem:[#allocation7 + $0x8] sm:$0xff]
    %v488 = vld [vmem:[#allocation11] sm:$0x1]
    %489 = vrot.lane.b32.xlu0 %v396, 64
    %v490 = vpop.permute.xlu0 %489
    %v491 = vsel %vm195, %v490, 0
    %493 = vmatprep.subr.mxu0 0.0
    %494 = vmatpush1.msra.mxu0 0.0
    %495 = vmatprep.subr.mxu0 0.0
    %496 = vmatpush1.msra.mxu0 0.0
    %497 = vmatprep.subr.mxu0 0.0
    %498 = vmatpush1.msra.mxu0 0.0
    %499 = vmatprep.subr.mxu0 0.0
    %500 = vmatpush1.msra.mxu0 0.0
    %501 = vmatprep.subr.mxu0 0.0
    %502 = vmatpush1.msra.mxu0 0.0
    %503 = vmatprep.subr.mxu0 0.0
    %504 = vmatpush1.msra.mxu0 0.0
    %505 = vmatprep.subr.mxu0 0.0
    %506 = vmatpush1.msra.mxu0 0.0
    %507 = vmatprep.subr.mxu0 0.0
    %508 = vmatpush1.msra.mxu0 0.0
    %509 = vmatprep.subr.mxu0 0.0
    %510 = vmatpush1.msra.mxu0 0.0
    %511 = vmatprep.subr.mxu0 0.0
    %512 = vmatpush1.msra.mxu0 0.0
    %513 = vmatprep.subr.mxu0 0.0
    %514 = vmatpush1.msra.mxu0 0.0
    %515 = vmatprep.subr.mxu0 0.0
    %516 = vmatpush1.msra.mxu0 0.0
    %517 = vmatprep.subr.mxu0 0.0
    %518 = vmatpush1.msra.mxu0 0.0
    %519 = vmatprep.subr.mxu0 0.0
    %520 = vmatpush1.msra.mxu0 0.0
    %521 = vmatprep.subr.mxu0 0.0
    %522 = vmatpush1.msra.mxu0 %v487
    %523 = vmatprep.subr.mxu0 0.0
    %524 = vmatpush1.msra.mxu0 %v486
    %525 = vmatprep.subr.mxu0 0.0
    %526 = vmatpush2.msra.mxu0 0.0
    %527 = vmatprep.subr.mxu0 0.0
    %528 = vmatpush2.msra.mxu0 0.0
    %529 = vmatprep.subr.mxu0 0.0
    %530 = vmatpush2.msra.mxu0 0.0
    %531 = vmatprep.subr.mxu0 0.0
    %532 = vmatpush2.msra.mxu0 0.0
    %533 = vmatprep.subr.mxu0 0.0
    %534 = vmatpush2.msra.mxu0 0.0
    %535 = vmatprep.subr.mxu0 0.0
    %536 = vmatpush2.msra.mxu0 0.0
    %537 = vmatprep.subr.mxu0 0.0
    %538 = vmatpush2.msra.mxu0 0.0
    %539 = vmatprep.subr.mxu0 0.0
    %540 = vmatpush2.msra.mxu0 0.0
    %541 = vmatprep.subr.mxu0 0.0
    %542 = vmatpush2.msra.mxu0 0.0
    %543 = vmatprep.subr.mxu0 0.0
    %544 = vmatpush2.msra.mxu0 0.0
    %545 = vmatprep.subr.mxu0 0.0
    %546 = vmatpush2.msra.mxu0 0.0
    %547 = vmatprep.subr.mxu0 0.0
    %548 = vmatpush2.msra.mxu0 0.0
    %549 = vmatprep.subr.mxu0 0.0
    %550 = vmatpush2.msra.mxu0 0.0
    %551 = vmatprep.subr.mxu0 0.0
    %552 = vmatpush2.msra.mxu0 0.0
    %553 = vmatprep.subr.mxu0 0.0
    %554 = vmatpush2.msra.mxu0 0.0
    %555 = vmatprep.subr.mxu0 0.0
    %556 = vmatpush2.msra.mxu0 0.0
    %557 = vmatprep.mubr.f32.mxu0 0.0
    %558 = vmatmul.mubr.f32.gmra.mxu0 %v491
    %v559 = vpop.f32.mrf.mxu0
    %v560 = vadd.f32 %v488, %v559
    %v561 = vpop.f32.mrf.mxu0
    %562 = vdwg.mxu0
    %v563 = vadd.f32 %v409, %v483
    %v564 = vxor.u32 %v563, 2147483648
    %v565 = vmul.f32 %v564, 1.442695
    %v566 = vpow.pop %v565
    %v567 = vadd.f32 %v566, 1.0
    %v568 = vrcp.pop %v567
    %v569 = vmul.f32 1.0, %v568
    %571 = vrot.lane.b32.xlu0 %v483, 96
    %v572 = vpop.permute.xlu0 %571
    %v574 = vmul.f32 %v569, %v572
    %576 = vrot.lane.b32.xlu0 %v574, 32
    %v577 = vpop.permute.xlu0 %576
    %v579 = vadd.f32 %v409, %v577
    %v580 = vtanh.pop %v579
    %v581 = vsub.f32 1.0, %v569
    %583 = vrot.lane.b32.xlu0 %v580, 112
    %v584 = vpop.permute.xlu0 %583
    %v586 = vmul.f32 %v581, %v584
    %v587 = vmul.f32 %v569, %v367
    %v588 = vadd.f32 %v586, %v587
    %590 = vrot.lane.b32.xlu0 %v560, 48
    %v591 = vpop.permute.xlu0 %590
    %v593 = vadd.f32 %v410, %v591
    %v594 = vxor.u32 %v593, 2147483648
    %v595 = vmul.f32 %v594, 1.442695
    %v596 = vpow.pop %v595
    %v597 = vadd.f32 %v596, 1.0
    %v598 = vrcp.pop %v597
    %v599 = vmul.f32 1.0, %v598
    %600 = vrot.lane.b32.xlu0 %v560, 16
    %v601 = vpop.permute.xlu0 %600
    %v603 = vmul.f32 %v599, %v601
    %605 = vrot.lane.b32.xlu0 %v603, 32
    %v606 = vpop.permute.xlu0 %605
    %v608 = vadd.f32 %v410, %v606
    %v609 = vtanh.pop %v608
    %v610 = vsub.f32 1.0, %v599
    %612 = vrot.lane.b32.xlu0 %v609, 112
    %v613 = vpop.permute.xlu0 %612
    %v615 = vmul.f32 %v610, %v613
    %v616 = vmul.f32 %v599, %v396
    %v617 = vadd.f32 %v615, %v616
    %619 = vrot.lane.b32.xlu0 %v588, 112
    %v620 = vpop.permute.xlu0 %619
    %622 = vst.msk [vmem:[%s7 + $0x1] sm:$0x1] %vm401, %v620
    %624 = vrot.lane.b32.xlu0 %v617, 80
    %v625 = vpop.permute.xlu0 %624
    %627 = vst.msk [vmem:[%s7 + $0x6] sm:$0x1] %vm407, %v625
    %v628 = vld [vmem:[#allocation2 + $0x2] sm:$0x1]
    %v629 = vld [vmem:[#allocation2 + $0x5] sm:$0x1]
    %v630 = vld [vmem:[#allocation5] sm:$0xff]
    %v631 = vld [vmem:[#allocation5 + $0x8] sm:$0xff]
    %v632 = vld [vmem:[#allocation10] sm:$0x1]
    %v633 = vsel %vm195, %v620, 0
    %635 = vmatprep.subr.mxu0 0.0
    %636 = vmatpush1.msra.mxu0 0.0
    %637 = vmatprep.subr.mxu0 0.0
    %638 = vmatpush1.msra.mxu0 0.0
    %639 = vmatprep.subr.mxu0 0.0
    %640 = vmatpush1.msra.mxu0 0.0
    %641 = vmatprep.subr.mxu0 0.0
    %642 = vmatpush1.msra.mxu0 0.0
    %643 = vmatprep.subr.mxu0 0.0
    %644 = vmatpush1.msra.mxu0 0.0
    %645 = vmatprep.subr.mxu0 0.0
    %646 = vmatpush1.msra.mxu0 0.0
    %647 = vmatprep.subr.mxu0 0.0
    %648 = vmatpush1.msra.mxu0 0.0
    %649 = vmatprep.subr.mxu0 0.0
    %650 = vmatpush1.msra.mxu0 0.0
    %651 = vmatprep.subr.mxu0 0.0
    %652 = vmatpush1.msra.mxu0 0.0
    %653 = vmatprep.subr.mxu0 0.0
    %654 = vmatpush1.msra.mxu0 0.0
    %655 = vmatprep.subr.mxu0 0.0
    %656 = vmatpush1.msra.mxu0 0.0
    %657 = vmatprep.subr.mxu0 0.0
    %658 = vmatpush1.msra.mxu0 0.0
    %659 = vmatprep.subr.mxu0 0.0
    %660 = vmatpush1.msra.mxu0 0.0
    %661 = vmatprep.subr.mxu0 0.0
    %662 = vmatpush1.msra.mxu0 0.0
    %663 = vmatprep.subr.mxu0 0.0
    %664 = vmatpush1.msra.mxu0 %v631
    %665 = vmatprep.subr.mxu0 0.0
    %666 = vmatpush1.msra.mxu0 %v630
    %667 = vmatprep.subr.mxu0 0.0
    %668 = vmatpush2.msra.mxu0 0.0
    %669 = vmatprep.subr.mxu0 0.0
    %670 = vmatpush2.msra.mxu0 0.0
    %671 = vmatprep.subr.mxu0 0.0
    %672 = vmatpush2.msra.mxu0 0.0
    %673 = vmatprep.subr.mxu0 0.0
    %674 = vmatpush2.msra.mxu0 0.0
    %675 = vmatprep.subr.mxu0 0.0
    %676 = vmatpush2.msra.mxu0 0.0
    %677 = vmatprep.subr.mxu0 0.0
    %678 = vmatpush2.msra.mxu0 0.0
    %679 = vmatprep.subr.mxu0 0.0
    %680 = vmatpush2.msra.mxu0 0.0
    %681 = vmatprep.subr.mxu0 0.0
    %682 = vmatpush2.msra.mxu0 0.0
    %683 = vmatprep.subr.mxu0 0.0
    %684 = vmatpush2.msra.mxu0 0.0
    %685 = vmatprep.subr.mxu0 0.0
    %686 = vmatpush2.msra.mxu0 0.0
    %687 = vmatprep.subr.mxu0 0.0
    %688 = vmatpush2.msra.mxu0 0.0
    %689 = vmatprep.subr.mxu0 0.0
    %690 = vmatpush2.msra.mxu0 0.0
    %691 = vmatprep.subr.mxu0 0.0
    %692 = vmatpush2.msra.mxu0 0.0
    %693 = vmatprep.subr.mxu0 0.0
    %694 = vmatpush2.msra.mxu0 0.0
    %695 = vmatprep.subr.mxu0 0.0
    %696 = vmatpush2.msra.mxu0 0.0
    %697 = vmatprep.subr.mxu0 0.0
    %698 = vmatpush2.msra.mxu0 0.0
    %699 = vmatprep.mubr.f32.mxu0 0.0
    %700 = vmatmul.mubr.f32.gmra.mxu0 %v633
    %v701 = vpop.f32.mrf.mxu0
    %v702 = vadd.f32 %v632, %v701
    %v703 = vpop.f32.mrf.mxu0
    %704 = vdwg.mxu0
    %v705 = vld [vmem:[#allocation7] sm:$0xff]
    %v706 = vld [vmem:[#allocation7 + $0x8] sm:$0xff]
    %v707 = vld [vmem:[#allocation11] sm:$0x1]
    %708 = vrot.lane.b32.xlu0 %v617, 64
    %v709 = vpop.permute.xlu0 %708
    %v710 = vsel %vm195, %v709, 0
    %712 = vmatprep.subr.mxu0 0.0
    %713 = vmatpush1.msra.mxu0 0.0
    %714 = vmatprep.subr.mxu0 0.0
    %715 = vmatpush1.msra.mxu0 0.0
    %716 = vmatprep.subr.mxu0 0.0
    %717 = vmatpush1.msra.mxu0 0.0
    %718 = vmatprep.subr.mxu0 0.0
    %719 = vmatpush1.msra.mxu0 0.0
    %720 = vmatprep.subr.mxu0 0.0
    %721 = vmatpush1.msra.mxu0 0.0
    %722 = vmatprep.subr.mxu0 0.0
    %723 = vmatpush1.msra.mxu0 0.0
    %724 = vmatprep.subr.mxu0 0.0
    %725 = vmatpush1.msra.mxu0 0.0
    %726 = vmatprep.subr.mxu0 0.0
    %727 = vmatpush1.msra.mxu0 0.0
    %728 = vmatprep.subr.mxu0 0.0
    %729 = vmatpush1.msra.mxu0 0.0
    %730 = vmatprep.subr.mxu0 0.0
    %731 = vmatpush1.msra.mxu0 0.0
    %732 = vmatprep.subr.mxu0 0.0
    %733 = vmatpush1.msra.mxu0 0.0
    %734 = vmatprep.subr.mxu0 0.0
    %735 = vmatpush1.msra.mxu0 0.0
    %736 = vmatprep.subr.mxu0 0.0
    %737 = vmatpush1.msra.mxu0 0.0
    %738 = vmatprep.subr.mxu0 0.0
    %739 = vmatpush1.msra.mxu0 0.0
    %740 = vmatprep.subr.mxu0 0.0
    %741 = vmatpush1.msra.mxu0 %v706
    %742 = vmatprep.subr.mxu0 0.0
    %743 = vmatpush1.msra.mxu0 %v705
    %744 = vmatprep.subr.mxu0 0.0
    %745 = vmatpush2.msra.mxu0 0.0
    %746 = vmatprep.subr.mxu0 0.0
    %747 = vmatpush2.msra.mxu0 0.0
    %748 = vmatprep.subr.mxu0 0.0
    %749 = vmatpush2.msra.mxu0 0.0
    %750 = vmatprep.subr.mxu0 0.0
    %751 = vmatpush2.msra.mxu0 0.0
    %752 = vmatprep.subr.mxu0 0.0
    %753 = vmatpush2.msra.mxu0 0.0
    %754 = vmatprep.subr.mxu0 0.0
    %755 = vmatpush2.msra.mxu0 0.0
    %756 = vmatprep.subr.mxu0 0.0
    %757 = vmatpush2.msra.mxu0 0.0
    %758 = vmatprep.subr.mxu0 0.0
    %759 = vmatpush2.msra.mxu0 0.0
    %760 = vmatprep.subr.mxu0 0.0
    %761 = vmatpush2.msra.mxu0 0.0
    %762 = vmatprep.subr.mxu0 0.0
    %763 = vmatpush2.msra.mxu0 0.0
    %764 = vmatprep.subr.mxu0 0.0
    %765 = vmatpush2.msra.mxu0 0.0
    %766 = vmatprep.subr.mxu0 0.0
    %767 = vmatpush2.msra.mxu0 0.0
    %768 = vmatprep.subr.mxu0 0.0
    %769 = vmatpush2.msra.mxu0 0.0
    %770 = vmatprep.subr.mxu0 0.0
    %771 = vmatpush2.msra.mxu0 0.0
    %772 = vmatprep.subr.mxu0 0.0
    %773 = vmatpush2.msra.mxu0 0.0
    %774 = vmatprep.subr.mxu0 0.0
    %775 = vmatpush2.msra.mxu0 0.0
    %776 = vmatprep.mubr.f32.mxu0 0.0
    %777 = vmatmul.mubr.f32.gmra.mxu0 %v710
    %v778 = vpop.f32.mrf.mxu0
    %v779 = vadd.f32 %v707, %v778
    %v780 = vpop.f32.mrf.mxu0
    %781 = vdwg.mxu0
    %v782 = vadd.f32 %v628, %v702
    %v783 = vxor.u32 %v782, 2147483648
    %v784 = vmul.f32 %v783, 1.442695
    %v785 = vpow.pop %v784
    %v786 = vadd.f32 %v785, 1.0
    %v787 = vrcp.pop %v786
    %v788 = vmul.f32 1.0, %v787
    %790 = vrot.lane.b32.xlu0 %v702, 96
    %v791 = vpop.permute.xlu0 %790
    %v793 = vmul.f32 %v788, %v791
    %795 = vrot.lane.b32.xlu0 %v793, 32
    %v796 = vpop.permute.xlu0 %795
    %v798 = vadd.f32 %v628, %v796
    %v799 = vtanh.pop %v798
    %v800 = vsub.f32 1.0, %v788
    %802 = vrot.lane.b32.xlu0 %v799, 112
    %v803 = vpop.permute.xlu0 %802
    %v805 = vmul.f32 %v800, %v803
    %v806 = vmul.f32 %v788, %v588
    %v807 = vadd.f32 %v805, %v806
    %809 = vrot.lane.b32.xlu0 %v779, 48
    %v810 = vpop.permute.xlu0 %809
    %v812 = vadd.f32 %v629, %v810
    %v813 = vxor.u32 %v812, 2147483648
    %v814 = vmul.f32 %v813, 1.442695
    %v815 = vpow.pop %v814
    %v816 = vadd.f32 %v815, 1.0
    %v817 = vrcp.pop %v816
    %v818 = vmul.f32 1.0, %v817
    %819 = vrot.lane.b32.xlu0 %v779, 16
    %v820 = vpop.permute.xlu0 %819
    %v822 = vmul.f32 %v818, %v820
    %824 = vrot.lane.b32.xlu0 %v822, 32
    %v825 = vpop.permute.xlu0 %824
    %v827 = vadd.f32 %v629, %v825
    %v828 = vtanh.pop %v827
    %v829 = vsub.f32 1.0, %v818
    %831 = vrot.lane.b32.xlu0 %v828, 112
    %v832 = vpop.permute.xlu0 %831
    %v834 = vmul.f32 %v829, %v832
    %v835 = vmul.f32 %v818, %v617
    %v836 = vadd.f32 %v834, %v835
    %838 = vrot.lane.b32.xlu0 %v807, 112
    %v839 = vpop.permute.xlu0 %838
    %841 = vst.msk [vmem:[%s7 + $0x2] sm:$0x1] %vm401, %v839
    %843 = vrot.lane.b32.xlu0 %v836, 80
    %v844 = vpop.permute.xlu0 %843
    %846 = vst.msk [vmem:[%s7 + $0x5] sm:$0x1] %vm407, %v844
    %v847 = vld [vmem:[#allocation2 + $0x3] sm:$0x1]
    %v848 = vld [vmem:[#allocation2 + $0x4] sm:$0x1]
    %v849 = vld [vmem:[#allocation5] sm:$0xff]
    %v850 = vld [vmem:[#allocation5 + $0x8] sm:$0xff]
    %v851 = vld [vmem:[#allocation10] sm:$0x1]
    %v852 = vsel %vm195, %v839, 0
    %854 = vmatprep.subr.mxu0 0.0
    %855 = vmatpush1.msra.mxu0 0.0
    %856 = vmatprep.subr.mxu0 0.0
    %857 = vmatpush1.msra.mxu0 0.0
    %858 = vmatprep.subr.mxu0 0.0
    %859 = vmatpush1.msra.mxu0 0.0
    %860 = vmatprep.subr.mxu0 0.0
    %861 = vmatpush1.msra.mxu0 0.0
    %862 = vmatprep.subr.mxu0 0.0
    %863 = vmatpush1.msra.mxu0 0.0
    %864 = vmatprep.subr.mxu0 0.0
    %865 = vmatpush1.msra.mxu0 0.0
    %866 = vmatprep.subr.mxu0 0.0
    %867 = vmatpush1.msra.mxu0 0.0
    %868 = vmatprep.subr.mxu0 0.0
    %869 = vmatpush1.msra.mxu0 0.0
    %870 = vmatprep.subr.mxu0 0.0
    %871 = vmatpush1.msra.mxu0 0.0
    %872 = vmatprep.subr.mxu0 0.0
    %873 = vmatpush1.msra.mxu0 0.0
    %874 = vmatprep.subr.mxu0 0.0
    %875 = vmatpush1.msra.mxu0 0.0
    %876 = vmatprep.subr.mxu0 0.0
    %877 = vmatpush1.msra.mxu0 0.0
    %878 = vmatprep.subr.mxu0 0.0
    %879 = vmatpush1.msra.mxu0 0.0
    %880 = vmatprep.subr.mxu0 0.0
    %881 = vmatpush1.msra.mxu0 0.0
    %882 = vmatprep.subr.mxu0 0.0
    %883 = vmatpush1.msra.mxu0 %v850
    %884 = vmatprep.subr.mxu0 0.0
    %885 = vmatpush1.msra.mxu0 %v849
    %886 = vmatprep.subr.mxu0 0.0
    %887 = vmatpush2.msra.mxu0 0.0
    %888 = vmatprep.subr.mxu0 0.0
    %889 = vmatpush2.msra.mxu0 0.0
    %890 = vmatprep.subr.mxu0 0.0
    %891 = vmatpush2.msra.mxu0 0.0
    %892 = vmatprep.subr.mxu0 0.0
    %893 = vmatpush2.msra.mxu0 0.0
    %894 = vmatprep.subr.mxu0 0.0
    %895 = vmatpush2.msra.mxu0 0.0
    %896 = vmatprep.subr.mxu0 0.0
    %897 = vmatpush2.msra.mxu0 0.0
    %898 = vmatprep.subr.mxu0 0.0
    %899 = vmatpush2.msra.mxu0 0.0
    %900 = vmatprep.subr.mxu0 0.0
    %901 = vmatpush2.msra.mxu0 0.0
    %902 = vmatprep.subr.mxu0 0.0
    %903 = vmatpush2.msra.mxu0 0.0
    %904 = vmatprep.subr.mxu0 0.0
    %905 = vmatpush2.msra.mxu0 0.0
    %906 = vmatprep.subr.mxu0 0.0
    %907 = vmatpush2.msra.mxu0 0.0
    %908 = vmatprep.subr.mxu0 0.0
    %909 = vmatpush2.msra.mxu0 0.0
    %910 = vmatprep.subr.mxu0 0.0
    %911 = vmatpush2.msra.mxu0 0.0
    %912 = vmatprep.subr.mxu0 0.0
    %913 = vmatpush2.msra.mxu0 0.0
    %914 = vmatprep.subr.mxu0 0.0
    %915 = vmatpush2.msra.mxu0 0.0
    %916 = vmatprep.subr.mxu0 0.0
    %917 = vmatpush2.msra.mxu0 0.0
    %918 = vmatprep.mubr.f32.mxu0 0.0
    %919 = vmatmul.mubr.f32.gmra.mxu0 %v852
    %v920 = vpop.f32.mrf.mxu0
    %v921 = vadd.f32 %v851, %v920
    %v922 = vpop.f32.mrf.mxu0
    %923 = vdwg.mxu0
    %v924 = vld [vmem:[#allocation7] sm:$0xff]
    %v925 = vld [vmem:[#allocation7 + $0x8] sm:$0xff]
    %v926 = vld [vmem:[#allocation11] sm:$0x1]
    %927 = vrot.lane.b32.xlu0 %v836, 64
    %v928 = vpop.permute.xlu0 %927
    %v929 = vsel %vm195, %v928, 0
    %931 = vmatprep.subr.mxu0 0.0
    %932 = vmatpush1.msra.mxu0 0.0
    %933 = vmatprep.subr.mxu0 0.0
    %934 = vmatpush1.msra.mxu0 0.0
    %935 = vmatprep.subr.mxu0 0.0
    %936 = vmatpush1.msra.mxu0 0.0
    %937 = vmatprep.subr.mxu0 0.0
    %938 = vmatpush1.msra.mxu0 0.0
    %939 = vmatprep.subr.mxu0 0.0
    %940 = vmatpush1.msra.mxu0 0.0
    %941 = vmatprep.subr.mxu0 0.0
    %942 = vmatpush1.msra.mxu0 0.0
    %943 = vmatprep.subr.mxu0 0.0
    %944 = vmatpush1.msra.mxu0 0.0
    %945 = vmatprep.subr.mxu0 0.0
    %946 = vmatpush1.msra.mxu0 0.0
    %947 = vmatprep.subr.mxu0 0.0
    %948 = vmatpush1.msra.mxu0 0.0
    %949 = vmatprep.subr.mxu0 0.0
    %950 = vmatpush1.msra.mxu0 0.0
    %951 = vmatprep.subr.mxu0 0.0
    %952 = vmatpush1.msra.mxu0 0.0
    %953 = vmatprep.subr.mxu0 0.0
    %954 = vmatpush1.msra.mxu0 0.0
    %955 = vmatprep.subr.mxu0 0.0
    %956 = vmatpush1.msra.mxu0 0.0
    %957 = vmatprep.subr.mxu0 0.0
    %958 = vmatpush1.msra.mxu0 0.0
    %959 = vmatprep.subr.mxu0 0.0
    %960 = vmatpush1.msra.mxu0 %v925
    %961 = vmatprep.subr.mxu0 0.0
    %962 = vmatpush1.msra.mxu0 %v924
    %963 = vmatprep.subr.mxu0 0.0
    %964 = vmatpush2.msra.mxu0 0.0
    %965 = vmatprep.subr.mxu0 0.0
    %966 = vmatpush2.msra.mxu0 0.0
    %967 = vmatprep.subr.mxu0 0.0
    %968 = vmatpush2.msra.mxu0 0.0
    %969 = vmatprep.subr.mxu0 0.0
    %970 = vmatpush2.msra.mxu0 0.0
    %971 = vmatprep.subr.mxu0 0.0
    %972 = vmatpush2.msra.mxu0 0.0
    %973 = vmatprep.subr.mxu0 0.0
    %974 = vmatpush2.msra.mxu0 0.0
    %975 = vmatprep.subr.mxu0 0.0
    %976 = vmatpush2.msra.mxu0 0.0
    %977 = vmatprep.subr.mxu0 0.0
    %978 = vmatpush2.msra.mxu0 0.0
    %979 = vmatprep.subr.mxu0 0.0
    %980 = vmatpush2.msra.mxu0 0.0
    %981 = vmatprep.subr.mxu0 0.0
    %982 = vmatpush2.msra.mxu0 0.0
    %983 = vmatprep.subr.mxu0 0.0
    %984 = vmatpush2.msra.mxu0 0.0
    %985 = vmatprep.subr.mxu0 0.0
    %986 = vmatpush2.msra.mxu0 0.0
    %987 = vmatprep.subr.mxu0 0.0
    %988 = vmatpush2.msra.mxu0 0.0
    %989 = vmatprep.subr.mxu0 0.0
    %990 = vmatpush2.msra.mxu0 0.0
    %991 = vmatprep.subr.mxu0 0.0
    %992 = vmatpush2.msra.mxu0 0.0
    %993 = vmatprep.subr.mxu0 0.0
    %994 = vmatpush2.msra.mxu0 0.0
    %995 = vmatprep.mubr.f32.mxu0 0.0
    %996 = vmatmul.mubr.f32.gmra.mxu0 %v929
    %v997 = vpop.f32.mrf.mxu0
    %v998 = vadd.f32 %v926, %v997
    %v999 = vpop.f32.mrf.mxu0
    %1000 = vdwg.mxu0
    %v1001 = vadd.f32 %v847, %v921
    %v1002 = vxor.u32 %v1001, 2147483648
    %v1003 = vmul.f32 %v1002, 1.442695
    %v1004 = vpow.pop %v1003
    %v1005 = vadd.f32 %v1004, 1.0
    %v1006 = vrcp.pop %v1005
    %v1007 = vmul.f32 1.0, %v1006
    %1009 = vrot.lane.b32.xlu0 %v921, 96
    %v1010 = vpop.permute.xlu0 %1009
    %v1012 = vmul.f32 %v1007, %v1010
    %1014 = vrot.lane.b32.xlu0 %v1012, 32
    %v1015 = vpop.permute.xlu0 %1014
    %v1017 = vadd.f32 %v847, %v1015
    %v1018 = vtanh.pop %v1017
    %v1019 = vsub.f32 1.0, %v1007
    %1021 = vrot.lane.b32.xlu0 %v1018, 112
    %v1022 = vpop.permute.xlu0 %1021
    %v1024 = vmul.f32 %v1019, %v1022
    %v1025 = vmul.f32 %v1007, %v807
    %v1026 = vadd.f32 %v1024, %v1025
    %1028 = vrot.lane.b32.xlu0 %v998, 48
    %v1029 = vpop.permute.xlu0 %1028
    %v1031 = vadd.f32 %v848, %v1029
    %v1032 = vxor.u32 %v1031, 2147483648
    %v1033 = vmul.f32 %v1032, 1.442695
    %v1034 = vpow.pop %v1033
    %v1035 = vadd.f32 %v1034, 1.0
    %v1036 = vrcp.pop %v1035
    %v1037 = vmul.f32 1.0, %v1036
    %1038 = vrot.lane.b32.xlu0 %v998, 16
    %v1039 = vpop.permute.xlu0 %1038
    %v1041 = vmul.f32 %v1037, %v1039
    %1043 = vrot.lane.b32.xlu0 %v1041, 32
    %v1044 = vpop.permute.xlu0 %1043
    %v1046 = vadd.f32 %v848, %v1044
    %v1047 = vtanh.pop %v1046
    %v1048 = vsub.f32 1.0, %v1037
    %1050 = vrot.lane.b32.xlu0 %v1047, 112
    %v1051 = vpop.permute.xlu0 %1050
    %v1053 = vmul.f32 %v1048, %v1051
    %v1054 = vmul.f32 %v1037, %v836
    %v1055 = vadd.f32 %v1053, %v1054
    %1057 = vrot.lane.b32.xlu0 %v1026, 112
    %v1058 = vpop.permute.xlu0 %1057
    %1060 = vst.msk [vmem:[%s7 + $0x3] sm:$0x1] %vm401, %v1058
    %1062 = vrot.lane.b32.xlu0 %v1055, 80
    %v1063 = vpop.permute.xlu0 %1062
    %1065 = vst.msk [vmem:[%s7 + $0x4] sm:$0x1] %vm407, %v1063
    %v1066 = vld [vmem:[#allocation2 + $0x4] sm:$0x1]
    %v1067 = vld [vmem:[#allocation2 + $0x3] sm:$0x1]
    %v1068 = vld [vmem:[#allocation5] sm:$0xff]
    %v1069 = vld [vmem:[#allocation5 + $0x8] sm:$0xff]
    %v1070 = vld [vmem:[#allocation10] sm:$0x1]
    %v1071 = vsel %vm195, %v1058, 0
    %1073 = vmatprep.subr.mxu0 0.0
    %1074 = vmatpush1.msra.mxu0 0.0
    %1075 = vmatprep.subr.mxu0 0.0
    %1076 = vmatpush1.msra.mxu0 0.0
    %1077 = vmatprep.subr.mxu0 0.0
    %1078 = vmatpush1.msra.mxu0 0.0
    %1079 = vmatprep.subr.mxu0 0.0
    %1080 = vmatpush1.msra.mxu0 0.0
    %1081 = vmatprep.subr.mxu0 0.0
    %1082 = vmatpush1.msra.mxu0 0.0
    %1083 = vmatprep.subr.mxu0 0.0
    %1084 = vmatpush1.msra.mxu0 0.0
    %1085 = vmatprep.subr.mxu0 0.0
    %1086 = vmatpush1.msra.mxu0 0.0
    %1087 = vmatprep.subr.mxu0 0.0
    %1088 = vmatpush1.msra.mxu0 0.0
    %1089 = vmatprep.subr.mxu0 0.0
    %1090 = vmatpush1.msra.mxu0 0.0
    %1091 = vmatprep.subr.mxu0 0.0
    %1092 = vmatpush1.msra.mxu0 0.0
    %1093 = vmatprep.subr.mxu0 0.0
    %1094 = vmatpush1.msra.mxu0 0.0
    %1095 = vmatprep.subr.mxu0 0.0
    %1096 = vmatpush1.msra.mxu0 0.0
    %1097 = vmatprep.subr.mxu0 0.0
    %1098 = vmatpush1.msra.mxu0 0.0
    %1099 = vmatprep.subr.mxu0 0.0
    %1100 = vmatpush1.msra.mxu0 0.0
    %1101 = vmatprep.subr.mxu0 0.0
    %1102 = vmatpush1.msra.mxu0 %v1069
    %1103 = vmatprep.subr.mxu0 0.0
    %1104 = vmatpush1.msra.mxu0 %v1068
    %1105 = vmatprep.subr.mxu0 0.0
    %1106 = vmatpush2.msra.mxu0 0.0
    %1107 = vmatprep.subr.mxu0 0.0
    %1108 = vmatpush2.msra.mxu0 0.0
    %1109 = vmatprep.subr.mxu0 0.0
    %1110 = vmatpush2.msra.mxu0 0.0
    %1111 = vmatprep.subr.mxu0 0.0
    %1112 = vmatpush2.msra.mxu0 0.0
    %1113 = vmatprep.subr.mxu0 0.0
    %1114 = vmatpush2.msra.mxu0 0.0
    %1115 = vmatprep.subr.mxu0 0.0
    %1116 = vmatpush2.msra.mxu0 0.0
    %1117 = vmatprep.subr.mxu0 0.0
    %1118 = vmatpush2.msra.mxu0 0.0
    %1119 = vmatprep.subr.mxu0 0.0
    %1120 = vmatpush2.msra.mxu0 0.0
    %1121 = vmatprep.subr.mxu0 0.0
    %1122 = vmatpush2.msra.mxu0 0.0
    %1123 = vmatprep.subr.mxu0 0.0
    %1124 = vmatpush2.msra.mxu0 0.0
    %1125 = vmatprep.subr.mxu0 0.0
    %1126 = vmatpush2.msra.mxu0 0.0
    %1127 = vmatprep.subr.mxu0 0.0
    %1128 = vmatpush2.msra.mxu0 0.0
    %1129 = vmatprep.subr.mxu0 0.0
    %1130 = vmatpush2.msra.mxu0 0.0
    %1131 = vmatprep.subr.mxu0 0.0
    %1132 = vmatpush2.msra.mxu0 0.0
    %1133 = vmatprep.subr.mxu0 0.0
    %1134 = vmatpush2.msra.mxu0 0.0
    %1135 = vmatprep.subr.mxu0 0.0
    %1136 = vmatpush2.msra.mxu0 0.0
    %1137 = vmatprep.mubr.f32.mxu0 0.0
    %1138 = vmatmul.mubr.f32.gmra.mxu0 %v1071
    %v1139 = vpop.f32.mrf.mxu0
    %v1140 = vadd.f32 %v1070, %v1139
    %v1141 = vpop.f32.mrf.mxu0
    %1142 = vdwg.mxu0
    %v1143 = vld [vmem:[#allocation7] sm:$0xff]
    %v1144 = vld [vmem:[#allocation7 + $0x8] sm:$0xff]
    %v1145 = vld [vmem:[#allocation11] sm:$0x1]
    %1146 = vrot.lane.b32.xlu0 %v1055, 64
    %v1147 = vpop.permute.xlu0 %1146
    %v1148 = vsel %vm195, %v1147, 0
    %1150 = vmatprep.subr.mxu0 0.0
    %1151 = vmatpush1.msra.mxu0 0.0
    %1152 = vmatprep.subr.mxu0 0.0
    %1153 = vmatpush1.msra.mxu0 0.0
    %1154 = vmatprep.subr.mxu0 0.0
    %1155 = vmatpush1.msra.mxu0 0.0
    %1156 = vmatprep.subr.mxu0 0.0
    %1157 = vmatpush1.msra.mxu0 0.0
    %1158 = vmatprep.subr.mxu0 0.0
    %1159 = vmatpush1.msra.mxu0 0.0
    %1160 = vmatprep.subr.mxu0 0.0
    %1161 = vmatpush1.msra.mxu0 0.0
    %1162 = vmatprep.subr.mxu0 0.0
    %1163 = vmatpush1.msra.mxu0 0.0
    %1164 = vmatprep.subr.mxu0 0.0
    %1165 = vmatpush1.msra.mxu0 0.0
    %1166 = vmatprep.subr.mxu0 0.0
    %1167 = vmatpush1.msra.mxu0 0.0
    %1168 = vmatprep.subr.mxu0 0.0
    %1169 = vmatpush1.msra.mxu0 0.0
    %1170 = vmatprep.subr.mxu0 0.0
    %1171 = vmatpush1.msra.mxu0 0.0
    %1172 = vmatprep.subr.mxu0 0.0
    %1173 = vmatpush1.msra.mxu0 0.0
    %1174 = vmatprep.subr.mxu0 0.0
    %1175 = vmatpush1.msra.mxu0 0.0
    %1176 = vmatprep.subr.mxu0 0.0
    %1177 = vmatpush1.msra.mxu0 0.0
    %1178 = vmatprep.subr.mxu0 0.0
    %1179 = vmatpush1.msra.mxu0 %v1144
    %1180 = vmatprep.subr.mxu0 0.0
    %1181 = vmatpush1.msra.mxu0 %v1143
    %1182 = vmatprep.subr.mxu0 0.0
    %1183 = vmatpush2.msra.mxu0 0.0
    %1184 = vmatprep.subr.mxu0 0.0
    %1185 = vmatpush2.msra.mxu0 0.0
    %1186 = vmatprep.subr.mxu0 0.0
    %1187 = vmatpush2.msra.mxu0 0.0
    %1188 = vmatprep.subr.mxu0 0.0
    %1189 = vmatpush2.msra.mxu0 0.0
    %1190 = vmatprep.subr.mxu0 0.0
    %1191 = vmatpush2.msra.mxu0 0.0
    %1192 = vmatprep.subr.mxu0 0.0
    %1193 = vmatpush2.msra.mxu0 0.0
    %1194 = vmatprep.subr.mxu0 0.0
    %1195 = vmatpush2.msra.mxu0 0.0
    %1196 = vmatprep.subr.mxu0 0.0
    %1197 = vmatpush2.msra.mxu0 0.0
    %1198 = vmatprep.subr.mxu0 0.0
    %1199 = vmatpush2.msra.mxu0 0.0
    %1200 = vmatprep.subr.mxu0 0.0
    %1201 = vmatpush2.msra.mxu0 0.0
    %1202 = vmatprep.subr.mxu0 0.0
    %1203 = vmatpush2.msra.mxu0 0.0
    %1204 = vmatprep.subr.mxu0 0.0
    %1205 = vmatpush2.msra.mxu0 0.0
    %1206 = vmatprep.subr.mxu0 0.0
    %1207 = vmatpush2.msra.mxu0 0.0
    %1208 = vmatprep.subr.mxu0 0.0
    %1209 = vmatpush2.msra.mxu0 0.0
    %1210 = vmatprep.subr.mxu0 0.0
    %1211 = vmatpush2.msra.mxu0 0.0
    %1212 = vmatprep.subr.mxu0 0.0
    %1213 = vmatpush2.msra.mxu0 0.0
    %1214 = vmatprep.mubr.f32.mxu0 0.0
    %1215 = vmatmul.mubr.f32.gmra.mxu0 %v1148
    %v1216 = vpop.f32.mrf.mxu0
    %v1217 = vadd.f32 %v1145, %v1216
    %v1218 = vpop.f32.mrf.mxu0
    %1219 = vdwg.mxu0
    %v1220 = vadd.f32 %v1066, %v1140
    %v1221 = vxor.u32 %v1220, 2147483648
    %v1222 = vmul.f32 %v1221, 1.442695
    %v1223 = vpow.pop %v1222
    %v1224 = vadd.f32 %v1223, 1.0
    %v1225 = vrcp.pop %v1224
    %v1226 = vmul.f32 1.0, %v1225
    %1228 = vrot.lane.b32.xlu0 %v1140, 96
    %v1229 = vpop.permute.xlu0 %1228
    %v1231 = vmul.f32 %v1226, %v1229
    %1233 = vrot.lane.b32.xlu0 %v1231, 32
    %v1234 = vpop.permute.xlu0 %1233
    %v1236 = vadd.f32 %v1066, %v1234
    %v1237 = vtanh.pop %v1236
    %v1238 = vsub.f32 1.0, %v1226
    %1240 = vrot.lane.b32.xlu0 %v1237, 112
    %v1241 = vpop.permute.xlu0 %1240
    %v1243 = vmul.f32 %v1238, %v1241
    %v1244 = vmul.f32 %v1226, %v1026
    %v1245 = vadd.f32 %v1243, %v1244
    %1247 = vrot.lane.b32.xlu0 %v1217, 48
    %v1248 = vpop.permute.xlu0 %1247
    %v1250 = vadd.f32 %v1067, %v1248
    %v1251 = vxor.u32 %v1250, 2147483648
    %v1252 = vmul.f32 %v1251, 1.442695
    %v1253 = vpow.pop %v1252
    %v1254 = vadd.f32 %v1253, 1.0
    %v1255 = vrcp.pop %v1254
    %v1256 = vmul.f32 1.0, %v1255
    %1257 = vrot.lane.b32.xlu0 %v1217, 16
    %v1258 = vpop.permute.xlu0 %1257
    %v1260 = vmul.f32 %v1256, %v1258
    %1262 = vrot.lane.b32.xlu0 %v1260, 32
    %v1263 = vpop.permute.xlu0 %1262
    %v1265 = vadd.f32 %v1067, %v1263
    %v1266 = vtanh.pop %v1265
    %v1267 = vsub.f32 1.0, %v1256
    %1269 = vrot.lane.b32.xlu0 %v1266, 112
    %v1270 = vpop.permute.xlu0 %1269
    %v1272 = vmul.f32 %v1267, %v1270
    %v1273 = vmul.f32 %v1256, %v1055
    %v1274 = vadd.f32 %v1272, %v1273
    %1276 = vrot.lane.b32.xlu0 %v1245, 112
    %v1277 = vpop.permute.xlu0 %1276
    %1279 = vst.msk [vmem:[%s7 + $0x4] sm:$0x1] %vm401, %v1277
    %1281 = vrot.lane.b32.xlu0 %v1274, 80
    %v1282 = vpop.permute.xlu0 %1281
    %1284 = vst.msk [vmem:[%s7 + $0x3] sm:$0x1] %vm407, %v1282
    %v1285 = vld [vmem:[#allocation2 + $0x5] sm:$0x1]
    %v1286 = vld [vmem:[#allocation2 + $0x2] sm:$0x1]
    %v1287 = vld [vmem:[#allocation5] sm:$0xff]
    %v1288 = vld [vmem:[#allocation5 + $0x8] sm:$0xff]
    %v1289 = vld [vmem:[#allocation10] sm:$0x1]
    %v1290 = vsel %vm195, %v1277, 0
    %1292 = vmatprep.subr.mxu0 0.0
    %1293 = vmatpush1.msra.mxu0 0.0
    %1294 = vmatprep.subr.mxu0 0.0
    %1295 = vmatpush1.msra.mxu0 0.0
    %1296 = vmatprep.subr.mxu0 0.0
    %1297 = vmatpush1.msra.mxu0 0.0
    %1298 = vmatprep.subr.mxu0 0.0
    %1299 = vmatpush1.msra.mxu0 0.0
    %1300 = vmatprep.subr.mxu0 0.0
    %1301 = vmatpush1.msra.mxu0 0.0
    %1302 = vmatprep.subr.mxu0 0.0
    %1303 = vmatpush1.msra.mxu0 0.0
    %1304 = vmatprep.subr.mxu0 0.0
    %1305 = vmatpush1.msra.mxu0 0.0
    %1306 = vmatprep.subr.mxu0 0.0
    %1307 = vmatpush1.msra.mxu0 0.0
    %1308 = vmatprep.subr.mxu0 0.0
    %1309 = vmatpush1.msra.mxu0 0.0
    %1310 = vmatprep.subr.mxu0 0.0
    %1311 = vmatpush1.msra.mxu0 0.0
    %1312 = vmatprep.subr.mxu0 0.0
    %1313 = vmatpush1.msra.mxu0 0.0
    %1314 = vmatprep.subr.mxu0 0.0
    %1315 = vmatpush1.msra.mxu0 0.0
    %1316 = vmatprep.subr.mxu0 0.0
    %1317 = vmatpush1.msra.mxu0 0.0
    %1318 = vmatprep.subr.mxu0 0.0
    %1319 = vmatpush1.msra.mxu0 0.0
    %1320 = vmatprep.subr.mxu0 0.0
    %1321 = vmatpush1.msra.mxu0 %v1288
    %1322 = vmatprep.subr.mxu0 0.0
    %1323 = vmatpush1.msra.mxu0 %v1287
    %1324 = vmatprep.subr.mxu0 0.0
    %1325 = vmatpush2.msra.mxu0 0.0
    %1326 = vmatprep.subr.mxu0 0.0
    %1327 = vmatpush2.msra.mxu0 0.0
    %1328 = vmatprep.subr.mxu0 0.0
    %1329 = vmatpush2.msra.mxu0 0.0
    %1330 = vmatprep.subr.mxu0 0.0
    %1331 = vmatpush2.msra.mxu0 0.0
    %1332 = vmatprep.subr.mxu0 0.0
    %1333 = vmatpush2.msra.mxu0 0.0
    %1334 = vmatprep.subr.mxu0 0.0
    %1335 = vmatpush2.msra.mxu0 0.0
    %1336 = vmatprep.subr.mxu0 0.0
    %1337 = vmatpush2.msra.mxu0 0.0
    %1338 = vmatprep.subr.mxu0 0.0
    %1339 = vmatpush2.msra.mxu0 0.0
    %1340 = vmatprep.subr.mxu0 0.0
    %1341 = vmatpush2.msra.mxu0 0.0
    %1342 = vmatprep.subr.mxu0 0.0
    %1343 = vmatpush2.msra.mxu0 0.0
    %1344 = vmatprep.subr.mxu0 0.0
    %1345 = vmatpush2.msra.mxu0 0.0
    %1346 = vmatprep.subr.mxu0 0.0
    %1347 = vmatpush2.msra.mxu0 0.0
    %1348 = vmatprep.subr.mxu0 0.0
    %1349 = vmatpush2.msra.mxu0 0.0
    %1350 = vmatprep.subr.mxu0 0.0
    %1351 = vmatpush2.msra.mxu0 0.0
    %1352 = vmatprep.subr.mxu0 0.0
    %1353 = vmatpush2.msra.mxu0 0.0
    %1354 = vmatprep.subr.mxu0 0.0
    %1355 = vmatpush2.msra.mxu0 0.0
    %1356 = vmatprep.mubr.f32.mxu0 0.0
    %1357 = vmatmul.mubr.f32.gmra.mxu0 %v1290
    %v1358 = vpop.f32.mrf.mxu0
    %v1359 = vadd.f32 %v1289, %v1358
    %v1360 = vpop.f32.mrf.mxu0
    %1361 = vdwg.mxu0
    %v1362 = vld [vmem:[#allocation7] sm:$0xff]
    %v1363 = vld [vmem:[#allocation7 + $0x8] sm:$0xff]
    %v1364 = vld [vmem:[#allocation11] sm:$0x1]
    %1365 = vrot.lane.b32.xlu0 %v1274, 64
    %v1366 = vpop.permute.xlu0 %1365
    %v1367 = vsel %vm195, %v1366, 0
    %1369 = vmatprep.subr.mxu0 0.0
    %1370 = vmatpush1.msra.mxu0 0.0
    %1371 = vmatprep.subr.mxu0 0.0
    %1372 = vmatpush1.msra.mxu0 0.0
    %1373 = vmatprep.subr.mxu0 0.0
    %1374 = vmatpush1.msra.mxu0 0.0
    %1375 = vmatprep.subr.mxu0 0.0
    %1376 = vmatpush1.msra.mxu0 0.0
    %1377 = vmatprep.subr.mxu0 0.0
    %1378 = vmatpush1.msra.mxu0 0.0
    %1379 = vmatprep.subr.mxu0 0.0
    %1380 = vmatpush1.msra.mxu0 0.0
    %1381 = vmatprep.subr.mxu0 0.0
    %1382 = vmatpush1.msra.mxu0 0.0
    %1383 = vmatprep.subr.mxu0 0.0
    %1384 = vmatpush1.msra.mxu0 0.0
    %1385 = vmatprep.subr.mxu0 0.0
    %1386 = vmatpush1.msra.mxu0 0.0
    %1387 = vmatprep.subr.mxu0 0.0
    %1388 = vmatpush1.msra.mxu0 0.0
    %1389 = vmatprep.subr.mxu0 0.0
    %1390 = vmatpush1.msra.mxu0 0.0
    %1391 = vmatprep.subr.mxu0 0.0
    %1392 = vmatpush1.msra.mxu0 0.0
    %1393 = vmatprep.subr.mxu0 0.0
    %1394 = vmatpush1.msra.mxu0 0.0
    %1395 = vmatprep.subr.mxu0 0.0
    %1396 = vmatpush1.msra.mxu0 0.0
    %1397 = vmatprep.subr.mxu0 0.0
    %1398 = vmatpush1.msra.mxu0 %v1363
    %1399 = vmatprep.subr.mxu0 0.0
    %1400 = vmatpush1.msra.mxu0 %v1362
    %1401 = vmatprep.subr.mxu0 0.0
    %1402 = vmatpush2.msra.mxu0 0.0
    %1403 = vmatprep.subr.mxu0 0.0
    %1404 = vmatpush2.msra.mxu0 0.0
    %1405 = vmatprep.subr.mxu0 0.0
    %1406 = vmatpush2.msra.mxu0 0.0
    %1407 = vmatprep.subr.mxu0 0.0
    %1408 = vmatpush2.msra.mxu0 0.0
    %1409 = vmatprep.subr.mxu0 0.0
    %1410 = vmatpush2.msra.mxu0 0.0
    %1411 = vmatprep.subr.mxu0 0.0
    %1412 = vmatpush2.msra.mxu0 0.0
    %1413 = vmatprep.subr.mxu0 0.0
    %1414 = vmatpush2.msra.mxu0 0.0
    %1415 = vmatprep.subr.mxu0 0.0
    %1416 = vmatpush2.msra.mxu0 0.0
    %1417 = vmatprep.subr.mxu0 0.0
    %1418 = vmatpush2.msra.mxu0 0.0
    %1419 = vmatprep.subr.mxu0 0.0
    %1420 = vmatpush2.msra.mxu0 0.0
    %1421 = vmatprep.subr.mxu0 0.0
    %1422 = vmatpush2.msra.mxu0 0.0
    %1423 = vmatprep.subr.mxu0 0.0
    %1424 = vmatpush2.msra.mxu0 0.0
    %1425 = vmatprep.subr.mxu0 0.0
    %1426 = vmatpush2.msra.mxu0 0.0
    %1427 = vmatprep.subr.mxu0 0.0
    %1428 = vmatpush2.msra.mxu0 0.0
    %1429 = vmatprep.subr.mxu0 0.0
    %1430 = vmatpush2.msra.mxu0 0.0
    %1431 = vmatprep.subr.mxu0 0.0
    %1432 = vmatpush2.msra.mxu0 0.0
    %1433 = vmatprep.mubr.f32.mxu0 0.0
    %1434 = vmatmul.mubr.f32.gmra.mxu0 %v1367
    %v1435 = vpop.f32.mrf.mxu0
    %v1436 = vadd.f32 %v1364, %v1435
    %v1437 = vpop.f32.mrf.mxu0
    %1438 = vdwg.mxu0
    %v1439 = vadd.f32 %v1285, %v1359
    %v1440 = vxor.u32 %v1439, 2147483648
    %v1441 = vmul.f32 %v1440, 1.442695
    %v1442 = vpow.pop %v1441
    %v1443 = vadd.f32 %v1442, 1.0
    %v1444 = vrcp.pop %v1443
    %v1445 = vmul.f32 1.0, %v1444
    %1447 = vrot.lane.b32.xlu0 %v1359, 96
    %v1448 = vpop.permute.xlu0 %1447
    %v1450 = vmul.f32 %v1445, %v1448
    %1452 = vrot.lane.b32.xlu0 %v1450, 32
    %v1453 = vpop.permute.xlu0 %1452
    %v1455 = vadd.f32 %v1285, %v1453
    %v1456 = vtanh.pop %v1455
    %v1457 = vsub.f32 1.0, %v1445
    %1459 = vrot.lane.b32.xlu0 %v1456, 112
    %v1460 = vpop.permute.xlu0 %1459
    %v1462 = vmul.f32 %v1457, %v1460
    %v1463 = vmul.f32 %v1445, %v1245
    %v1464 = vadd.f32 %v1462, %v1463
    %1466 = vrot.lane.b32.xlu0 %v1436, 48
    %v1467 = vpop.permute.xlu0 %1466
    %v1469 = vadd.f32 %v1286, %v1467
    %v1470 = vxor.u32 %v1469, 2147483648
    %v1471 = vmul.f32 %v1470, 1.442695
    %v1472 = vpow.pop %v1471
    %v1473 = vadd.f32 %v1472, 1.0
    %v1474 = vrcp.pop %v1473
    %v1475 = vmul.f32 1.0, %v1474
    %1476 = vrot.lane.b32.xlu0 %v1436, 16
    %v1477 = vpop.permute.xlu0 %1476
    %v1479 = vmul.f32 %v1475, %v1477
    %1481 = vrot.lane.b32.xlu0 %v1479, 32
    %v1482 = vpop.permute.xlu0 %1481
    %v1484 = vadd.f32 %v1286, %v1482
    %v1485 = vtanh.pop %v1484
    %v1486 = vsub.f32 1.0, %v1475
    %1488 = vrot.lane.b32.xlu0 %v1485, 112
    %v1489 = vpop.permute.xlu0 %1488
    %v1491 = vmul.f32 %v1486, %v1489
    %v1492 = vmul.f32 %v1475, %v1274
    %v1493 = vadd.f32 %v1491, %v1492
    %1495 = vrot.lane.b32.xlu0 %v1464, 112
    %v1496 = vpop.permute.xlu0 %1495
    %1498 = vst.msk [vmem:[%s7 + $0x5] sm:$0x1] %vm401, %v1496
    %1500 = vrot.lane.b32.xlu0 %v1493, 80
    %v1501 = vpop.permute.xlu0 %1500
    %1503 = vst.msk [vmem:[%s7 + $0x2] sm:$0x1] %vm407, %v1501
    %v1504 = vld [vmem:[#allocation2 + $0x6] sm:$0x1]
    %v1505 = vld [vmem:[#allocation2 + $0x1] sm:$0x1]
    %v1506 = vld [vmem:[#allocation5] sm:$0xff]
    %v1507 = vld [vmem:[#allocation5 + $0x8] sm:$0xff]
    %v1508 = vld [vmem:[#allocation10] sm:$0x1]
    %v1509 = vsel %vm195, %v1496, 0
    %1511 = vmatprep.subr.mxu0 0.0
    %1512 = vmatpush1.msra.mxu0 0.0
    %1513 = vmatprep.subr.mxu0 0.0
    %1514 = vmatpush1.msra.mxu0 0.0
    %1515 = vmatprep.subr.mxu0 0.0
    %1516 = vmatpush1.msra.mxu0 0.0
    %1517 = vmatprep.subr.mxu0 0.0
    %1518 = vmatpush1.msra.mxu0 0.0
    %1519 = vmatprep.subr.mxu0 0.0
    %1520 = vmatpush1.msra.mxu0 0.0
    %1521 = vmatprep.subr.mxu0 0.0
    %1522 = vmatpush1.msra.mxu0 0.0
    %1523 = vmatprep.subr.mxu0 0.0
    %1524 = vmatpush1.msra.mxu0 0.0
    %1525 = vmatprep.subr.mxu0 0.0
    %1526 = vmatpush1.msra.mxu0 0.0
    %1527 = vmatprep.subr.mxu0 0.0
    %1528 = vmatpush1.msra.mxu0 0.0
    %1529 = vmatprep.subr.mxu0 0.0
    %1530 = vmatpush1.msra.mxu0 0.0
    %1531 = vmatprep.subr.mxu0 0.0
    %1532 = vmatpush1.msra.mxu0 0.0
    %1533 = vmatprep.subr.mxu0 0.0
    %1534 = vmatpush1.msra.mxu0 0.0
    %1535 = vmatprep.subr.mxu0 0.0
    %1536 = vmatpush1.msra.mxu0 0.0
    %1537 = vmatprep.subr.mxu0 0.0
    %1538 = vmatpush1.msra.mxu0 0.0
    %1539 = vmatprep.subr.mxu0 0.0
    %1540 = vmatpush1.msra.mxu0 %v1507
    %1541 = vmatprep.subr.mxu0 0.0
    %1542 = vmatpush1.msra.mxu0 %v1506
    %1543 = vmatprep.subr.mxu0 0.0
    %1544 = vmatpush2.msra.mxu0 0.0
    %1545 = vmatprep.subr.mxu0 0.0
    %1546 = vmatpush2.msra.mxu0 0.0
    %1547 = vmatprep.subr.mxu0 0.0
    %1548 = vmatpush2.msra.mxu0 0.0
    %1549 = vmatprep.subr.mxu0 0.0
    %1550 = vmatpush2.msra.mxu0 0.0
    %1551 = vmatprep.subr.mxu0 0.0
    %1552 = vmatpush2.msra.mxu0 0.0
    %1553 = vmatprep.subr.mxu0 0.0
    %1554 = vmatpush2.msra.mxu0 0.0
    %1555 = vmatprep.subr.mxu0 0.0
    %1556 = vmatpush2.msra.mxu0 0.0
    %1557 = vmatprep.subr.mxu0 0.0
    %1558 = vmatpush2.msra.mxu0 0.0
    %1559 = vmatprep.subr.mxu0 0.0
    %1560 = vmatpush2.msra.mxu0 0.0
    %1561 = vmatprep.subr.mxu0 0.0
    %1562 = vmatpush2.msra.mxu0 0.0
    %1563 = vmatprep.subr.mxu0 0.0
    %1564 = vmatpush2.msra.mxu0 0.0
    %1565 = vmatprep.subr.mxu0 0.0
    %1566 = vmatpush2.msra.mxu0 0.0
    %1567 = vmatprep.subr.mxu0 0.0
    %1568 = vmatpush2.msra.mxu0 0.0
    %1569 = vmatprep.subr.mxu0 0.0
    %1570 = vmatpush2.msra.mxu0 0.0
    %1571 = vmatprep.subr.mxu0 0.0
    %1572 = vmatpush2.msra.mxu0 0.0
    %1573 = vmatprep.subr.mxu0 0.0
    %1574 = vmatpush2.msra.mxu0 0.0
    %1575 = vmatprep.mubr.f32.mxu0 0.0
    %1576 = vmatmul.mubr.f32.gmra.mxu0 %v1509
    %v1577 = vpop.f32.mrf.mxu0
    %v1578 = vadd.f32 %v1508, %v1577
    %v1579 = vpop.f32.mrf.mxu0
    %1580 = vdwg.mxu0
    %v1581 = vld [vmem:[#allocation7] sm:$0xff]
    %v1582 = vld [vmem:[#allocation7 + $0x8] sm:$0xff]
    %v1583 = vld [vmem:[#allocation11] sm:$0x1]
    %1584 = vrot.lane.b32.xlu0 %v1493, 64
    %v1585 = vpop.permute.xlu0 %1584
    %v1586 = vsel %vm195, %v1585, 0
    %1588 = vmatprep.subr.mxu0 0.0
    %1589 = vmatpush1.msra.mxu0 0.0
    %1590 = vmatprep.subr.mxu0 0.0
    %1591 = vmatpush1.msra.mxu0 0.0
    %1592 = vmatprep.subr.mxu0 0.0
    %1593 = vmatpush1.msra.mxu0 0.0
    %1594 = vmatprep.subr.mxu0 0.0
    %1595 = vmatpush1.msra.mxu0 0.0
    %1596 = vmatprep.subr.mxu0 0.0
    %1597 = vmatpush1.msra.mxu0 0.0
    %1598 = vmatprep.subr.mxu0 0.0
    %1599 = vmatpush1.msra.mxu0 0.0
    %1600 = vmatprep.subr.mxu0 0.0
    %1601 = vmatpush1.msra.mxu0 0.0
    %1602 = vmatprep.subr.mxu0 0.0
    %1603 = vmatpush1.msra.mxu0 0.0
    %1604 = vmatprep.subr.mxu0 0.0
    %1605 = vmatpush1.msra.mxu0 0.0
    %1606 = vmatprep.subr.mxu0 0.0
    %1607 = vmatpush1.msra.mxu0 0.0
    %1608 = vmatprep.subr.mxu0 0.0
    %1609 = vmatpush1.msra.mxu0 0.0
    %1610 = vmatprep.subr.mxu0 0.0
    %1611 = vmatpush1.msra.mxu0 0.0
    %1612 = vmatprep.subr.mxu0 0.0
    %1613 = vmatpush1.msra.mxu0 0.0
    %1614 = vmatprep.subr.mxu0 0.0
    %1615 = vmatpush1.msra.mxu0 0.0
    %1616 = vmatprep.subr.mxu0 0.0
    %1617 = vmatpush1.msra.mxu0 %v1582
    %1618 = vmatprep.subr.mxu0 0.0
    %1619 = vmatpush1.msra.mxu0 %v1581
    %1620 = vmatprep.subr.mxu0 0.0
    %1621 = vmatpush2.msra.mxu0 0.0
    %1622 = vmatprep.subr.mxu0 0.0
    %1623 = vmatpush2.msra.mxu0 0.0
    %1624 = vmatprep.subr.mxu0 0.0
    %1625 = vmatpush2.msra.mxu0 0.0
    %1626 = vmatprep.subr.mxu0 0.0
    %1627 = vmatpush2.msra.mxu0 0.0
    %1628 = vmatprep.subr.mxu0 0.0
    %1629 = vmatpush2.msra.mxu0 0.0
    %1630 = vmatprep.subr.mxu0 0.0
    %1631 = vmatpush2.msra.mxu0 0.0
    %1632 = vmatprep.subr.mxu0 0.0
    %1633 = vmatpush2.msra.mxu0 0.0
    %1634 = vmatprep.subr.mxu0 0.0
    %1635 = vmatpush2.msra.mxu0 0.0
    %1636 = vmatprep.subr.mxu0 0.0
    %1637 = vmatpush2.msra.mxu0 0.0
    %1638 = vmatprep.subr.mxu0 0.0
    %1639 = vmatpush2.msra.mxu0 0.0
    %1640 = vmatprep.subr.mxu0 0.0
    %1641 = vmatpush2.msra.mxu0 0.0
    %1642 = vmatprep.subr.mxu0 0.0
    %1643 = vmatpush2.msra.mxu0 0.0
    %1644 = vmatprep.subr.mxu0 0.0
    %1645 = vmatpush2.msra.mxu0 0.0
    %1646 = vmatprep.subr.mxu0 0.0
    %1647 = vmatpush2.msra.mxu0 0.0
    %1648 = vmatprep.subr.mxu0 0.0
    %1649 = vmatpush2.msra.mxu0 0.0
    %1650 = vmatprep.subr.mxu0 0.0
    %1651 = vmatpush2.msra.mxu0 0.0
    %1652 = vmatprep.mubr.f32.mxu0 0.0
    %1653 = vmatmul.mubr.f32.gmra.mxu0 %v1586
    %v1654 = vpop.f32.mrf.mxu0
    %v1655 = vadd.f32 %v1583, %v1654
    %v1656 = vpop.f32.mrf.mxu0
    %1657 = vdwg.mxu0
    %v1658 = vadd.f32 %v1504, %v1578
    %v1659 = vxor.u32 %v1658, 2147483648
    %v1660 = vmul.f32 %v1659, 1.442695
    %v1661 = vpow.pop %v1660
    %v1662 = vadd.f32 %v1661, 1.0
    %v1663 = vrcp.pop %v1662
    %v1664 = vmul.f32 1.0, %v1663
    %1666 = vrot.lane.b32.xlu0 %v1578, 96
    %v1667 = vpop.permute.xlu0 %1666
    %v1669 = vmul.f32 %v1664, %v1667
    %1671 = vrot.lane.b32.xlu0 %v1669, 32
    %v1672 = vpop.permute.xlu0 %1671
    %v1674 = vadd.f32 %v1504, %v1672
    %v1675 = vtanh.pop %v1674
    %v1676 = vsub.f32 1.0, %v1664
    %1678 = vrot.lane.b32.xlu0 %v1675, 112
    %v1679 = vpop.permute.xlu0 %1678
    %v1681 = vmul.f32 %v1676, %v1679
    %v1682 = vmul.f32 %v1664, %v1464
    %v1683 = vadd.f32 %v1681, %v1682
    %1685 = vrot.lane.b32.xlu0 %v1655, 48
    %v1686 = vpop.permute.xlu0 %1685
    %v1688 = vadd.f32 %v1505, %v1686
    %v1689 = vxor.u32 %v1688, 2147483648
    %v1690 = vmul.f32 %v1689, 1.442695
    %v1691 = vpow.pop %v1690
    %v1692 = vadd.f32 %v1691, 1.0
    %v1693 = vrcp.pop %v1692
    %v1694 = vmul.f32 1.0, %v1693
    %1695 = vrot.lane.b32.xlu0 %v1655, 16
    %v1696 = vpop.permute.xlu0 %1695
    %v1698 = vmul.f32 %v1694, %v1696
    %1700 = vrot.lane.b32.xlu0 %v1698, 32
    %v1701 = vpop.permute.xlu0 %1700
    %v1703 = vadd.f32 %v1505, %v1701
    %v1704 = vtanh.pop %v1703
    %v1705 = vsub.f32 1.0, %v1694
    %1707 = vrot.lane.b32.xlu0 %v1704, 112
    %v1708 = vpop.permute.xlu0 %1707
    %v1710 = vmul.f32 %v1705, %v1708
    %v1711 = vmul.f32 %v1694, %v1493
    %v1712 = vadd.f32 %v1710, %v1711
    %1714 = vrot.lane.b32.xlu0 %v1683, 112
    %v1715 = vpop.permute.xlu0 %1714
    %1717 = vst.msk [vmem:[%s7 + $0x6] sm:$0x1] %vm401, %v1715
    %1719 = vrot.lane.b32.xlu0 %v1712, 80
    %v1720 = vpop.permute.xlu0 %1719
    %1722 = vst.msk [vmem:[%s7 + $0x1] sm:$0x1] %vm407, %v1720
    %v1723 = vld [vmem:[#allocation2 + $0x7] sm:$0x1]
    %v1724 = vld [vmem:[#allocation2] sm:$0x1]
    %v1725 = vld [vmem:[#allocation5] sm:$0xff]
    %v1726 = vld [vmem:[#allocation5 + $0x8] sm:$0xff]
    %v1727 = vld [vmem:[#allocation10] sm:$0x1]
    %v1728 = vsel %vm195, %v1715, 0
    %1730 = vmatprep.subr.mxu0 0.0
    %1731 = vmatpush1.msra.mxu0 0.0
    %1732 = vmatprep.subr.mxu0 0.0
    %1733 = vmatpush1.msra.mxu0 0.0
    %1734 = vmatprep.subr.mxu0 0.0
    %1735 = vmatpush1.msra.mxu0 0.0
    %1736 = vmatprep.subr.mxu0 0.0
    %1737 = vmatpush1.msra.mxu0 0.0
    %1738 = vmatprep.subr.mxu0 0.0
    %1739 = vmatpush1.msra.mxu0 0.0
    %1740 = vmatprep.subr.mxu0 0.0
    %1741 = vmatpush1.msra.mxu0 0.0
    %1742 = vmatprep.subr.mxu0 0.0
    %1743 = vmatpush1.msra.mxu0 0.0
    %1744 = vmatprep.subr.mxu0 0.0
    %1745 = vmatpush1.msra.mxu0 0.0
    %1746 = vmatprep.subr.mxu0 0.0
    %1747 = vmatpush1.msra.mxu0 0.0
    %1748 = vmatprep.subr.mxu0 0.0
    %1749 = vmatpush1.msra.mxu0 0.0
    %1750 = vmatprep.subr.mxu0 0.0
    %1751 = vmatpush1.msra.mxu0 0.0
    %1752 = vmatprep.subr.mxu0 0.0
    %1753 = vmatpush1.msra.mxu0 0.0
    %1754 = vmatprep.subr.mxu0 0.0
    %1755 = vmatpush1.msra.mxu0 0.0
    %1756 = vmatprep.subr.mxu0 0.0
    %1757 = vmatpush1.msra.mxu0 0.0
    %1758 = vmatprep.subr.mxu0 0.0
    %1759 = vmatpush1.msra.mxu0 %v1726
    %1760 = vmatprep.subr.mxu0 0.0
    %1761 = vmatpush1.msra.mxu0 %v1725
    %1762 = vmatprep.subr.mxu0 0.0
    %1763 = vmatpush2.msra.mxu0 0.0
    %1764 = vmatprep.subr.mxu0 0.0
    %1765 = vmatpush2.msra.mxu0 0.0
    %1766 = vmatprep.subr.mxu0 0.0
    %1767 = vmatpush2.msra.mxu0 0.0
    %1768 = vmatprep.subr.mxu0 0.0
    %1769 = vmatpush2.msra.mxu0 0.0
    %1770 = vmatprep.subr.mxu0 0.0
    %1771 = vmatpush2.msra.mxu0 0.0
    %1772 = vmatprep.subr.mxu0 0.0
    %1773 = vmatpush2.msra.mxu0 0.0
    %1774 = vmatprep.subr.mxu0 0.0
    %1775 = vmatpush2.msra.mxu0 0.0
    %1776 = vmatprep.subr.mxu0 0.0
    %1777 = vmatpush2.msra.mxu0 0.0
    %1778 = vmatprep.subr.mxu0 0.0
    %1779 = vmatpush2.msra.mxu0 0.0
    %1780 = vmatprep.subr.mxu0 0.0
    %1781 = vmatpush2.msra.mxu0 0.0
    %1782 = vmatprep.subr.mxu0 0.0
    %1783 = vmatpush2.msra.mxu0 0.0
    %1784 = vmatprep.subr.mxu0 0.0
    %1785 = vmatpush2.msra.mxu0 0.0
    %1786 = vmatprep.subr.mxu0 0.0
    %1787 = vmatpush2.msra.mxu0 0.0
    %1788 = vmatprep.subr.mxu0 0.0
    %1789 = vmatpush2.msra.mxu0 0.0
    %1790 = vmatprep.subr.mxu0 0.0
    %1791 = vmatpush2.msra.mxu0 0.0
    %1792 = vmatprep.subr.mxu0 0.0
    %1793 = vmatpush2.msra.mxu0 0.0
    %1794 = vmatprep.mubr.f32.mxu0 0.0
    %1795 = vmatmul.mubr.f32.gmra.mxu0 %v1728
    %v1796 = vpop.f32.mrf.mxu0
    %v1797 = vadd.f32 %v1727, %v1796
    %v1798 = vpop.f32.mrf.mxu0
    %1799 = vdwg.mxu0
    %v1800 = vld [vmem:[#allocation7] sm:$0xff]
    %v1801 = vld [vmem:[#allocation7 + $0x8] sm:$0xff]
    %v1802 = vld [vmem:[#allocation11] sm:$0x1]
    %1803 = vrot.lane.b32.xlu0 %v1712, 64
    %v1804 = vpop.permute.xlu0 %1803
    %v1805 = vsel %vm195, %v1804, 0
    %1807 = vmatprep.subr.mxu0 0.0
    %1808 = vmatpush1.msra.mxu0 0.0
    %1809 = vmatprep.subr.mxu0 0.0
    %1810 = vmatpush1.msra.mxu0 0.0
    %1811 = vmatprep.subr.mxu0 0.0
    %1812 = vmatpush1.msra.mxu0 0.0
    %1813 = vmatprep.subr.mxu0 0.0
    %1814 = vmatpush1.msra.mxu0 0.0
    %1815 = vmatprep.subr.mxu0 0.0
    %1816 = vmatpush1.msra.mxu0 0.0
    %1817 = vmatprep.subr.mxu0 0.0
    %1818 = vmatpush1.msra.mxu0 0.0
    %1819 = vmatprep.subr.mxu0 0.0
    %1820 = vmatpush1.msra.mxu0 0.0
    %1821 = vmatprep.subr.mxu0 0.0
    %1822 = vmatpush1.msra.mxu0 0.0
    %1823 = vmatprep.subr.mxu0 0.0
    %1824 = vmatpush1.msra.mxu0 0.0
    %1825 = vmatprep.subr.mxu0 0.0
    %1826 = vmatpush1.msra.mxu0 0.0
    %1827 = vmatprep.subr.mxu0 0.0
    %1828 = vmatpush1.msra.mxu0 0.0
    %1829 = vmatprep.subr.mxu0 0.0
    %1830 = vmatpush1.msra.mxu0 0.0
    %1831 = vmatprep.subr.mxu0 0.0
    %1832 = vmatpush1.msra.mxu0 0.0
    %1833 = vmatprep.subr.mxu0 0.0
    %1834 = vmatpush1.msra.mxu0 0.0
    %1835 = vmatprep.subr.mxu0 0.0
    %1836 = vmatpush1.msra.mxu0 %v1801
    %1837 = vmatprep.subr.mxu0 0.0
    %1838 = vmatpush1.msra.mxu0 %v1800
    %1839 = vmatprep.subr.mxu0 0.0
    %1840 = vmatpush2.msra.mxu0 0.0
    %1841 = vmatprep.subr.mxu0 0.0
    %1842 = vmatpush2.msra.mxu0 0.0
    %1843 = vmatprep.subr.mxu0 0.0
    %1844 = vmatpush2.msra.mxu0 0.0
    %1845 = vmatprep.subr.mxu0 0.0
    %1846 = vmatpush2.msra.mxu0 0.0
    %1847 = vmatprep.subr.mxu0 0.0
    %1848 = vmatpush2.msra.mxu0 0.0
    %1849 = vmatprep.subr.mxu0 0.0
    %1850 = vmatpush2.msra.mxu0 0.0
    %1851 = vmatprep.subr.mxu0 0.0
    %1852 = vmatpush2.msra.mxu0 0.0
    %1853 = vmatprep.subr.mxu0 0.0
    %1854 = vmatpush2.msra.mxu0 0.0
    %1855 = vmatprep.subr.mxu0 0.0
    %1856 = vmatpush2.msra.mxu0 0.0
    %1857 = vmatprep.subr.mxu0 0.0
    %1858 = vmatpush2.msra.mxu0 0.0
    %1859 = vmatprep.subr.mxu0 0.0
    %1860 = vmatpush2.msra.mxu0 0.0
    %1861 = vmatprep.subr.mxu0 0.0
    %1862 = vmatpush2.msra.mxu0 0.0
    %1863 = vmatprep.subr.mxu0 0.0
    %1864 = vmatpush2.msra.mxu0 0.0
    %1865 = vmatprep.subr.mxu0 0.0
    %1866 = vmatpush2.msra.mxu0 0.0
    %1867 = vmatprep.subr.mxu0 0.0
    %1868 = vmatpush2.msra.mxu0 0.0
    %1869 = vmatprep.subr.mxu0 0.0
    %1870 = vmatpush2.msra.mxu0 0.0
    %1871 = vmatprep.mubr.f32.mxu0 0.0
    %1872 = vmatmul.mubr.f32.gmra.mxu0 %v1805
    %v1873 = vpop.f32.mrf.mxu0
    %v1874 = vadd.f32 %v1802, %v1873
    %v1875 = vpop.f32.mrf.mxu0
    %1876 = vdwg.mxu0
    %v1877 = vadd.f32 %v1723, %v1797
    %v1878 = vxor.u32 %v1877, 2147483648
    %v1879 = vmul.f32 %v1878, 1.442695
    %v1880 = vpow.pop %v1879
    %v1881 = vadd.f32 %v1880, 1.0
    %v1882 = vrcp.pop %v1881
    %v1883 = vmul.f32 1.0, %v1882
    %1885 = vrot.lane.b32.xlu0 %v1797, 96
    %v1886 = vpop.permute.xlu0 %1885
    %v1888 = vmul.f32 %v1883, %v1886
    %1890 = vrot.lane.b32.xlu0 %v1888, 32
    %v1891 = vpop.permute.xlu0 %1890
    %v1893 = vadd.f32 %v1723, %v1891
    %v1894 = vtanh.pop %v1893
    %v1895 = vsub.f32 1.0, %v1883
    %1897 = vrot.lane.b32.xlu0 %v1894, 112
    %v1898 = vpop.permute.xlu0 %1897
    %v1900 = vmul.f32 %v1895, %v1898
    %v1901 = vmul.f32 %v1883, %v1683
    %v1902 = vadd.f32 %v1900, %v1901
    %1904 = vrot.lane.b32.xlu0 %v1874, 48
    %v1905 = vpop.permute.xlu0 %1904
    %v1907 = vadd.f32 %v1724, %v1905
    %v1908 = vxor.u32 %v1907, 2147483648
    %v1909 = vmul.f32 %v1908, 1.442695
    %v1910 = vpow.pop %v1909
    %v1911 = vadd.f32 %v1910, 1.0
    %v1912 = vrcp.pop %v1911
    %v1913 = vmul.f32 1.0, %v1912
    %1914 = vrot.lane.b32.xlu0 %v1874, 16
    %v1915 = vpop.permute.xlu0 %1914
    %v1917 = vmul.f32 %v1913, %v1915
    %1919 = vrot.lane.b32.xlu0 %v1917, 32
    %v1920 = vpop.permute.xlu0 %1919
    %v1922 = vadd.f32 %v1724, %v1920
    %v1923 = vtanh.pop %v1922
    %v1924 = vsub.f32 1.0, %v1913
    %1926 = vrot.lane.b32.xlu0 %v1923, 112
    %v1927 = vpop.permute.xlu0 %1926
    %v1929 = vmul.f32 %v1924, %v1927
    %v1930 = vmul.f32 %v1913, %v1712
    %v1931 = vadd.f32 %v1929, %v1930
    %1933 = vrot.lane.b32.xlu0 %v1902, 112
    %v1934 = vpop.permute.xlu0 %1933
    %1936 = vst.msk [vmem:[%s7 + $0x7] sm:$0x1] %vm401, %v1934
    %1938 = vrot.lane.b32.xlu0 %v1931, 80
    %v1939 = vpop.permute.xlu0 %1938
    %1941 = vst.msk [vmem:[%s7] sm:$0x1] %vm407, %v1939
    // Predicated region
    $region54: #{train_segment_loss.2} parent=1 // pred_check
      _
    $region55: #{train_segment_loss.2} parent=1 // pred_check_branch
      %1943 = sbr.rel (0) target = $region57
    $region56: #{train_segment_loss.2} parent=1 // pred_region
      _
    $region57: #{train_segment_loss.2} parent=1 // pred_fallthru
      _
    // Predicated region
    $region58: #{train_segment_loss.2} parent=1 // pred_check
      _
    $region59: #{train_segment_loss.2} parent=1 // pred_check_branch
      %1945 = sbr.rel (0) target = $region61
    $region60: #{train_segment_loss.2} parent=1 // pred_region
      _
    $region61: #{train_segment_loss.2} parent=1 // pred_fallthru
      _
    %1946 = vsyncpa [#allocation4], 1
    %1947 = vsyncpa [#allocation6], 1
    %1948 = vsyncpa [#allocation9], 1
    %1949 = vsyncpa [#allocation12], 1

</llo_original>
